<compile_context>
chip_gen: v5e
topology: v5e:2x2
jax: 0.10.0
libtpu: 0.0.40
codegen_flags: <defaults>
</compile_context>

<pallas_src>
import jax
import jax.numpy as jnp
from jax.experimental import pallas as pl
from jax.experimental.pallas import tpu as pltpu


def _repeat2_kernel(x_ref, o_ref):
    """x_ref: (TR, TL) tile; o_ref: (TR, 2*TL) tile. o[:, 2l] = o[:, 2l+1] = x[:, l]."""
    o_ref[...] = jnp.repeat(x_ref[...], 2, axis=-1)


def _pack2_u32_kernel(x_ref, o_ref):
    """16-bit path. x_ref: (TR, TL) 16-bit float; o_ref: (TR, TL) uint32.

    Each uint32 holds two copies of the 16-bit bit pattern, so viewing the
    output bytes as the input dtype yields the nearest-x2 interleave with no
    cross-lane data movement inside the kernel (VPU shift/or only).
    """
    bits = pltpu.bitcast(x_ref[...], jnp.uint16).astype(jnp.uint32)
    o_ref[...] = (bits << 16) | bits


def _round_up(n, m):
    return ((n + m - 1) // m) * m


def _vmem_budget():
    """(per-step tile byte budget, vmem_limit_bytes), branched on chip VMEM size."""
    try:
        cap = int(pltpu.get_tpu_info().vmem_capacity_bytes)
    except Exception:
        cap = 64 * 1024 * 1024  # conservative fallback: assume smallest (v7x-sized) VMEM
    budget = max(8 << 20, min(24 << 20, cap // 4))       # ~24 MiB v5e/v6e, ~16 MiB v7x
    vmem_limit = max(32 << 20, min(64 << 20, cap // 2))  # 64 MiB v5e/v6e, 32 MiB v7x
    return budget, vmem_limit


def _pick_tiles(R, L, itemsize, budget):
    """Pick (TR, TL).

    Double-buffered footprint per grid step is ~6 * TR * TL * itemsize bytes
    (input block + 2x-wide output block, both double-buffered) for either
    kernel path.  Prefer TL = L so each block DMA is one contiguous HBM
    transfer; only tile the length axis when a single-L block cannot fit even
    at the minimal sublane height.
    """
    sub = 32 // itemsize              # dtype-native sublane multiple: 8 / 16 / 32
    bytes_per_elem = 6 * itemsize
    TL = _round_up(L, 128)
    if bytes_per_elem * TL * sub > budget:
        # L is genuinely huge: tile the length axis, keep lane-dense multiples of 128.
        TL = max(128, (budget // (bytes_per_elem * sub)) // 128 * 128)
    tr_cap = max(sub, (budget // (bytes_per_elem * TL)) // sub * sub)
    TR = min(_round_up(R, sub), tr_cap)
    # Guarantee >= 2 row blocks when possible so both v7x TensorCores get work.
    if TR >= R and R >= 2 * sub:
        TR = _round_up((R + 1) // 2, sub)
    return TR, TL


def upsample1d(x, layer_type: str = "default"):
    """Pallas implementation of UpSample1d.forward. x: (N, C, L), NCL layout."""
    if layer_type == "none":
        return x  # identity branch, no kernel needed

    N, C, L = x.shape
    R = N * C
    itemsize = jnp.dtype(x.dtype).itemsize

    # Tiny / lane-sparse problems: XLA's fused repeat beats a kernel launch here.
    if L < 128 or R < 8:
        return jnp.repeat(x, 2, axis=-1)

    x2 = x.reshape(R, L)
    budget, vmem_limit = _vmem_budget()
    TR, TL = _pick_tiles(R, L, itemsize, budget)
    grid = (pl.cdiv(R, TR), pl.cdiv(L, TL))

    common = dict(
        grid=grid,
        in_specs=[pl.BlockSpec((TR, TL), lambda i, j: (i, j))],
        compiler_params=pltpu.CompilerParams(
            dimension_semantics=("parallel", "parallel"),
            vmem_limit_bytes=vmem_limit,
        ),
        cost_estimate=pl.CostEstimate(
            flops=0,
            transcendentals=0,
            bytes_accessed=3 * R * L * itemsize,  # read R*L, write 2*R*L
        ),
    )

    if x.dtype in (jnp.bfloat16, jnp.float16):
        # Duplicate each 16-bit element inside a 32-bit lane; bitcast back outside.
        out_u32 = pl.pallas_call(
            _pack2_u32_kernel,
            out_shape=jax.ShapeDtypeStruct((R, L), jnp.uint32),
            out_specs=pl.BlockSpec((TR, TL), lambda i, j: (i, j)),
            **common,
        )(x2)
        out = jax.lax.bitcast_convert_type(out_u32, x.dtype)  # (R, L, 2), both halves == x
        return out.reshape(N, C, 2 * L)

    # 32-bit (and other) dtypes: lane interleave in-kernel.
    out = pl.pallas_call(
        _repeat2_kernel,
        out_shape=jax.ShapeDtypeStruct((R, 2 * L), x.dtype),
        out_specs=pl.BlockSpec((TR, 2 * TL), lambda i, j: (i, j)),
        **common,
    )(x2)
    return out.reshape(N, C, 2 * L)


if __name__ == "__main__":
    key = jax.random.PRNGKey(0)

    # f32, lane-dense shape -> Pallas repeat-interleave kernel path.
    N, C, L = 2, 4, 256
    x = jax.random.normal(key, (N, C, L), dtype=jnp.float32)
    y = jax.block_until_ready(upsample1d(x, layer_type="default"))
    ref = jnp.repeat(x, 2, axis=-1)  # nearest, scale_factor=2 on last axis
    assert y.shape == (N, C, 2 * L), y.shape
    assert y.dtype == x.dtype, y.dtype
    assert bool(jnp.array_equal(y, ref)), "f32 mismatch vs. nearest reference"

    # bf16 -> Pallas 32-bit-lane pack kernel path (exact bit duplication).
    xb = jax.random.normal(key, (N, C, L), dtype=jnp.bfloat16)
    yb = jax.block_until_ready(upsample1d(xb, layer_type="default"))
    assert yb.shape == (N, C, 2 * L) and yb.dtype == xb.dtype
    assert bool(jnp.array_equal(yb, jnp.repeat(xb, 2, axis=-1))), "bf16 mismatch"

    # Small, lane-sparse shape -> XLA fallback path.
    x_small = jax.random.normal(key, (2, 4, 16), dtype=jnp.float32)
    y_small = jax.block_until_ready(upsample1d(x_small, layer_type="default"))
    assert bool(jnp.array_equal(y_small, jnp.repeat(x_small, 2, axis=-1)))

    # layer_type == 'none' -> identity.
    y_none = jax.block_until_ready(upsample1d(x, layer_type="none"))
    assert bool(jnp.array_equal(y_none, x))

    print("KERNEL_OK")
</pallas_src>

<mosaic_0001>
module attributes {stable_mosaic.version = 11 : i64} {
  func.func @_repeat2_kernel(%arg0: i32, %arg1: i32, %arg2: memref<8x256xf32, #tpu.memory_space<vmem>>, %arg3: memref<8x512xf32, #tpu.memory_space<vmem>>) attributes {dimension_semantics = [#tpu.dimension_semantics<parallel>, #tpu.dimension_semantics<parallel>], iteration_bounds = array<i64: 1, 1>, scalar_prefetch = 0 : i64, scratch_operands = 0 : i64, tpu.core_type = #tpu.core_type<tc>, window_params = [{transform_indices = @transform_0, window_bounds = array<i64: 8, 256>}, {transform_indices = @transform_1, window_bounds = array<i64: 8, 512>}]} {
    %c0 = arith.constant 0 : index
    %c0_0 = arith.constant 0 : index
    %0 = vector.load %arg2[%c0, %c0_0] : memref<8x256xf32, #tpu.memory_space<vmem>>, vector<8x256xf32>
    %1 = vector.shape_cast %0 : vector<8x256xf32> to vector<8x256x1xf32>
    %2 = vector.broadcast %1 : vector<8x256x1xf32> to vector<8x256x2xf32>
    %3 = vector.shape_cast %2 : vector<8x256x2xf32> to vector<8x512xf32>
    %c0_1 = arith.constant 0 : index
    %c0_2 = arith.constant 0 : index
    %4 = vector.load %arg3[%c0_1, %c0_2] : memref<8x512xf32, #tpu.memory_space<vmem>>, vector<8x512xf32>
    tpu.vector_store %arg3[%c0_1, %c0_2], %3 {strides = array<i32>} : memref<8x512xf32, #tpu.memory_space<vmem>>, vector<8x512xf32>,
    return
  }
  func.func @transform_0(%arg0: i32, %arg1: i32) -> (i32, i32) {
    %c0_i32 = arith.constant 0 : i32
    return %arg0, %arg1 : i32, i32
  }
  func.func @transform_1(%arg0: i32, %arg1: i32) -> (i32, i32) {
    %c0_i32 = arith.constant 0 : i32
    return %arg0, %arg1 : i32, i32
  }
}

</mosaic_0001>

<llo_original>
// kernel: tpu_custom_call.1
$region0: #{tpu_custom_call.1}
  #allocation0 [shape = 'u32[]', space=smem, size = 0x4, offset = 0x4, fixed_abs, tag = 'smem constant byte address 0x4 - core index']
  #allocation1 [shape = 'u32[72,128]{1,0:T(1,128)}', space=vmem, size = 0x9000, scoped, tag = 'internal scratch']
  %s0 = inlined_call_operand.hbm [shape: f32[8,256], index: 0, kind: input, shape index: {}]
  %s1 = inlined_call_operand.hbm [shape: f32[8,512], index: 1, kind: output, shape index: {}]
  %s2 = sld [smem:[#allocation0]]
  $region18: #{tpu_custom_call.1} parent=0
    _
  %s4 = ssub.s32 1, %s2
  %s5 = scalar_select 0, %s4, %s2
  $region1: #{tpu_custom_call.1} parent=0
    #allocation2 [shape = 'u8[8192]{0}', space=vmem, size = 0x2000, scoped, tag = 'input window, operand 0, single buffered']
    #allocation3 [shape = 's32[1]{0}', space=sflag, size = 0x4, scoped, tag = 'scoped memory for tpu_custom_call.1']
    #allocation4 [shape = 's32[1]{0}', space=sflag, size = 0x4, scoped, tag = 'scoped memory for tpu_custom_call.1']
    #allocation5 [shape = 'u8[16384]{0}', space=vmem, size = 0x4000, scoped, tag = 'output window, operand 0, single buffered']
    %6 = vsyncpa [#allocation3], 0
    %7 = vsyncpa [#allocation4], 0
    // Predicated region
    $region2: #{tpu_custom_call.1} parent=1 // pred_check
      _
    $region3: #{tpu_custom_call.1} parent=1 // pred_check_branch
      %9 = sbr.rel (0) target = $region5
    $region4: #{tpu_custom_call.1} parent=1 // pred_region
      %11 = vsyncadd [#allocation3], 0
      %s13 = sshll.u32 %s0, 4
      %s14 = int_to_ptr.hbm [resolvable:$true] %s13
      %s15 = sshll.u32 [#allocation2], 4
      %s16 = int_to_ptr.vmem [resolvable:$true] %s15
      %18 = dma.hbm_to_vmem [thread:$0]  %s14, 256, %s16, [#allocation3]
    $region5: #{tpu_custom_call.1} parent=1 // pred_fallthru
      _
    // Predicated region
    $region6: #{tpu_custom_call.1} parent=1 // pred_check
      _
    $region7: #{tpu_custom_call.1} parent=1 // pred_check_branch
      %20 = sbr.rel (0) target = $region9
    $region8: #{tpu_custom_call.1} parent=1 // pred_region
      %22 = dma.done [#allocation3], 256
    $region9: #{tpu_custom_call.1} parent=1 // pred_fallthru
      _
    %v23 = vld [vmem:[#allocation2] sm:$0xff]
    %v24 = vld [vmem:[#allocation2 + $0x8] sm:$0xff]
    %v25 = vperm.slane %v23, 0
    %v26 = vlaneseq
    %v27 = vshrl.u32 %v26, 7
    %29 = vset.pattern.permute.xlu0 %v27
    %30 = vperm.xlu0 %29, %v25
    %v31 = vpop.permute.xlu0 %30
    %v32 = vlaneseq
    %v33 = vshrl.u32 %v32, 7
    %v34 = vadd.s32 %v33, 8
    %35 = vset.pattern.permute.xlu0 %v34
    %36 = vperm.xlu0 %35, %v25
    %v37 = vpop.permute.xlu0 %36
    %v38 = vlaneseq
    %v39 = vshrl.u32 %v38, 7
    %v40 = vadd.s32 %v39, 16
    %41 = vset.pattern.permute.xlu0 %v40
    %42 = vperm.xlu0 %41, %v25
    %v43 = vpop.permute.xlu0 %42
    %v44 = vlaneseq
    %v45 = vshrl.u32 %v44, 7
    %v46 = vadd.s32 %v45, 24
    %47 = vset.pattern.permute.xlu0 %v46
    %48 = vperm.xlu0 %47, %v25
    %v49 = vpop.permute.xlu0 %48
    %v50 = vlaneseq
    %v51 = vshrl.u32 %v50, 7
    %v52 = vadd.s32 %v51, 32
    %53 = vset.pattern.permute.xlu0 %v52
    %54 = vperm.xlu0 %53, %v25
    %v55 = vpop.permute.xlu0 %54
    %v56 = vlaneseq
    %v57 = vshrl.u32 %v56, 7
    %v58 = vadd.s32 %v57, 40
    %59 = vset.pattern.permute.xlu0 %v58
    %60 = vperm.xlu0 %59, %v25
    %v61 = vpop.permute.xlu0 %60
    %v62 = vlaneseq
    %v63 = vshrl.u32 %v62, 7
    %v64 = vadd.s32 %v63, 48
    %65 = vset.pattern.permute.xlu0 %v64
    %66 = vperm.xlu0 %65, %v25
    %v67 = vpop.permute.xlu0 %66
    %v68 = vlaneseq
    %v69 = vshrl.u32 %v68, 7
    %v70 = vadd.s32 %v69, 56
    %71 = vset.pattern.permute.xlu0 %v70
    %72 = vperm.xlu0 %71, %v25
    %v73 = vpop.permute.xlu0 %72
    %v74 = vlaneseq
    %v75 = vshrl.u32 %v74, 7
    %v76 = vadd.s32 %v75, 64
    %77 = vset.pattern.permute.xlu0 %v76
    %78 = vperm.xlu0 %77, %v25
    %v79 = vpop.permute.xlu0 %78
    %v80 = vlaneseq
    %v81 = vshrl.u32 %v80, 7
    %v82 = vadd.s32 %v81, 72
    %83 = vset.pattern.permute.xlu0 %v82
    %84 = vperm.xlu0 %83, %v25
    %v85 = vpop.permute.xlu0 %84
    %v86 = vlaneseq
    %v87 = vshrl.u32 %v86, 7
    %v88 = vadd.s32 %v87, 80
    %89 = vset.pattern.permute.xlu0 %v88
    %90 = vperm.xlu0 %89, %v25
    %v91 = vpop.permute.xlu0 %90
    %v92 = vlaneseq
    %v93 = vshrl.u32 %v92, 7
    %v94 = vadd.s32 %v93, 88
    %95 = vset.pattern.permute.xlu0 %v94
    %96 = vperm.xlu0 %95, %v25
    %v97 = vpop.permute.xlu0 %96
    %v98 = vlaneseq
    %v99 = vshrl.u32 %v98, 7
    %v100 = vadd.s32 %v99, 96
    %101 = vset.pattern.permute.xlu0 %v100
    %102 = vperm.xlu0 %101, %v25
    %v103 = vpop.permute.xlu0 %102
    %v104 = vlaneseq
    %v105 = vshrl.u32 %v104, 7
    %v106 = vadd.s32 %v105, 104
    %107 = vset.pattern.permute.xlu0 %v106
    %108 = vperm.xlu0 %107, %v25
    %v109 = vpop.permute.xlu0 %108
    %v110 = vlaneseq
    %v111 = vshrl.u32 %v110, 7
    %v112 = vadd.s32 %v111, 112
    %113 = vset.pattern.permute.xlu0 %v112
    %114 = vperm.xlu0 %113, %v25
    %v115 = vpop.permute.xlu0 %114
    %v116 = vlaneseq
    %v117 = vshrl.u32 %v116, 7
    %v118 = vadd.s32 %v117, 120
    %119 = vset.pattern.permute.xlu0 %v118
    %120 = vperm.xlu0 %119, %v25
    %v121 = vpop.permute.xlu0 %120
    %v122 = vperm.slane %v24, 0
    %v123 = vlaneseq
    %v124 = vshrl.u32 %v123, 7
    %126 = vset.pattern.permute.xlu0 %v124
    %127 = vperm.xlu0 %126, %v122
    %v128 = vpop.permute.xlu0 %127
    %v129 = vlaneseq
    %v130 = vshrl.u32 %v129, 7
    %v131 = vadd.s32 %v130, 8
    %132 = vset.pattern.permute.xlu0 %v131
    %133 = vperm.xlu0 %132, %v122
    %v134 = vpop.permute.xlu0 %133
    %v135 = vlaneseq
    %v136 = vshrl.u32 %v135, 7
    %v137 = vadd.s32 %v136, 16
    %138 = vset.pattern.permute.xlu0 %v137
    %139 = vperm.xlu0 %138, %v122
    %v140 = vpop.permute.xlu0 %139
    %v141 = vlaneseq
    %v142 = vshrl.u32 %v141, 7
    %v143 = vadd.s32 %v142, 24
    %144 = vset.pattern.permute.xlu0 %v143
    %145 = vperm.xlu0 %144, %v122
    %v146 = vpop.permute.xlu0 %145
    %v147 = vlaneseq
    %v148 = vshrl.u32 %v147, 7
    %v149 = vadd.s32 %v148, 32
    %150 = vset.pattern.permute.xlu0 %v149
    %151 = vperm.xlu0 %150, %v122
    %v152 = vpop.permute.xlu0 %151
    %v153 = vlaneseq
    %v154 = vshrl.u32 %v153, 7
    %v155 = vadd.s32 %v154, 40
    %156 = vset.pattern.permute.xlu0 %v155
    %157 = vperm.xlu0 %156, %v122
    %v158 = vpop.permute.xlu0 %157
    %v159 = vlaneseq
    %v160 = vshrl.u32 %v159, 7
    %v161 = vadd.s32 %v160, 48
    %162 = vset.pattern.permute.xlu0 %v161
    %163 = vperm.xlu0 %162, %v122
    %v164 = vpop.permute.xlu0 %163
    %v165 = vlaneseq
    %v166 = vshrl.u32 %v165, 7
    %v167 = vadd.s32 %v166, 56
    %168 = vset.pattern.permute.xlu0 %v167
    %169 = vperm.xlu0 %168, %v122
    %v170 = vpop.permute.xlu0 %169
    %v171 = vlaneseq
    %v172 = vshrl.u32 %v171, 7
    %v173 = vadd.s32 %v172, 64
    %174 = vset.pattern.permute.xlu0 %v173
    %175 = vperm.xlu0 %174, %v122
    %v176 = vpop.permute.xlu0 %175
    %v177 = vlaneseq
    %v178 = vshrl.u32 %v177, 7
    %v179 = vadd.s32 %v178, 72
    %180 = vset.pattern.permute.xlu0 %v179
    %181 = vperm.xlu0 %180, %v122
    %v182 = vpop.permute.xlu0 %181
    %v183 = vlaneseq
    %v184 = vshrl.u32 %v183, 7
    %v185 = vadd.s32 %v184, 80
    %186 = vset.pattern.permute.xlu0 %v185
    %187 = vperm.xlu0 %186, %v122
    %v188 = vpop.permute.xlu0 %187
    %v189 = vlaneseq
    %v190 = vshrl.u32 %v189, 7
    %v191 = vadd.s32 %v190, 88
    %192 = vset.pattern.permute.xlu0 %v191
    %193 = vperm.xlu0 %192, %v122
    %v194 = vpop.permute.xlu0 %193
    %v195 = vlaneseq
    %v196 = vshrl.u32 %v195, 7
    %v197 = vadd.s32 %v196, 96
    %198 = vset.pattern.permute.xlu0 %v197
    %199 = vperm.xlu0 %198, %v122
    %v200 = vpop.permute.xlu0 %199
    %v201 = vlaneseq
    %v202 = vshrl.u32 %v201, 7
    %v203 = vadd.s32 %v202, 104
    %204 = vset.pattern.permute.xlu0 %v203
    %205 = vperm.xlu0 %204, %v122
    %v206 = vpop.permute.xlu0 %205
    %v207 = vlaneseq
    %v208 = vshrl.u32 %v207, 7
    %v209 = vadd.s32 %v208, 112
    %210 = vset.pattern.permute.xlu0 %v209
    %211 = vperm.xlu0 %210, %v122
    %v212 = vpop.permute.xlu0 %211
    %v213 = vlaneseq
    %v214 = vshrl.u32 %v213, 7
    %v215 = vadd.s32 %v214, 120
    %216 = vset.pattern.permute.xlu0 %v215
    %217 = vperm.xlu0 %216, %v122
    %v218 = vpop.permute.xlu0 %217
    %v219 = vperm.slane %v23, 1
    %v220 = vlaneseq
    %v221 = vshrl.u32 %v220, 7
    %223 = vset.pattern.permute.xlu0 %v221
    %224 = vperm.xlu0 %223, %v219
    %v225 = vpop.permute.xlu0 %224
    %v226 = vlaneseq
    %v227 = vshrl.u32 %v226, 7
    %v228 = vadd.s32 %v227, 8
    %229 = vset.pattern.permute.xlu0 %v228
    %230 = vperm.xlu0 %229, %v219
    %v231 = vpop.permute.xlu0 %230
    %v232 = vlaneseq
    %v233 = vshrl.u32 %v232, 7
    %v234 = vadd.s32 %v233, 16
    %235 = vset.pattern.permute.xlu0 %v234
    %236 = vperm.xlu0 %235, %v219
    %v237 = vpop.permute.xlu0 %236
    %v238 = vlaneseq
    %v239 = vshrl.u32 %v238, 7
    %v240 = vadd.s32 %v239, 24
    %241 = vset.pattern.permute.xlu0 %v240
    %242 = vperm.xlu0 %241, %v219
    %v243 = vpop.permute.xlu0 %242
    %v244 = vlaneseq
    %v245 = vshrl.u32 %v244, 7
    %v246 = vadd.s32 %v245, 32
    %247 = vset.pattern.permute.xlu0 %v246
    %248 = vperm.xlu0 %247, %v219
    %v249 = vpop.permute.xlu0 %248
    %v250 = vlaneseq
    %v251 = vshrl.u32 %v250, 7
    %v252 = vadd.s32 %v251, 40
    %253 = vset.pattern.permute.xlu0 %v252
    %254 = vperm.xlu0 %253, %v219
    %v255 = vpop.permute.xlu0 %254
    %v256 = vlaneseq
    %v257 = vshrl.u32 %v256, 7
    %v258 = vadd.s32 %v257, 48
    %259 = vset.pattern.permute.xlu0 %v258
    %260 = vperm.xlu0 %259, %v219
    %v261 = vpop.permute.xlu0 %260
    %v262 = vlaneseq
    %v263 = vshrl.u32 %v262, 7
    %v264 = vadd.s32 %v263, 56
    %265 = vset.pattern.permute.xlu0 %v264
    %266 = vperm.xlu0 %265, %v219
    %v267 = vpop.permute.xlu0 %266
    %v268 = vlaneseq
    %v269 = vshrl.u32 %v268, 7
    %v270 = vadd.s32 %v269, 64
    %271 = vset.pattern.permute.xlu0 %v270
    %272 = vperm.xlu0 %271, %v219
    %v273 = vpop.permute.xlu0 %272
    %v274 = vlaneseq
    %v275 = vshrl.u32 %v274, 7
    %v276 = vadd.s32 %v275, 72
    %277 = vset.pattern.permute.xlu0 %v276
    %278 = vperm.xlu0 %277, %v219
    %v279 = vpop.permute.xlu0 %278
    %v280 = vlaneseq
    %v281 = vshrl.u32 %v280, 7
    %v282 = vadd.s32 %v281, 80
    %283 = vset.pattern.permute.xlu0 %v282
    %284 = vperm.xlu0 %283, %v219
    %v285 = vpop.permute.xlu0 %284
    %v286 = vlaneseq
    %v287 = vshrl.u32 %v286, 7
    %v288 = vadd.s32 %v287, 88
    %289 = vset.pattern.permute.xlu0 %v288
    %290 = vperm.xlu0 %289, %v219
    %v291 = vpop.permute.xlu0 %290
    %v292 = vlaneseq
    %v293 = vshrl.u32 %v292, 7
    %v294 = vadd.s32 %v293, 96
    %295 = vset.pattern.permute.xlu0 %v294
    %296 = vperm.xlu0 %295, %v219
    %v297 = vpop.permute.xlu0 %296
    %v298 = vlaneseq
    %v299 = vshrl.u32 %v298, 7
    %v300 = vadd.s32 %v299, 104
    %301 = vset.pattern.permute.xlu0 %v300
    %302 = vperm.xlu0 %301, %v219
    %v303 = vpop.permute.xlu0 %302
    %v304 = vlaneseq
    %v305 = vshrl.u32 %v304, 7
    %v306 = vadd.s32 %v305, 112
    %307 = vset.pattern.permute.xlu0 %v306
    %308 = vperm.xlu0 %307, %v219
    %v309 = vpop.permute.xlu0 %308
    %v310 = vlaneseq
    %v311 = vshrl.u32 %v310, 7
    %v312 = vadd.s32 %v311, 120
    %313 = vset.pattern.permute.xlu0 %v312
    %314 = vperm.xlu0 %313, %v219
    %v315 = vpop.permute.xlu0 %314
    %v316 = vperm.slane %v24, 1
    %v317 = vlaneseq
    %v318 = vshrl.u32 %v317, 7
    %320 = vset.pattern.permute.xlu0 %v318
    %321 = vperm.xlu0 %320, %v316
    %v322 = vpop.permute.xlu0 %321
    %v323 = vlaneseq
    %v324 = vshrl.u32 %v323, 7
    %v325 = vadd.s32 %v324, 8
    %326 = vset.pattern.permute.xlu0 %v325
    %327 = vperm.xlu0 %326, %v316
    %v328 = vpop.permute.xlu0 %327
    %v329 = vlaneseq
    %v330 = vshrl.u32 %v329, 7
    %v331 = vadd.s32 %v330, 16
    %332 = vset.pattern.permute.xlu0 %v331
    %333 = vperm.xlu0 %332, %v316
    %v334 = vpop.permute.xlu0 %333
    %v335 = vlaneseq
    %v336 = vshrl.u32 %v335, 7
    %v337 = vadd.s32 %v336, 24
    %338 = vset.pattern.permute.xlu0 %v337
    %339 = vperm.xlu0 %338, %v316
    %v340 = vpop.permute.xlu0 %339
    %v341 = vlaneseq
    %v342 = vshrl.u32 %v341, 7
    %v343 = vadd.s32 %v342, 32
    %344 = vset.pattern.permute.xlu0 %v343
    %345 = vperm.xlu0 %344, %v316
    %v346 = vpop.permute.xlu0 %345
    %v347 = vlaneseq
    %v348 = vshrl.u32 %v347, 7
    %v349 = vadd.s32 %v348, 40
    %350 = vset.pattern.permute.xlu0 %v349
    %351 = vperm.xlu0 %350, %v316
    %v352 = vpop.permute.xlu0 %351
    %v353 = vlaneseq
    %v354 = vshrl.u32 %v353, 7
    %v355 = vadd.s32 %v354, 48
    %356 = vset.pattern.permute.xlu0 %v355
    %357 = vperm.xlu0 %356, %v316
    %v358 = vpop.permute.xlu0 %357
    %v359 = vlaneseq
    %v360 = vshrl.u32 %v359, 7
    %v361 = vadd.s32 %v360, 56
    %362 = vset.pattern.permute.xlu0 %v361
    %363 = vperm.xlu0 %362, %v316
    %v364 = vpop.permute.xlu0 %363
    %v365 = vlaneseq
    %v366 = vshrl.u32 %v365, 7
    %v367 = vadd.s32 %v366, 64
    %368 = vset.pattern.permute.xlu0 %v367
    %369 = vperm.xlu0 %368, %v316
    %v370 = vpop.permute.xlu0 %369
    %v371 = vlaneseq
    %v372 = vshrl.u32 %v371, 7
    %v373 = vadd.s32 %v372, 72
    %374 = vset.pattern.permute.xlu0 %v373
    %375 = vperm.xlu0 %374, %v316
    %v376 = vpop.permute.xlu0 %375
    %v377 = vlaneseq
    %v378 = vshrl.u32 %v377, 7
    %v379 = vadd.s32 %v378, 80
    %380 = vset.pattern.permute.xlu0 %v379
    %381 = vperm.xlu0 %380, %v316
    %v382 = vpop.permute.xlu0 %381
    %v383 = vlaneseq
    %v384 = vshrl.u32 %v383, 7
    %v385 = vadd.s32 %v384, 88
    %386 = vset.pattern.permute.xlu0 %v385
    %387 = vperm.xlu0 %386, %v316
    %v388 = vpop.permute.xlu0 %387
    %v389 = vlaneseq
    %v390 = vshrl.u32 %v389, 7
    %v391 = vadd.s32 %v390, 96
    %392 = vset.pattern.permute.xlu0 %v391
    %393 = vperm.xlu0 %392, %v316
    %v394 = vpop.permute.xlu0 %393
    %v395 = vlaneseq
    %v396 = vshrl.u32 %v395, 7
    %v397 = vadd.s32 %v396, 104
    %398 = vset.pattern.permute.xlu0 %v397
    %399 = vperm.xlu0 %398, %v316
    %v400 = vpop.permute.xlu0 %399
    %v401 = vlaneseq
    %v402 = vshrl.u32 %v401, 7
    %v403 = vadd.s32 %v402, 112
    %404 = vset.pattern.permute.xlu0 %v403
    %405 = vperm.xlu0 %404, %v316
    %v406 = vpop.permute.xlu0 %405
    %v407 = vlaneseq
    %v408 = vshrl.u32 %v407, 7
    %v409 = vadd.s32 %v408, 120
    %410 = vset.pattern.permute.xlu0 %v409
    %411 = vperm.xlu0 %410, %v316
    %v412 = vpop.permute.xlu0 %411
    %v413 = vperm.slane %v23, 2
    %v414 = vlaneseq
    %v415 = vshrl.u32 %v414, 7
    %417 = vset.pattern.permute.xlu0 %v415
    %418 = vperm.xlu0 %417, %v413
    %v419 = vpop.permute.xlu0 %418
    %v420 = vlaneseq
    %v421 = vshrl.u32 %v420, 7
    %v422 = vadd.s32 %v421, 8
    %423 = vset.pattern.permute.xlu0 %v422
    %424 = vperm.xlu0 %423, %v413
    %v425 = vpop.permute.xlu0 %424
    %v426 = vlaneseq
    %v427 = vshrl.u32 %v426, 7
    %v428 = vadd.s32 %v427, 16
    %429 = vset.pattern.permute.xlu0 %v428
    %430 = vperm.xlu0 %429, %v413
    %v431 = vpop.permute.xlu0 %430
    %v432 = vlaneseq
    %v433 = vshrl.u32 %v432, 7
    %v434 = vadd.s32 %v433, 24
    %435 = vset.pattern.permute.xlu0 %v434
    %436 = vperm.xlu0 %435, %v413
    %v437 = vpop.permute.xlu0 %436
    %v438 = vlaneseq
    %v439 = vshrl.u32 %v438, 7
    %v440 = vadd.s32 %v439, 32
    %441 = vset.pattern.permute.xlu0 %v440
    %442 = vperm.xlu0 %441, %v413
    %v443 = vpop.permute.xlu0 %442
    %v444 = vlaneseq
    %v445 = vshrl.u32 %v444, 7
    %v446 = vadd.s32 %v445, 40
    %447 = vset.pattern.permute.xlu0 %v446
    %448 = vperm.xlu0 %447, %v413
    %v449 = vpop.permute.xlu0 %448
    %v450 = vlaneseq
    %v451 = vshrl.u32 %v450, 7
    %v452 = vadd.s32 %v451, 48
    %453 = vset.pattern.permute.xlu0 %v452
    %454 = vperm.xlu0 %453, %v413
    %v455 = vpop.permute.xlu0 %454
    %v456 = vlaneseq
    %v457 = vshrl.u32 %v456, 7
    %v458 = vadd.s32 %v457, 56
    %459 = vset.pattern.permute.xlu0 %v458
    %460 = vperm.xlu0 %459, %v413
    %v461 = vpop.permute.xlu0 %460
    %v462 = vlaneseq
    %v463 = vshrl.u32 %v462, 7
    %v464 = vadd.s32 %v463, 64
    %465 = vset.pattern.permute.xlu0 %v464
    %466 = vperm.xlu0 %465, %v413
    %v467 = vpop.permute.xlu0 %466
    %v468 = vlaneseq
    %v469 = vshrl.u32 %v468, 7
    %v470 = vadd.s32 %v469, 72
    %471 = vset.pattern.permute.xlu0 %v470
    %472 = vperm.xlu0 %471, %v413
    %v473 = vpop.permute.xlu0 %472
    %v474 = vlaneseq
    %v475 = vshrl.u32 %v474, 7
    %v476 = vadd.s32 %v475, 80
    %477 = vset.pattern.permute.xlu0 %v476
    %478 = vperm.xlu0 %477, %v413
    %v479 = vpop.permute.xlu0 %478
    %v480 = vlaneseq
    %v481 = vshrl.u32 %v480, 7
    %v482 = vadd.s32 %v481, 88
    %483 = vset.pattern.permute.xlu0 %v482
    %484 = vperm.xlu0 %483, %v413
    %v485 = vpop.permute.xlu0 %484
    %v486 = vlaneseq
    %v487 = vshrl.u32 %v486, 7
    %v488 = vadd.s32 %v487, 96
    %489 = vset.pattern.permute.xlu0 %v488
    %490 = vperm.xlu0 %489, %v413
    %v491 = vpop.permute.xlu0 %490
    %v492 = vlaneseq
    %v493 = vshrl.u32 %v492, 7
    %v494 = vadd.s32 %v493, 104
    %495 = vset.pattern.permute.xlu0 %v494
    %496 = vperm.xlu0 %495, %v413
    %v497 = vpop.permute.xlu0 %496
    %v498 = vlaneseq
    %v499 = vshrl.u32 %v498, 7
    %v500 = vadd.s32 %v499, 112
    %501 = vset.pattern.permute.xlu0 %v500
    %502 = vperm.xlu0 %501, %v413
    %v503 = vpop.permute.xlu0 %502
    %v504 = vlaneseq
    %v505 = vshrl.u32 %v504, 7
    %v506 = vadd.s32 %v505, 120
    %507 = vset.pattern.permute.xlu0 %v506
    %508 = vperm.xlu0 %507, %v413
    %v509 = vpop.permute.xlu0 %508
    %v510 = vperm.slane %v24, 2
    %v511 = vlaneseq
    %v512 = vshrl.u32 %v511, 7
    %514 = vset.pattern.permute.xlu0 %v512
    %515 = vperm.xlu0 %514, %v510
    %v516 = vpop.permute.xlu0 %515
    %v517 = vlaneseq
    %v518 = vshrl.u32 %v517, 7
    %v519 = vadd.s32 %v518, 8
    %520 = vset.pattern.permute.xlu0 %v519
    %521 = vperm.xlu0 %520, %v510
    %v522 = vpop.permute.xlu0 %521
    %v523 = vlaneseq
    %v524 = vshrl.u32 %v523, 7
    %v525 = vadd.s32 %v524, 16
    %526 = vset.pattern.permute.xlu0 %v525
    %527 = vperm.xlu0 %526, %v510
    %v528 = vpop.permute.xlu0 %527
    %v529 = vlaneseq
    %v530 = vshrl.u32 %v529, 7
    %v531 = vadd.s32 %v530, 24
    %532 = vset.pattern.permute.xlu0 %v531
    %533 = vperm.xlu0 %532, %v510
    %v534 = vpop.permute.xlu0 %533
    %v535 = vlaneseq
    %v536 = vshrl.u32 %v535, 7
    %v537 = vadd.s32 %v536, 32
    %538 = vset.pattern.permute.xlu0 %v537
    %539 = vperm.xlu0 %538, %v510
    %v540 = vpop.permute.xlu0 %539
    %v541 = vlaneseq
    %v542 = vshrl.u32 %v541, 7
    %v543 = vadd.s32 %v542, 40
    %544 = vset.pattern.permute.xlu0 %v543
    %545 = vperm.xlu0 %544, %v510
    %v546 = vpop.permute.xlu0 %545
    %v547 = vlaneseq
    %v548 = vshrl.u32 %v547, 7
    %v549 = vadd.s32 %v548, 48
    %550 = vset.pattern.permute.xlu0 %v549
    %551 = vperm.xlu0 %550, %v510
    %v552 = vpop.permute.xlu0 %551
    %v553 = vlaneseq
    %v554 = vshrl.u32 %v553, 7
    %v555 = vadd.s32 %v554, 56
    %556 = vset.pattern.permute.xlu0 %v555
    %557 = vperm.xlu0 %556, %v510
    %v558 = vpop.permute.xlu0 %557
    %v559 = vlaneseq
    %v560 = vshrl.u32 %v559, 7
    %v561 = vadd.s32 %v560, 64
    %562 = vset.pattern.permute.xlu0 %v561
    %563 = vperm.xlu0 %562, %v510
    %v564 = vpop.permute.xlu0 %563
    %v565 = vlaneseq
    %v566 = vshrl.u32 %v565, 7
    %v567 = vadd.s32 %v566, 72
    %568 = vset.pattern.permute.xlu0 %v567
    %569 = vperm.xlu0 %568, %v510
    %v570 = vpop.permute.xlu0 %569
    %v571 = vlaneseq
    %v572 = vshrl.u32 %v571, 7
    %v573 = vadd.s32 %v572, 80
    %574 = vset.pattern.permute.xlu0 %v573
    %575 = vperm.xlu0 %574, %v510
    %v576 = vpop.permute.xlu0 %575
    %v577 = vlaneseq
    %v578 = vshrl.u32 %v577, 7
    %v579 = vadd.s32 %v578, 88
    %580 = vset.pattern.permute.xlu0 %v579
    %581 = vperm.xlu0 %580, %v510
    %v582 = vpop.permute.xlu0 %581
    %v583 = vlaneseq
    %v584 = vshrl.u32 %v583, 7
    %v585 = vadd.s32 %v584, 96
    %586 = vset.pattern.permute.xlu0 %v585
    %587 = vperm.xlu0 %586, %v510
    %v588 = vpop.permute.xlu0 %587
    %v589 = vlaneseq
    %v590 = vshrl.u32 %v589, 7
    %v591 = vadd.s32 %v590, 104
    %592 = vset.pattern.permute.xlu0 %v591
    %593 = vperm.xlu0 %592, %v510
    %v594 = vpop.permute.xlu0 %593
    %v595 = vlaneseq
    %v596 = vshrl.u32 %v595, 7
    %v597 = vadd.s32 %v596, 112
    %598 = vset.pattern.permute.xlu0 %v597
    %599 = vperm.xlu0 %598, %v510
    %v600 = vpop.permute.xlu0 %599
    %v601 = vlaneseq
    %v602 = vshrl.u32 %v601, 7
    %v603 = vadd.s32 %v602, 120
    %604 = vset.pattern.permute.xlu0 %v603
    %605 = vperm.xlu0 %604, %v510
    %v606 = vpop.permute.xlu0 %605
    %v607 = vperm.slane %v23, 3
    %v608 = vlaneseq
    %v609 = vshrl.u32 %v608, 7
    %611 = vset.pattern.permute.xlu0 %v609
    %612 = vperm.xlu0 %611, %v607
    %v613 = vpop.permute.xlu0 %612
    %v614 = vlaneseq
    %v615 = vshrl.u32 %v614, 7
    %v616 = vadd.s32 %v615, 8
    %617 = vset.pattern.permute.xlu0 %v616
    %618 = vperm.xlu0 %617, %v607
    %v619 = vpop.permute.xlu0 %618
    %v620 = vlaneseq
    %v621 = vshrl.u32 %v620, 7
    %v622 = vadd.s32 %v621, 16
    %623 = vset.pattern.permute.xlu0 %v622
    %624 = vperm.xlu0 %623, %v607
    %v625 = vpop.permute.xlu0 %624
    %v626 = vlaneseq
    %v627 = vshrl.u32 %v626, 7
    %v628 = vadd.s32 %v627, 24
    %629 = vset.pattern.permute.xlu0 %v628
    %630 = vperm.xlu0 %629, %v607
    %v631 = vpop.permute.xlu0 %630
    %v632 = vlaneseq
    %v633 = vshrl.u32 %v632, 7
    %v634 = vadd.s32 %v633, 32
    %635 = vset.pattern.permute.xlu0 %v634
    %636 = vperm.xlu0 %635, %v607
    %v637 = vpop.permute.xlu0 %636
    %v638 = vlaneseq
    %v639 = vshrl.u32 %v638, 7
    %v640 = vadd.s32 %v639, 40
    %641 = vset.pattern.permute.xlu0 %v640
    %642 = vperm.xlu0 %641, %v607
    %v643 = vpop.permute.xlu0 %642
    %v644 = vlaneseq
    %v645 = vshrl.u32 %v644, 7
    %v646 = vadd.s32 %v645, 48
    %647 = vset.pattern.permute.xlu0 %v646
    %648 = vperm.xlu0 %647, %v607
    %v649 = vpop.permute.xlu0 %648
    %v650 = vlaneseq
    %v651 = vshrl.u32 %v650, 7
    %v652 = vadd.s32 %v651, 56
    %653 = vset.pattern.permute.xlu0 %v652
    %654 = vperm.xlu0 %653, %v607
    %v655 = vpop.permute.xlu0 %654
    %v656 = vlaneseq
    %v657 = vshrl.u32 %v656, 7
    %v658 = vadd.s32 %v657, 64
    %659 = vset.pattern.permute.xlu0 %v658
    %660 = vperm.xlu0 %659, %v607
    %v661 = vpop.permute.xlu0 %660
    %v662 = vlaneseq
    %v663 = vshrl.u32 %v662, 7
    %v664 = vadd.s32 %v663, 72
    %665 = vset.pattern.permute.xlu0 %v664
    %666 = vperm.xlu0 %665, %v607
    %v667 = vpop.permute.xlu0 %666
    %v668 = vlaneseq
    %v669 = vshrl.u32 %v668, 7
    %v670 = vadd.s32 %v669, 80
    %671 = vset.pattern.permute.xlu0 %v670
    %672 = vperm.xlu0 %671, %v607
    %v673 = vpop.permute.xlu0 %672
    %v674 = vlaneseq
    %v675 = vshrl.u32 %v674, 7
    %v676 = vadd.s32 %v675, 88
    %677 = vset.pattern.permute.xlu0 %v676
    %678 = vperm.xlu0 %677, %v607
    %v679 = vpop.permute.xlu0 %678
    %v680 = vlaneseq
    %v681 = vshrl.u32 %v680, 7
    %v682 = vadd.s32 %v681, 96
    %683 = vset.pattern.permute.xlu0 %v682
    %684 = vperm.xlu0 %683, %v607
    %v685 = vpop.permute.xlu0 %684
    %v686 = vlaneseq
    %v687 = vshrl.u32 %v686, 7
    %v688 = vadd.s32 %v687, 104
    %689 = vset.pattern.permute.xlu0 %v688
    %690 = vperm.xlu0 %689, %v607
    %v691 = vpop.permute.xlu0 %690
    %v692 = vlaneseq
    %v693 = vshrl.u32 %v692, 7
    %v694 = vadd.s32 %v693, 112
    %695 = vset.pattern.permute.xlu0 %v694
    %696 = vperm.xlu0 %695, %v607
    %v697 = vpop.permute.xlu0 %696
    %v698 = vlaneseq
    %v699 = vshrl.u32 %v698, 7
    %v700 = vadd.s32 %v699, 120
    %701 = vset.pattern.permute.xlu0 %v700
    %702 = vperm.xlu0 %701, %v607
    %v703 = vpop.permute.xlu0 %702
    %v704 = vperm.slane %v24, 3
    %v705 = vlaneseq
    %v706 = vshrl.u32 %v705, 7
    %708 = vset.pattern.permute.xlu0 %v706
    %709 = vperm.xlu0 %708, %v704
    %v710 = vpop.permute.xlu0 %709
    %v711 = vlaneseq
    %v712 = vshrl.u32 %v711, 7
    %v713 = vadd.s32 %v712, 8
    %714 = vset.pattern.permute.xlu0 %v713
    %715 = vperm.xlu0 %714, %v704
    %v716 = vpop.permute.xlu0 %715
    %v717 = vlaneseq
    %v718 = vshrl.u32 %v717, 7
    %v719 = vadd.s32 %v718, 16
    %720 = vset.pattern.permute.xlu0 %v719
    %721 = vperm.xlu0 %720, %v704
    %v722 = vpop.permute.xlu0 %721
    %v723 = vlaneseq
    %v724 = vshrl.u32 %v723, 7
    %v725 = vadd.s32 %v724, 24
    %726 = vset.pattern.permute.xlu0 %v725
    %727 = vperm.xlu0 %726, %v704
    %v728 = vpop.permute.xlu0 %727
    %v729 = vlaneseq
    %v730 = vshrl.u32 %v729, 7
    %v731 = vadd.s32 %v730, 32
    %732 = vset.pattern.permute.xlu0 %v731
    %733 = vperm.xlu0 %732, %v704
    %v734 = vpop.permute.xlu0 %733
    %v735 = vlaneseq
    %v736 = vshrl.u32 %v735, 7
    %v737 = vadd.s32 %v736, 40
    %738 = vset.pattern.permute.xlu0 %v737
    %739 = vperm.xlu0 %738, %v704
    %v740 = vpop.permute.xlu0 %739
    %v741 = vlaneseq
    %v742 = vshrl.u32 %v741, 7
    %v743 = vadd.s32 %v742, 48
    %744 = vset.pattern.permute.xlu0 %v743
    %745 = vperm.xlu0 %744, %v704
    %v746 = vpop.permute.xlu0 %745
    %v747 = vlaneseq
    %v748 = vshrl.u32 %v747, 7
    %v749 = vadd.s32 %v748, 56
    %750 = vset.pattern.permute.xlu0 %v749
    %751 = vperm.xlu0 %750, %v704
    %v752 = vpop.permute.xlu0 %751
    %v753 = vlaneseq
    %v754 = vshrl.u32 %v753, 7
    %v755 = vadd.s32 %v754, 64
    %756 = vset.pattern.permute.xlu0 %v755
    %757 = vperm.xlu0 %756, %v704
    %v758 = vpop.permute.xlu0 %757
    %v759 = vlaneseq
    %v760 = vshrl.u32 %v759, 7
    %v761 = vadd.s32 %v760, 72
    %762 = vset.pattern.permute.xlu0 %v761
    %763 = vperm.xlu0 %762, %v704
    %v764 = vpop.permute.xlu0 %763
    %v765 = vlaneseq
    %v766 = vshrl.u32 %v765, 7
    %v767 = vadd.s32 %v766, 80
    %768 = vset.pattern.permute.xlu0 %v767
    %769 = vperm.xlu0 %768, %v704
    %v770 = vpop.permute.xlu0 %769
    %v771 = vlaneseq
    %v772 = vshrl.u32 %v771, 7
    %v773 = vadd.s32 %v772, 88
    %774 = vset.pattern.permute.xlu0 %v773
    %775 = vperm.xlu0 %774, %v704
    %v776 = vpop.permute.xlu0 %775
    %v777 = vlaneseq
    %v778 = vshrl.u32 %v777, 7
    %v779 = vadd.s32 %v778, 96
    %780 = vset.pattern.permute.xlu0 %v779
    %781 = vperm.xlu0 %780, %v704
    %v782 = vpop.permute.xlu0 %781
    %v783 = vlaneseq
    %v784 = vshrl.u32 %v783, 7
    %v785 = vadd.s32 %v784, 104
    %786 = vset.pattern.permute.xlu0 %v785
    %787 = vperm.xlu0 %786, %v704
    %v788 = vpop.permute.xlu0 %787
    %v789 = vlaneseq
    %v790 = vshrl.u32 %v789, 7
    %v791 = vadd.s32 %v790, 112
    %792 = vset.pattern.permute.xlu0 %v791
    %793 = vperm.xlu0 %792, %v704
    %v794 = vpop.permute.xlu0 %793
    %v795 = vlaneseq
    %v796 = vshrl.u32 %v795, 7
    %v797 = vadd.s32 %v796, 120
    %798 = vset.pattern.permute.xlu0 %v797
    %799 = vperm.xlu0 %798, %v704
    %v800 = vpop.permute.xlu0 %799
    %v801 = vperm.slane %v23, 4
    %v802 = vlaneseq
    %v803 = vshrl.u32 %v802, 7
    %805 = vset.pattern.permute.xlu0 %v803
    %806 = vperm.xlu0 %805, %v801
    %v807 = vpop.permute.xlu0 %806
    %v808 = vlaneseq
    %v809 = vshrl.u32 %v808, 7
    %v810 = vadd.s32 %v809, 8
    %811 = vset.pattern.permute.xlu0 %v810
    %812 = vperm.xlu0 %811, %v801
    %v813 = vpop.permute.xlu0 %812
    %v814 = vlaneseq
    %v815 = vshrl.u32 %v814, 7
    %v816 = vadd.s32 %v815, 16
    %817 = vset.pattern.permute.xlu0 %v816
    %818 = vperm.xlu0 %817, %v801
    %v819 = vpop.permute.xlu0 %818
    %v820 = vlaneseq
    %v821 = vshrl.u32 %v820, 7
    %v822 = vadd.s32 %v821, 24
    %823 = vset.pattern.permute.xlu0 %v822
    %824 = vperm.xlu0 %823, %v801
    %v825 = vpop.permute.xlu0 %824
    %v826 = vlaneseq
    %v827 = vshrl.u32 %v826, 7
    %v828 = vadd.s32 %v827, 32
    %829 = vset.pattern.permute.xlu0 %v828
    %830 = vperm.xlu0 %829, %v801
    %v831 = vpop.permute.xlu0 %830
    %v832 = vlaneseq
    %v833 = vshrl.u32 %v832, 7
    %v834 = vadd.s32 %v833, 40
    %835 = vset.pattern.permute.xlu0 %v834
    %836 = vperm.xlu0 %835, %v801
    %v837 = vpop.permute.xlu0 %836
    %v838 = vlaneseq
    %v839 = vshrl.u32 %v838, 7
    %v840 = vadd.s32 %v839, 48
    %841 = vset.pattern.permute.xlu0 %v840
    %842 = vperm.xlu0 %841, %v801
    %v843 = vpop.permute.xlu0 %842
    %v844 = vlaneseq
    %v845 = vshrl.u32 %v844, 7
    %v846 = vadd.s32 %v845, 56
    %847 = vset.pattern.permute.xlu0 %v846
    %848 = vperm.xlu0 %847, %v801
    %v849 = vpop.permute.xlu0 %848
    %v850 = vlaneseq
    %v851 = vshrl.u32 %v850, 7
    %v852 = vadd.s32 %v851, 64
    %853 = vset.pattern.permute.xlu0 %v852
    %854 = vperm.xlu0 %853, %v801
    %v855 = vpop.permute.xlu0 %854
    %v856 = vlaneseq
    %v857 = vshrl.u32 %v856, 7
    %v858 = vadd.s32 %v857, 72
    %859 = vset.pattern.permute.xlu0 %v858
    %860 = vperm.xlu0 %859, %v801
    %v861 = vpop.permute.xlu0 %860
    %v862 = vlaneseq
    %v863 = vshrl.u32 %v862, 7
    %v864 = vadd.s32 %v863, 80
    %865 = vset.pattern.permute.xlu0 %v864
    %866 = vperm.xlu0 %865, %v801
    %v867 = vpop.permute.xlu0 %866
    %v868 = vlaneseq
    %v869 = vshrl.u32 %v868, 7
    %v870 = vadd.s32 %v869, 88
    %871 = vset.pattern.permute.xlu0 %v870
    %872 = vperm.xlu0 %871, %v801
    %v873 = vpop.permute.xlu0 %872
    %v874 = vlaneseq
    %v875 = vshrl.u32 %v874, 7
    %v876 = vadd.s32 %v875, 96
    %877 = vset.pattern.permute.xlu0 %v876
    %878 = vperm.xlu0 %877, %v801
    %v879 = vpop.permute.xlu0 %878
    %v880 = vlaneseq
    %v881 = vshrl.u32 %v880, 7
    %v882 = vadd.s32 %v881, 104
    %883 = vset.pattern.permute.xlu0 %v882
    %884 = vperm.xlu0 %883, %v801
    %v885 = vpop.permute.xlu0 %884
    %v886 = vlaneseq
    %v887 = vshrl.u32 %v886, 7
    %v888 = vadd.s32 %v887, 112
    %889 = vset.pattern.permute.xlu0 %v888
    %890 = vperm.xlu0 %889, %v801
    %v891 = vpop.permute.xlu0 %890
    %v892 = vlaneseq
    %v893 = vshrl.u32 %v892, 7
    %v894 = vadd.s32 %v893, 120
    %895 = vset.pattern.permute.xlu0 %v894
    %896 = vperm.xlu0 %895, %v801
    %v897 = vpop.permute.xlu0 %896
    %v898 = vperm.slane %v24, 4
    %v899 = vlaneseq
    %v900 = vshrl.u32 %v899, 7
    %902 = vset.pattern.permute.xlu0 %v900
    %903 = vperm.xlu0 %902, %v898
    %v904 = vpop.permute.xlu0 %903
    %v905 = vlaneseq
    %v906 = vshrl.u32 %v905, 7
    %v907 = vadd.s32 %v906, 8
    %908 = vset.pattern.permute.xlu0 %v907
    %909 = vperm.xlu0 %908, %v898
    %v910 = vpop.permute.xlu0 %909
    %v911 = vlaneseq
    %v912 = vshrl.u32 %v911, 7
    %v913 = vadd.s32 %v912, 16
    %914 = vset.pattern.permute.xlu0 %v913
    %915 = vperm.xlu0 %914, %v898
    %v916 = vpop.permute.xlu0 %915
    %v917 = vlaneseq
    %v918 = vshrl.u32 %v917, 7
    %v919 = vadd.s32 %v918, 24
    %920 = vset.pattern.permute.xlu0 %v919
    %921 = vperm.xlu0 %920, %v898
    %v922 = vpop.permute.xlu0 %921
    %v923 = vlaneseq
    %v924 = vshrl.u32 %v923, 7
    %v925 = vadd.s32 %v924, 32
    %926 = vset.pattern.permute.xlu0 %v925
    %927 = vperm.xlu0 %926, %v898
    %v928 = vpop.permute.xlu0 %927
    %v929 = vlaneseq
    %v930 = vshrl.u32 %v929, 7
    %v931 = vadd.s32 %v930, 40
    %932 = vset.pattern.permute.xlu0 %v931
    %933 = vperm.xlu0 %932, %v898
    %v934 = vpop.permute.xlu0 %933
    %v935 = vlaneseq
    %v936 = vshrl.u32 %v935, 7
    %v937 = vadd.s32 %v936, 48
    %938 = vset.pattern.permute.xlu0 %v937
    %939 = vperm.xlu0 %938, %v898
    %v940 = vpop.permute.xlu0 %939
    %v941 = vlaneseq
    %v942 = vshrl.u32 %v941, 7
    %v943 = vadd.s32 %v942, 56
    %944 = vset.pattern.permute.xlu0 %v943
    %945 = vperm.xlu0 %944, %v898
    %v946 = vpop.permute.xlu0 %945
    %v947 = vlaneseq
    %v948 = vshrl.u32 %v947, 7
    %v949 = vadd.s32 %v948, 64
    %950 = vset.pattern.permute.xlu0 %v949
    %951 = vperm.xlu0 %950, %v898
    %v952 = vpop.permute.xlu0 %951
    %v953 = vlaneseq
    %v954 = vshrl.u32 %v953, 7
    %v955 = vadd.s32 %v954, 72
    %956 = vset.pattern.permute.xlu0 %v955
    %957 = vperm.xlu0 %956, %v898
    %v958 = vpop.permute.xlu0 %957
    %v959 = vlaneseq
    %v960 = vshrl.u32 %v959, 7
    %v961 = vadd.s32 %v960, 80
    %962 = vset.pattern.permute.xlu0 %v961
    %963 = vperm.xlu0 %962, %v898
    %v964 = vpop.permute.xlu0 %963
    %v965 = vlaneseq
    %v966 = vshrl.u32 %v965, 7
    %v967 = vadd.s32 %v966, 88
    %968 = vset.pattern.permute.xlu0 %v967
    %969 = vperm.xlu0 %968, %v898
    %v970 = vpop.permute.xlu0 %969
    %v971 = vlaneseq
    %v972 = vshrl.u32 %v971, 7
    %v973 = vadd.s32 %v972, 96
    %974 = vset.pattern.permute.xlu0 %v973
    %975 = vperm.xlu0 %974, %v898
    %v976 = vpop.permute.xlu0 %975
    %v977 = vlaneseq
    %v978 = vshrl.u32 %v977, 7
    %v979 = vadd.s32 %v978, 104
    %980 = vset.pattern.permute.xlu0 %v979
    %981 = vperm.xlu0 %980, %v898
    %v982 = vpop.permute.xlu0 %981
    %v983 = vlaneseq
    %v984 = vshrl.u32 %v983, 7
    %v985 = vadd.s32 %v984, 112
    %986 = vset.pattern.permute.xlu0 %v985
    %987 = vperm.xlu0 %986, %v898
    %v988 = vpop.permute.xlu0 %987
    %v989 = vlaneseq
    %v990 = vshrl.u32 %v989, 7
    %v991 = vadd.s32 %v990, 120
    %992 = vset.pattern.permute.xlu0 %v991
    %993 = vperm.xlu0 %992, %v898
    %v994 = vpop.permute.xlu0 %993
    %v995 = vperm.slane %v23, 5
    %v996 = vlaneseq
    %v997 = vshrl.u32 %v996, 7
    %999 = vset.pattern.permute.xlu0 %v997
    %1000 = vperm.xlu0 %999, %v995
    %v1001 = vpop.permute.xlu0 %1000
    %v1002 = vlaneseq
    %v1003 = vshrl.u32 %v1002, 7
    %v1004 = vadd.s32 %v1003, 8
    %1005 = vset.pattern.permute.xlu0 %v1004
    %1006 = vperm.xlu0 %1005, %v995
    %v1007 = vpop.permute.xlu0 %1006
    %v1008 = vlaneseq
    %v1009 = vshrl.u32 %v1008, 7
    %v1010 = vadd.s32 %v1009, 16
    %1011 = vset.pattern.permute.xlu0 %v1010
    %1012 = vperm.xlu0 %1011, %v995
    %v1013 = vpop.permute.xlu0 %1012
    %v1014 = vlaneseq
    %v1015 = vshrl.u32 %v1014, 7
    %v1016 = vadd.s32 %v1015, 24
    %1017 = vset.pattern.permute.xlu0 %v1016
    %1018 = vperm.xlu0 %1017, %v995
    %v1019 = vpop.permute.xlu0 %1018
    %v1020 = vlaneseq
    %v1021 = vshrl.u32 %v1020, 7
    %v1022 = vadd.s32 %v1021, 32
    %1023 = vset.pattern.permute.xlu0 %v1022
    %1024 = vperm.xlu0 %1023, %v995
    %v1025 = vpop.permute.xlu0 %1024
    %v1026 = vlaneseq
    %v1027 = vshrl.u32 %v1026, 7
    %v1028 = vadd.s32 %v1027, 40
    %1029 = vset.pattern.permute.xlu0 %v1028
    %1030 = vperm.xlu0 %1029, %v995
    %v1031 = vpop.permute.xlu0 %1030
    %v1032 = vlaneseq
    %v1033 = vshrl.u32 %v1032, 7
    %v1034 = vadd.s32 %v1033, 48
    %1035 = vset.pattern.permute.xlu0 %v1034
    %1036 = vperm.xlu0 %1035, %v995
    %v1037 = vpop.permute.xlu0 %1036
    %v1038 = vlaneseq
    %v1039 = vshrl.u32 %v1038, 7
    %v1040 = vadd.s32 %v1039, 56
    %1041 = vset.pattern.permute.xlu0 %v1040
    %1042 = vperm.xlu0 %1041, %v995
    %v1043 = vpop.permute.xlu0 %1042
    %v1044 = vlaneseq
    %v1045 = vshrl.u32 %v1044, 7
    %v1046 = vadd.s32 %v1045, 64
    %1047 = vset.pattern.permute.xlu0 %v1046
    %1048 = vperm.xlu0 %1047, %v995
    %v1049 = vpop.permute.xlu0 %1048
    %v1050 = vlaneseq
    %v1051 = vshrl.u32 %v1050, 7
    %v1052 = vadd.s32 %v1051, 72
    %1053 = vset.pattern.permute.xlu0 %v1052
    %1054 = vperm.xlu0 %1053, %v995
    %v1055 = vpop.permute.xlu0 %1054
    %v1056 = vlaneseq
    %v1057 = vshrl.u32 %v1056, 7
    %v1058 = vadd.s32 %v1057, 80
    %1059 = vset.pattern.permute.xlu0 %v1058
    %1060 = vperm.xlu0 %1059, %v995
    %v1061 = vpop.permute.xlu0 %1060
    %v1062 = vlaneseq
    %v1063 = vshrl.u32 %v1062, 7
    %v1064 = vadd.s32 %v1063, 88
    %1065 = vset.pattern.permute.xlu0 %v1064
    %1066 = vperm.xlu0 %1065, %v995
    %v1067 = vpop.permute.xlu0 %1066
    %v1068 = vlaneseq
    %v1069 = vshrl.u32 %v1068, 7
    %v1070 = vadd.s32 %v1069, 96
    %1071 = vset.pattern.permute.xlu0 %v1070
    %1072 = vperm.xlu0 %1071, %v995
    %v1073 = vpop.permute.xlu0 %1072
    %v1074 = vlaneseq
    %v1075 = vshrl.u32 %v1074, 7
    %v1076 = vadd.s32 %v1075, 104
    %1077 = vset.pattern.permute.xlu0 %v1076
    %1078 = vperm.xlu0 %1077, %v995
    %v1079 = vpop.permute.xlu0 %1078
    %v1080 = vlaneseq
    %v1081 = vshrl.u32 %v1080, 7
    %v1082 = vadd.s32 %v1081, 112
    %1083 = vset.pattern.permute.xlu0 %v1082
    %1084 = vperm.xlu0 %1083, %v995
    %v1085 = vpop.permute.xlu0 %1084
    %v1086 = vlaneseq
    %v1087 = vshrl.u32 %v1086, 7
    %v1088 = vadd.s32 %v1087, 120
    %1089 = vset.pattern.permute.xlu0 %v1088
    %1090 = vperm.xlu0 %1089, %v995
    %v1091 = vpop.permute.xlu0 %1090
    %v1092 = vperm.slane %v24, 5
    %v1093 = vlaneseq
    %v1094 = vshrl.u32 %v1093, 7
    %1096 = vset.pattern.permute.xlu0 %v1094
    %1097 = vperm.xlu0 %1096, %v1092
    %v1098 = vpop.permute.xlu0 %1097
    %v1099 = vlaneseq
    %v1100 = vshrl.u32 %v1099, 7
    %v1101 = vadd.s32 %v1100, 8
    %1102 = vset.pattern.permute.xlu0 %v1101
    %1103 = vperm.xlu0 %1102, %v1092
    %v1104 = vpop.permute.xlu0 %1103
    %v1105 = vlaneseq
    %v1106 = vshrl.u32 %v1105, 7
    %v1107 = vadd.s32 %v1106, 16
    %1108 = vset.pattern.permute.xlu0 %v1107
    %1109 = vperm.xlu0 %1108, %v1092
    %v1110 = vpop.permute.xlu0 %1109
    %v1111 = vlaneseq
    %v1112 = vshrl.u32 %v1111, 7
    %v1113 = vadd.s32 %v1112, 24
    %1114 = vset.pattern.permute.xlu0 %v1113
    %1115 = vperm.xlu0 %1114, %v1092
    %v1116 = vpop.permute.xlu0 %1115
    %v1117 = vlaneseq
    %v1118 = vshrl.u32 %v1117, 7
    %v1119 = vadd.s32 %v1118, 32
    %1120 = vset.pattern.permute.xlu0 %v1119
    %1121 = vperm.xlu0 %1120, %v1092
    %v1122 = vpop.permute.xlu0 %1121
    %v1123 = vlaneseq
    %v1124 = vshrl.u32 %v1123, 7
    %v1125 = vadd.s32 %v1124, 40
    %1126 = vset.pattern.permute.xlu0 %v1125
    %1127 = vperm.xlu0 %1126, %v1092
    %v1128 = vpop.permute.xlu0 %1127
    %v1129 = vlaneseq
    %v1130 = vshrl.u32 %v1129, 7
    %v1131 = vadd.s32 %v1130, 48
    %1132 = vset.pattern.permute.xlu0 %v1131
    %1133 = vperm.xlu0 %1132, %v1092
    %v1134 = vpop.permute.xlu0 %1133
    %v1135 = vlaneseq
    %v1136 = vshrl.u32 %v1135, 7
    %v1137 = vadd.s32 %v1136, 56
    %1138 = vset.pattern.permute.xlu0 %v1137
    %1139 = vperm.xlu0 %1138, %v1092
    %v1140 = vpop.permute.xlu0 %1139
    %v1141 = vlaneseq
    %v1142 = vshrl.u32 %v1141, 7
    %v1143 = vadd.s32 %v1142, 64
    %1144 = vset.pattern.permute.xlu0 %v1143
    %1145 = vperm.xlu0 %1144, %v1092
    %v1146 = vpop.permute.xlu0 %1145
    %v1147 = vlaneseq
    %v1148 = vshrl.u32 %v1147, 7
    %v1149 = vadd.s32 %v1148, 72
    %1150 = vset.pattern.permute.xlu0 %v1149
    %1151 = vperm.xlu0 %1150, %v1092
    %v1152 = vpop.permute.xlu0 %1151
    %v1153 = vlaneseq
    %v1154 = vshrl.u32 %v1153, 7
    %v1155 = vadd.s32 %v1154, 80
    %1156 = vset.pattern.permute.xlu0 %v1155
    %1157 = vperm.xlu0 %1156, %v1092
    %v1158 = vpop.permute.xlu0 %1157
    %v1159 = vlaneseq
    %v1160 = vshrl.u32 %v1159, 7
    %v1161 = vadd.s32 %v1160, 88
    %1162 = vset.pattern.permute.xlu0 %v1161
    %1163 = vperm.xlu0 %1162, %v1092
    %v1164 = vpop.permute.xlu0 %1163
    %v1165 = vlaneseq
    %v1166 = vshrl.u32 %v1165, 7
    %v1167 = vadd.s32 %v1166, 96
    %1168 = vset.pattern.permute.xlu0 %v1167
    %1169 = vperm.xlu0 %1168, %v1092
    %v1170 = vpop.permute.xlu0 %1169
    %v1171 = vlaneseq
    %v1172 = vshrl.u32 %v1171, 7
    %v1173 = vadd.s32 %v1172, 104
    %1174 = vset.pattern.permute.xlu0 %v1173
    %1175 = vperm.xlu0 %1174, %v1092
    %v1176 = vpop.permute.xlu0 %1175
    %v1177 = vlaneseq
    %v1178 = vshrl.u32 %v1177, 7
    %v1179 = vadd.s32 %v1178, 112
    %1180 = vset.pattern.permute.xlu0 %v1179
    %1181 = vperm.xlu0 %1180, %v1092
    %v1182 = vpop.permute.xlu0 %1181
    %v1183 = vlaneseq
    %v1184 = vshrl.u32 %v1183, 7
    %v1185 = vadd.s32 %v1184, 120
    %1186 = vset.pattern.permute.xlu0 %v1185
    %1187 = vperm.xlu0 %1186, %v1092
    %v1188 = vpop.permute.xlu0 %1187
    %v1189 = vperm.slane %v23, 6
    %v1190 = vlaneseq
    %v1191 = vshrl.u32 %v1190, 7
    %1193 = vset.pattern.permute.xlu0 %v1191
    %1194 = vperm.xlu0 %1193, %v1189
    %v1195 = vpop.permute.xlu0 %1194
    %v1196 = vlaneseq
    %v1197 = vshrl.u32 %v1196, 7
    %v1198 = vadd.s32 %v1197, 8
    %1199 = vset.pattern.permute.xlu0 %v1198
    %1200 = vperm.xlu0 %1199, %v1189
    %v1201 = vpop.permute.xlu0 %1200
    %v1202 = vlaneseq
    %v1203 = vshrl.u32 %v1202, 7
    %v1204 = vadd.s32 %v1203, 16
    %1205 = vset.pattern.permute.xlu0 %v1204
    %1206 = vperm.xlu0 %1205, %v1189
    %v1207 = vpop.permute.xlu0 %1206
    %v1208 = vlaneseq
    %v1209 = vshrl.u32 %v1208, 7
    %v1210 = vadd.s32 %v1209, 24
    %1211 = vset.pattern.permute.xlu0 %v1210
    %1212 = vperm.xlu0 %1211, %v1189
    %v1213 = vpop.permute.xlu0 %1212
    %v1214 = vlaneseq
    %v1215 = vshrl.u32 %v1214, 7
    %v1216 = vadd.s32 %v1215, 32
    %1217 = vset.pattern.permute.xlu0 %v1216
    %1218 = vperm.xlu0 %1217, %v1189
    %v1219 = vpop.permute.xlu0 %1218
    %v1220 = vlaneseq
    %v1221 = vshrl.u32 %v1220, 7
    %v1222 = vadd.s32 %v1221, 40
    %1223 = vset.pattern.permute.xlu0 %v1222
    %1224 = vperm.xlu0 %1223, %v1189
    %v1225 = vpop.permute.xlu0 %1224
    %v1226 = vlaneseq
    %v1227 = vshrl.u32 %v1226, 7
    %v1228 = vadd.s32 %v1227, 48
    %1229 = vset.pattern.permute.xlu0 %v1228
    %1230 = vperm.xlu0 %1229, %v1189
    %v1231 = vpop.permute.xlu0 %1230
    %v1232 = vlaneseq
    %v1233 = vshrl.u32 %v1232, 7
    %v1234 = vadd.s32 %v1233, 56
    %1235 = vset.pattern.permute.xlu0 %v1234
    %1236 = vperm.xlu0 %1235, %v1189
    %v1237 = vpop.permute.xlu0 %1236
    %v1238 = vlaneseq
    %v1239 = vshrl.u32 %v1238, 7
    %v1240 = vadd.s32 %v1239, 64
    %1241 = vset.pattern.permute.xlu0 %v1240
    %1242 = vperm.xlu0 %1241, %v1189
    %v1243 = vpop.permute.xlu0 %1242
    %v1244 = vlaneseq
    %v1245 = vshrl.u32 %v1244, 7
    %v1246 = vadd.s32 %v1245, 72
    %1247 = vset.pattern.permute.xlu0 %v1246
    %1248 = vperm.xlu0 %1247, %v1189
    %v1249 = vpop.permute.xlu0 %1248
    %v1250 = vlaneseq
    %v1251 = vshrl.u32 %v1250, 7
    %v1252 = vadd.s32 %v1251, 80
    %1253 = vset.pattern.permute.xlu0 %v1252
    %1254 = vperm.xlu0 %1253, %v1189
    %v1255 = vpop.permute.xlu0 %1254
    %v1256 = vlaneseq
    %v1257 = vshrl.u32 %v1256, 7
    %v1258 = vadd.s32 %v1257, 88
    %1259 = vset.pattern.permute.xlu0 %v1258
    %1260 = vperm.xlu0 %1259, %v1189
    %v1261 = vpop.permute.xlu0 %1260
    %v1262 = vlaneseq
    %v1263 = vshrl.u32 %v1262, 7
    %v1264 = vadd.s32 %v1263, 96
    %1265 = vset.pattern.permute.xlu0 %v1264
    %1266 = vperm.xlu0 %1265, %v1189
    %v1267 = vpop.permute.xlu0 %1266
    %v1268 = vlaneseq
    %v1269 = vshrl.u32 %v1268, 7
    %v1270 = vadd.s32 %v1269, 104
    %1271 = vset.pattern.permute.xlu0 %v1270
    %1272 = vperm.xlu0 %1271, %v1189
    %v1273 = vpop.permute.xlu0 %1272
    %v1274 = vlaneseq
    %v1275 = vshrl.u32 %v1274, 7
    %v1276 = vadd.s32 %v1275, 112
    %1277 = vset.pattern.permute.xlu0 %v1276
    %1278 = vperm.xlu0 %1277, %v1189
    %v1279 = vpop.permute.xlu0 %1278
    %v1280 = vlaneseq
    %v1281 = vshrl.u32 %v1280, 7
    %v1282 = vadd.s32 %v1281, 120
    %1283 = vset.pattern.permute.xlu0 %v1282
    %1284 = vperm.xlu0 %1283, %v1189
    %v1285 = vpop.permute.xlu0 %1284
    %v1286 = vperm.slane %v24, 6
    %v1287 = vlaneseq
    %v1288 = vshrl.u32 %v1287, 7
    %1290 = vset.pattern.permute.xlu0 %v1288
    %1291 = vperm.xlu0 %1290, %v1286
    %v1292 = vpop.permute.xlu0 %1291
    %v1293 = vlaneseq
    %v1294 = vshrl.u32 %v1293, 7
    %v1295 = vadd.s32 %v1294, 8
    %1296 = vset.pattern.permute.xlu0 %v1295
    %1297 = vperm.xlu0 %1296, %v1286
    %v1298 = vpop.permute.xlu0 %1297
    %v1299 = vlaneseq
    %v1300 = vshrl.u32 %v1299, 7
    %v1301 = vadd.s32 %v1300, 16
    %1302 = vset.pattern.permute.xlu0 %v1301
    %1303 = vperm.xlu0 %1302, %v1286
    %v1304 = vpop.permute.xlu0 %1303
    %v1305 = vlaneseq
    %v1306 = vshrl.u32 %v1305, 7
    %v1307 = vadd.s32 %v1306, 24
    %1308 = vset.pattern.permute.xlu0 %v1307
    %1309 = vperm.xlu0 %1308, %v1286
    %v1310 = vpop.permute.xlu0 %1309
    %v1311 = vlaneseq
    %v1312 = vshrl.u32 %v1311, 7
    %v1313 = vadd.s32 %v1312, 32
    %1314 = vset.pattern.permute.xlu0 %v1313
    %1315 = vperm.xlu0 %1314, %v1286
    %v1316 = vpop.permute.xlu0 %1315
    %v1317 = vlaneseq
    %v1318 = vshrl.u32 %v1317, 7
    %v1319 = vadd.s32 %v1318, 40
    %1320 = vset.pattern.permute.xlu0 %v1319
    %1321 = vperm.xlu0 %1320, %v1286
    %v1322 = vpop.permute.xlu0 %1321
    %v1323 = vlaneseq
    %v1324 = vshrl.u32 %v1323, 7
    %v1325 = vadd.s32 %v1324, 48
    %1326 = vset.pattern.permute.xlu0 %v1325
    %1327 = vperm.xlu0 %1326, %v1286
    %v1328 = vpop.permute.xlu0 %1327
    %v1329 = vlaneseq
    %v1330 = vshrl.u32 %v1329, 7
    %v1331 = vadd.s32 %v1330, 56
    %1332 = vset.pattern.permute.xlu0 %v1331
    %1333 = vperm.xlu0 %1332, %v1286
    %v1334 = vpop.permute.xlu0 %1333
    %v1335 = vlaneseq
    %v1336 = vshrl.u32 %v1335, 7
    %v1337 = vadd.s32 %v1336, 64
    %1338 = vset.pattern.permute.xlu0 %v1337
    %1339 = vperm.xlu0 %1338, %v1286
    %v1340 = vpop.permute.xlu0 %1339
    %v1341 = vlaneseq
    %v1342 = vshrl.u32 %v1341, 7
    %v1343 = vadd.s32 %v1342, 72
    %1344 = vset.pattern.permute.xlu0 %v1343
    %1345 = vperm.xlu0 %1344, %v1286
    %v1346 = vpop.permute.xlu0 %1345
    %v1347 = vlaneseq
    %v1348 = vshrl.u32 %v1347, 7
    %v1349 = vadd.s32 %v1348, 80
    %1350 = vset.pattern.permute.xlu0 %v1349
    %1351 = vperm.xlu0 %1350, %v1286
    %v1352 = vpop.permute.xlu0 %1351
    %v1353 = vlaneseq
    %v1354 = vshrl.u32 %v1353, 7
    %v1355 = vadd.s32 %v1354, 88
    %1356 = vset.pattern.permute.xlu0 %v1355
    %1357 = vperm.xlu0 %1356, %v1286
    %v1358 = vpop.permute.xlu0 %1357
    %v1359 = vlaneseq
    %v1360 = vshrl.u32 %v1359, 7
    %v1361 = vadd.s32 %v1360, 96
    %1362 = vset.pattern.permute.xlu0 %v1361
    %1363 = vperm.xlu0 %1362, %v1286
    %v1364 = vpop.permute.xlu0 %1363
    %v1365 = vlaneseq
    %v1366 = vshrl.u32 %v1365, 7
    %v1367 = vadd.s32 %v1366, 104
    %1368 = vset.pattern.permute.xlu0 %v1367
    %1369 = vperm.xlu0 %1368, %v1286
    %v1370 = vpop.permute.xlu0 %1369
    %v1371 = vlaneseq
    %v1372 = vshrl.u32 %v1371, 7
    %v1373 = vadd.s32 %v1372, 112
    %1374 = vset.pattern.permute.xlu0 %v1373
    %1375 = vperm.xlu0 %1374, %v1286
    %v1376 = vpop.permute.xlu0 %1375
    %v1377 = vlaneseq
    %v1378 = vshrl.u32 %v1377, 7
    %v1379 = vadd.s32 %v1378, 120
    %1380 = vset.pattern.permute.xlu0 %v1379
    %1381 = vperm.xlu0 %1380, %v1286
    %v1382 = vpop.permute.xlu0 %1381
    %v1383 = vperm.slane %v23, 7
    %v1384 = vlaneseq
    %v1385 = vshrl.u32 %v1384, 7
    %1387 = vset.pattern.permute.xlu0 %v1385
    %1388 = vperm.xlu0 %1387, %v1383
    %v1389 = vpop.permute.xlu0 %1388
    %v1390 = vlaneseq
    %v1391 = vshrl.u32 %v1390, 7
    %v1392 = vadd.s32 %v1391, 8
    %1393 = vset.pattern.permute.xlu0 %v1392
    %1394 = vperm.xlu0 %1393, %v1383
    %v1395 = vpop.permute.xlu0 %1394
    %v1396 = vlaneseq
    %v1397 = vshrl.u32 %v1396, 7
    %v1398 = vadd.s32 %v1397, 16
    %1399 = vset.pattern.permute.xlu0 %v1398
    %1400 = vperm.xlu0 %1399, %v1383
    %v1401 = vpop.permute.xlu0 %1400
    %v1402 = vlaneseq
    %v1403 = vshrl.u32 %v1402, 7
    %v1404 = vadd.s32 %v1403, 24
    %1405 = vset.pattern.permute.xlu0 %v1404
    %1406 = vperm.xlu0 %1405, %v1383
    %v1407 = vpop.permute.xlu0 %1406
    %v1408 = vlaneseq
    %v1409 = vshrl.u32 %v1408, 7
    %v1410 = vadd.s32 %v1409, 32
    %1411 = vset.pattern.permute.xlu0 %v1410
    %1412 = vperm.xlu0 %1411, %v1383
    %v1413 = vpop.permute.xlu0 %1412
    %v1414 = vlaneseq
    %v1415 = vshrl.u32 %v1414, 7
    %v1416 = vadd.s32 %v1415, 40
    %1417 = vset.pattern.permute.xlu0 %v1416
    %1418 = vperm.xlu0 %1417, %v1383
    %v1419 = vpop.permute.xlu0 %1418
    %v1420 = vlaneseq
    %v1421 = vshrl.u32 %v1420, 7
    %v1422 = vadd.s32 %v1421, 48
    %1423 = vset.pattern.permute.xlu0 %v1422
    %1424 = vperm.xlu0 %1423, %v1383
    %v1425 = vpop.permute.xlu0 %1424
    %v1426 = vlaneseq
    %v1427 = vshrl.u32 %v1426, 7
    %v1428 = vadd.s32 %v1427, 56
    %1429 = vset.pattern.permute.xlu0 %v1428
    %1430 = vperm.xlu0 %1429, %v1383
    %v1431 = vpop.permute.xlu0 %1430
    %v1432 = vlaneseq
    %v1433 = vshrl.u32 %v1432, 7
    %v1434 = vadd.s32 %v1433, 64
    %1435 = vset.pattern.permute.xlu0 %v1434
    %1436 = vperm.xlu0 %1435, %v1383
    %v1437 = vpop.permute.xlu0 %1436
    %v1438 = vlaneseq
    %v1439 = vshrl.u32 %v1438, 7
    %v1440 = vadd.s32 %v1439, 72
    %1441 = vset.pattern.permute.xlu0 %v1440
    %1442 = vperm.xlu0 %1441, %v1383
    %v1443 = vpop.permute.xlu0 %1442
    %v1444 = vlaneseq
    %v1445 = vshrl.u32 %v1444, 7
    %v1446 = vadd.s32 %v1445, 80
    %1447 = vset.pattern.permute.xlu0 %v1446
    %1448 = vperm.xlu0 %1447, %v1383
    %v1449 = vpop.permute.xlu0 %1448
    %v1450 = vlaneseq
    %v1451 = vshrl.u32 %v1450, 7
    %v1452 = vadd.s32 %v1451, 88
    %1453 = vset.pattern.permute.xlu0 %v1452
    %1454 = vperm.xlu0 %1453, %v1383
    %v1455 = vpop.permute.xlu0 %1454
    %v1456 = vlaneseq
    %v1457 = vshrl.u32 %v1456, 7
    %v1458 = vadd.s32 %v1457, 96
    %1459 = vset.pattern.permute.xlu0 %v1458
    %1460 = vperm.xlu0 %1459, %v1383
    %v1461 = vpop.permute.xlu0 %1460
    %v1462 = vlaneseq
    %v1463 = vshrl.u32 %v1462, 7
    %v1464 = vadd.s32 %v1463, 104
    %1465 = vset.pattern.permute.xlu0 %v1464
    %1466 = vperm.xlu0 %1465, %v1383
    %v1467 = vpop.permute.xlu0 %1466
    %v1468 = vlaneseq
    %v1469 = vshrl.u32 %v1468, 7
    %v1470 = vadd.s32 %v1469, 112
    %1471 = vset.pattern.permute.xlu0 %v1470
    %1472 = vperm.xlu0 %1471, %v1383
    %v1473 = vpop.permute.xlu0 %1472
    %v1474 = vlaneseq
    %v1475 = vshrl.u32 %v1474, 7
    %v1476 = vadd.s32 %v1475, 120
    %1477 = vset.pattern.permute.xlu0 %v1476
    %1478 = vperm.xlu0 %1477, %v1383
    %v1479 = vpop.permute.xlu0 %1478
    %v1480 = vperm.slane %v24, 7
    %v1481 = vlaneseq
    %v1482 = vshrl.u32 %v1481, 7
    %1484 = vset.pattern.permute.xlu0 %v1482
    %1485 = vperm.xlu0 %1484, %v1480
    %v1486 = vpop.permute.xlu0 %1485
    %v1487 = vlaneseq
    %v1488 = vshrl.u32 %v1487, 7
    %v1489 = vadd.s32 %v1488, 8
    %1490 = vset.pattern.permute.xlu0 %v1489
    %1491 = vperm.xlu0 %1490, %v1480
    %v1492 = vpop.permute.xlu0 %1491
    %v1493 = vlaneseq
    %v1494 = vshrl.u32 %v1493, 7
    %v1495 = vadd.s32 %v1494, 16
    %1496 = vset.pattern.permute.xlu0 %v1495
    %1497 = vperm.xlu0 %1496, %v1480
    %v1498 = vpop.permute.xlu0 %1497
    %v1499 = vlaneseq
    %v1500 = vshrl.u32 %v1499, 7
    %v1501 = vadd.s32 %v1500, 24
    %1502 = vset.pattern.permute.xlu0 %v1501
    %1503 = vperm.xlu0 %1502, %v1480
    %v1504 = vpop.permute.xlu0 %1503
    %v1505 = vlaneseq
    %v1506 = vshrl.u32 %v1505, 7
    %v1507 = vadd.s32 %v1506, 32
    %1508 = vset.pattern.permute.xlu0 %v1507
    %1509 = vperm.xlu0 %1508, %v1480
    %v1510 = vpop.permute.xlu0 %1509
    %v1511 = vlaneseq
    %v1512 = vshrl.u32 %v1511, 7
    %v1513 = vadd.s32 %v1512, 40
    %1514 = vset.pattern.permute.xlu0 %v1513
    %1515 = vperm.xlu0 %1514, %v1480
    %v1516 = vpop.permute.xlu0 %1515
    %v1517 = vlaneseq
    %v1518 = vshrl.u32 %v1517, 7
    %v1519 = vadd.s32 %v1518, 48
    %1520 = vset.pattern.permute.xlu0 %v1519
    %1521 = vperm.xlu0 %1520, %v1480
    %v1522 = vpop.permute.xlu0 %1521
    %v1523 = vlaneseq
    %v1524 = vshrl.u32 %v1523, 7
    %v1525 = vadd.s32 %v1524, 56
    %1526 = vset.pattern.permute.xlu0 %v1525
    %1527 = vperm.xlu0 %1526, %v1480
    %v1528 = vpop.permute.xlu0 %1527
    %v1529 = vlaneseq
    %v1530 = vshrl.u32 %v1529, 7
    %v1531 = vadd.s32 %v1530, 64
    %1532 = vset.pattern.permute.xlu0 %v1531
    %1533 = vperm.xlu0 %1532, %v1480
    %v1534 = vpop.permute.xlu0 %1533
    %v1535 = vlaneseq
    %v1536 = vshrl.u32 %v1535, 7
    %v1537 = vadd.s32 %v1536, 72
    %1538 = vset.pattern.permute.xlu0 %v1537
    %1539 = vperm.xlu0 %1538, %v1480
    %v1540 = vpop.permute.xlu0 %1539
    %v1541 = vlaneseq
    %v1542 = vshrl.u32 %v1541, 7
    %v1543 = vadd.s32 %v1542, 80
    %1544 = vset.pattern.permute.xlu0 %v1543
    %1545 = vperm.xlu0 %1544, %v1480
    %v1546 = vpop.permute.xlu0 %1545
    %v1547 = vlaneseq
    %v1548 = vshrl.u32 %v1547, 7
    %v1549 = vadd.s32 %v1548, 88
    %1550 = vset.pattern.permute.xlu0 %v1549
    %1551 = vperm.xlu0 %1550, %v1480
    %v1552 = vpop.permute.xlu0 %1551
    %v1553 = vlaneseq
    %v1554 = vshrl.u32 %v1553, 7
    %v1555 = vadd.s32 %v1554, 96
    %1556 = vset.pattern.permute.xlu0 %v1555
    %1557 = vperm.xlu0 %1556, %v1480
    %v1558 = vpop.permute.xlu0 %1557
    %v1559 = vlaneseq
    %v1560 = vshrl.u32 %v1559, 7
    %v1561 = vadd.s32 %v1560, 104
    %1562 = vset.pattern.permute.xlu0 %v1561
    %1563 = vperm.xlu0 %1562, %v1480
    %v1564 = vpop.permute.xlu0 %1563
    %v1565 = vlaneseq
    %v1566 = vshrl.u32 %v1565, 7
    %v1567 = vadd.s32 %v1566, 112
    %1568 = vset.pattern.permute.xlu0 %v1567
    %1569 = vperm.xlu0 %1568, %v1480
    %v1570 = vpop.permute.xlu0 %1569
    %v1571 = vlaneseq
    %v1572 = vshrl.u32 %v1571, 7
    %v1573 = vadd.s32 %v1572, 120
    %1574 = vset.pattern.permute.xlu0 %v1573
    %1575 = vperm.xlu0 %1574, %v1480
    %v1576 = vpop.permute.xlu0 %1575
    %v1577 = vrot.slane %v419, 4
    %vm1578 = vcmask 1047556
    %v1579 = vsel %vm1578, %v1577, %v31
    %v1580 = vrot.slane %v31, 4
    %v1581 = vsel %vm1578, %v419, %v1580
    %v1583 = vunpack.c.l.s4 1983009808
    %v1584 = vunpack.c.0.s8 %v1583
    %v1585 = vperm.slane %v1579, %v1584
    %v1587 = vunpack.c.l.s4 1983009808
    %v1588 = vunpack.c.0.s8 %v1587
    %v1589 = vperm.slane %v1581, %v1588
    %v1590 = vrot.slane %v613, 4
    %v1591 = vsel %vm1578, %v1590, %v225
    %v1592 = vrot.slane %v225, 4
    %v1593 = vsel %vm1578, %v613, %v1592
    %v1595 = vunpack.c.l.s4 1983009808
    %v1596 = vunpack.c.0.s8 %v1595
    %v1597 = vperm.slane %v1591, %v1596
    %v1599 = vunpack.c.l.s4 1983009808
    %v1600 = vunpack.c.0.s8 %v1599
    %v1601 = vperm.slane %v1593, %v1600
    %v1602 = vrot.slane %v1195, 4
    %v1603 = vsel %vm1578, %v1602, %v807
    %v1604 = vrot.slane %v807, 4
    %v1605 = vsel %vm1578, %v1195, %v1604
    %v1607 = vunpack.c.l.s4 1983009808
    %v1608 = vunpack.c.0.s8 %v1607
    %v1609 = vperm.slane %v1603, %v1608
    %v1611 = vunpack.c.l.s4 1983009808
    %v1612 = vunpack.c.0.s8 %v1611
    %v1613 = vperm.slane %v1605, %v1612
    %v1614 = vrot.slane %v1389, 4
    %v1615 = vsel %vm1578, %v1614, %v1001
    %v1616 = vrot.slane %v1001, 4
    %v1617 = vsel %vm1578, %v1389, %v1616
    %v1619 = vunpack.c.l.s4 1983009808
    %v1620 = vunpack.c.0.s8 %v1619
    %v1621 = vperm.slane %v1615, %v1620
    %v1623 = vunpack.c.l.s4 1983009808
    %v1624 = vunpack.c.0.s8 %v1623
    %v1625 = vperm.slane %v1617, %v1624
    %v1626 = vrot.slane %v1597, 4
    %v1627 = vsel %vm1578, %v1626, %v1585
    %v1628 = vrot.slane %v1585, 4
    %v1629 = vsel %vm1578, %v1597, %v1628
    %v1631 = vunpack.c.l.s4 1934713408
    %v1632 = vunpack.c.0.s8 %v1631
    %v1633 = vperm.slane %v1627, %v1632
    %v1635 = vunpack.c.l.s4 1934713408
    %v1636 = vunpack.c.0.s8 %v1635
    %v1637 = vperm.slane %v1629, %v1636
    %v1638 = vrot.slane %v1601, 4
    %v1639 = vsel %vm1578, %v1638, %v1589
    %v1640 = vrot.slane %v1589, 4
    %v1641 = vsel %vm1578, %v1601, %v1640
    %v1643 = vunpack.c.l.s4 1934713408
    %v1644 = vunpack.c.0.s8 %v1643
    %v1645 = vperm.slane %v1639, %v1644
    %v1647 = vunpack.c.l.s4 1934713408
    %v1648 = vunpack.c.0.s8 %v1647
    %v1649 = vperm.slane %v1641, %v1648
    %v1650 = vrot.slane %v1621, 4
    %v1651 = vsel %vm1578, %v1650, %v1609
    %v1652 = vrot.slane %v1609, 4
    %v1653 = vsel %vm1578, %v1621, %v1652
    %v1655 = vunpack.c.l.s4 1934713408
    %v1656 = vunpack.c.0.s8 %v1655
    %v1657 = vperm.slane %v1651, %v1656
    %v1659 = vunpack.c.l.s4 1934713408
    %v1660 = vunpack.c.0.s8 %v1659
    %v1661 = vperm.slane %v1653, %v1660
    %v1662 = vrot.slane %v1625, 4
    %v1663 = vsel %vm1578, %v1662, %v1613
    %v1664 = vrot.slane %v1613, 4
    %v1665 = vsel %vm1578, %v1625, %v1664
    %v1667 = vunpack.c.l.s4 1934713408
    %v1668 = vunpack.c.0.s8 %v1667
    %v1669 = vperm.slane %v1663, %v1668
    %v1671 = vunpack.c.l.s4 1934713408
    %v1672 = vunpack.c.0.s8 %v1671
    %v1673 = vperm.slane %v1665, %v1672
    %v1674 = vrot.slane %v1657, 4
    %v1675 = vsel %vm1578, %v1674, %v1633
    %v1676 = vrot.slane %v1633, 4
    %v1677 = vsel %vm1578, %v1657, %v1676
    %v1678 = vrot.slane %v1661, 4
    %v1679 = vsel %vm1578, %v1678, %v1637
    %v1680 = vrot.slane %v1637, 4
    %v1681 = vsel %vm1578, %v1661, %v1680
    %v1682 = vrot.slane %v1669, 4
    %v1683 = vsel %vm1578, %v1682, %v1645
    %v1684 = vrot.slane %v1645, 4
    %v1685 = vsel %vm1578, %v1669, %v1684
    %v1686 = vrot.slane %v1673, 4
    %v1687 = vsel %vm1578, %v1686, %v1649
    %v1688 = vrot.slane %v1649, 4
    %v1689 = vsel %vm1578, %v1673, %v1688
    %v1690 = vrot.slane %v425, 4
    %v1691 = vsel %vm1578, %v1690, %v37
    %v1692 = vrot.slane %v37, 4
    %v1693 = vsel %vm1578, %v425, %v1692
    %v1695 = vunpack.c.l.s4 1983009808
    %v1696 = vunpack.c.0.s8 %v1695
    %v1697 = vperm.slane %v1691, %v1696
    %v1699 = vunpack.c.l.s4 1983009808
    %v1700 = vunpack.c.0.s8 %v1699
    %v1701 = vperm.slane %v1693, %v1700
    %v1702 = vrot.slane %v619, 4
    %v1703 = vsel %vm1578, %v1702, %v231
    %v1704 = vrot.slane %v231, 4
    %v1705 = vsel %vm1578, %v619, %v1704
    %v1707 = vunpack.c.l.s4 1983009808
    %v1708 = vunpack.c.0.s8 %v1707
    %v1709 = vperm.slane %v1703, %v1708
    %v1711 = vunpack.c.l.s4 1983009808
    %v1712 = vunpack.c.0.s8 %v1711
    %v1713 = vperm.slane %v1705, %v1712
    %v1714 = vrot.slane %v1201, 4
    %v1715 = vsel %vm1578, %v1714, %v813
    %v1716 = vrot.slane %v813, 4
    %v1717 = vsel %vm1578, %v1201, %v1716
    %v1719 = vunpack.c.l.s4 1983009808
    %v1720 = vunpack.c.0.s8 %v1719
    %v1721 = vperm.slane %v1715, %v1720
    %v1723 = vunpack.c.l.s4 1983009808
    %v1724 = vunpack.c.0.s8 %v1723
    %v1725 = vperm.slane %v1717, %v1724
    %v1726 = vrot.slane %v1395, 4
    %v1727 = vsel %vm1578, %v1726, %v1007
    %v1728 = vrot.slane %v1007, 4
    %v1729 = vsel %vm1578, %v1395, %v1728
    %v1731 = vunpack.c.l.s4 1983009808
    %v1732 = vunpack.c.0.s8 %v1731
    %v1733 = vperm.slane %v1727, %v1732
    %v1735 = vunpack.c.l.s4 1983009808
    %v1736 = vunpack.c.0.s8 %v1735
    %v1737 = vperm.slane %v1729, %v1736
    %v1738 = vrot.slane %v1709, 4
    %v1739 = vsel %vm1578, %v1738, %v1697
    %v1740 = vrot.slane %v1697, 4
    %v1741 = vsel %vm1578, %v1709, %v1740
    %v1743 = vunpack.c.l.s4 1934713408
    %v1744 = vunpack.c.0.s8 %v1743
    %v1745 = vperm.slane %v1739, %v1744
    %v1747 = vunpack.c.l.s4 1934713408
    %v1748 = vunpack.c.0.s8 %v1747
    %v1749 = vperm.slane %v1741, %v1748
    %v1750 = vrot.slane %v1713, 4
    %v1751 = vsel %vm1578, %v1750, %v1701
    %v1752 = vrot.slane %v1701, 4
    %v1753 = vsel %vm1578, %v1713, %v1752
    %v1755 = vunpack.c.l.s4 1934713408
    %v1756 = vunpack.c.0.s8 %v1755
    %v1757 = vperm.slane %v1751, %v1756
    %v1759 = vunpack.c.l.s4 1934713408
    %v1760 = vunpack.c.0.s8 %v1759
    %v1761 = vperm.slane %v1753, %v1760
    %v1762 = vrot.slane %v1733, 4
    %v1763 = vsel %vm1578, %v1762, %v1721
    %v1764 = vrot.slane %v1721, 4
    %v1765 = vsel %vm1578, %v1733, %v1764
    %v1767 = vunpack.c.l.s4 1934713408
    %v1768 = vunpack.c.0.s8 %v1767
    %v1769 = vperm.slane %v1763, %v1768
    %v1771 = vunpack.c.l.s4 1934713408
    %v1772 = vunpack.c.0.s8 %v1771
    %v1773 = vperm.slane %v1765, %v1772
    %v1774 = vrot.slane %v1737, 4
    %v1775 = vsel %vm1578, %v1774, %v1725
    %v1776 = vrot.slane %v1725, 4
    %v1777 = vsel %vm1578, %v1737, %v1776
    %v1779 = vunpack.c.l.s4 1934713408
    %v1780 = vunpack.c.0.s8 %v1779
    %v1781 = vperm.slane %v1775, %v1780
    %v1783 = vunpack.c.l.s4 1934713408
    %v1784 = vunpack.c.0.s8 %v1783
    %v1785 = vperm.slane %v1777, %v1784
    %v1786 = vrot.slane %v1769, 4
    %v1787 = vsel %vm1578, %v1786, %v1745
    %v1788 = vrot.slane %v1745, 4
    %v1789 = vsel %vm1578, %v1769, %v1788
    %v1790 = vrot.slane %v1773, 4
    %v1791 = vsel %vm1578, %v1790, %v1749
    %v1792 = vrot.slane %v1749, 4
    %v1793 = vsel %vm1578, %v1773, %v1792
    %v1794 = vrot.slane %v1781, 4
    %v1795 = vsel %vm1578, %v1794, %v1757
    %v1796 = vrot.slane %v1757, 4
    %v1797 = vsel %vm1578, %v1781, %v1796
    %v1798 = vrot.slane %v1785, 4
    %v1799 = vsel %vm1578, %v1798, %v1761
    %v1800 = vrot.slane %v1761, 4
    %v1801 = vsel %vm1578, %v1785, %v1800
    %v1802 = vrot.slane %v431, 4
    %v1803 = vsel %vm1578, %v1802, %v43
    %v1804 = vrot.slane %v43, 4
    %v1805 = vsel %vm1578, %v431, %v1804
    %v1807 = vunpack.c.l.s4 1983009808
    %v1808 = vunpack.c.0.s8 %v1807
    %v1809 = vperm.slane %v1803, %v1808
    %v1811 = vunpack.c.l.s4 1983009808
    %v1812 = vunpack.c.0.s8 %v1811
    %v1813 = vperm.slane %v1805, %v1812
    %v1814 = vrot.slane %v625, 4
    %v1815 = vsel %vm1578, %v1814, %v237
    %v1816 = vrot.slane %v237, 4
    %v1817 = vsel %vm1578, %v625, %v1816
    %v1819 = vunpack.c.l.s4 1983009808
    %v1820 = vunpack.c.0.s8 %v1819
    %v1821 = vperm.slane %v1815, %v1820
    %v1823 = vunpack.c.l.s4 1983009808
    %v1824 = vunpack.c.0.s8 %v1823
    %v1825 = vperm.slane %v1817, %v1824
    %v1826 = vrot.slane %v1207, 4
    %v1827 = vsel %vm1578, %v1826, %v819
    %v1828 = vrot.slane %v819, 4
    %v1829 = vsel %vm1578, %v1207, %v1828
    %v1831 = vunpack.c.l.s4 1983009808
    %v1832 = vunpack.c.0.s8 %v1831
    %v1833 = vperm.slane %v1827, %v1832
    %v1835 = vunpack.c.l.s4 1983009808
    %v1836 = vunpack.c.0.s8 %v1835
    %v1837 = vperm.slane %v1829, %v1836
    %v1838 = vrot.slane %v1401, 4
    %v1839 = vsel %vm1578, %v1838, %v1013
    %v1840 = vrot.slane %v1013, 4
    %v1841 = vsel %vm1578, %v1401, %v1840
    %v1843 = vunpack.c.l.s4 1983009808
    %v1844 = vunpack.c.0.s8 %v1843
    %v1845 = vperm.slane %v1839, %v1844
    %v1847 = vunpack.c.l.s4 1983009808
    %v1848 = vunpack.c.0.s8 %v1847
    %v1849 = vperm.slane %v1841, %v1848
    %v1850 = vrot.slane %v1821, 4
    %v1851 = vsel %vm1578, %v1850, %v1809
    %v1852 = vrot.slane %v1809, 4
    %v1853 = vsel %vm1578, %v1821, %v1852
    %v1855 = vunpack.c.l.s4 1934713408
    %v1856 = vunpack.c.0.s8 %v1855
    %v1857 = vperm.slane %v1851, %v1856
    %v1859 = vunpack.c.l.s4 1934713408
    %v1860 = vunpack.c.0.s8 %v1859
    %v1861 = vperm.slane %v1853, %v1860
    %v1862 = vrot.slane %v1825, 4
    %v1863 = vsel %vm1578, %v1862, %v1813
    %v1864 = vrot.slane %v1813, 4
    %v1865 = vsel %vm1578, %v1825, %v1864
    %v1867 = vunpack.c.l.s4 1934713408
    %v1868 = vunpack.c.0.s8 %v1867
    %v1869 = vperm.slane %v1863, %v1868
    %v1871 = vunpack.c.l.s4 1934713408
    %v1872 = vunpack.c.0.s8 %v1871
    %v1873 = vperm.slane %v1865, %v1872
    %v1874 = vrot.slane %v1845, 4
    %v1875 = vsel %vm1578, %v1874, %v1833
    %v1876 = vrot.slane %v1833, 4
    %v1877 = vsel %vm1578, %v1845, %v1876
    %v1879 = vunpack.c.l.s4 1934713408
    %v1880 = vunpack.c.0.s8 %v1879
    %v1881 = vperm.slane %v1875, %v1880
    %v1883 = vunpack.c.l.s4 1934713408
    %v1884 = vunpack.c.0.s8 %v1883
    %v1885 = vperm.slane %v1877, %v1884
    %v1886 = vrot.slane %v1849, 4
    %v1887 = vsel %vm1578, %v1886, %v1837
    %v1888 = vrot.slane %v1837, 4
    %v1889 = vsel %vm1578, %v1849, %v1888
    %v1891 = vunpack.c.l.s4 1934713408
    %v1892 = vunpack.c.0.s8 %v1891
    %v1893 = vperm.slane %v1887, %v1892
    %v1895 = vunpack.c.l.s4 1934713408
    %v1896 = vunpack.c.0.s8 %v1895
    %v1897 = vperm.slane %v1889, %v1896
    %v1898 = vrot.slane %v1881, 4
    %v1899 = vsel %vm1578, %v1898, %v1857
    %v1900 = vrot.slane %v1857, 4
    %v1901 = vsel %vm1578, %v1881, %v1900
    %v1902 = vrot.slane %v1885, 4
    %v1903 = vsel %vm1578, %v1902, %v1861
    %v1904 = vrot.slane %v1861, 4
    %v1905 = vsel %vm1578, %v1885, %v1904
    %v1906 = vrot.slane %v1893, 4
    %v1907 = vsel %vm1578, %v1906, %v1869
    %v1908 = vrot.slane %v1869, 4
    %v1909 = vsel %vm1578, %v1893, %v1908
    %v1910 = vrot.slane %v1897, 4
    %v1911 = vsel %vm1578, %v1910, %v1873
    %v1912 = vrot.slane %v1873, 4
    %v1913 = vsel %vm1578, %v1897, %v1912
    %v1914 = vrot.slane %v437, 4
    %v1915 = vsel %vm1578, %v1914, %v49
    %v1916 = vrot.slane %v49, 4
    %v1917 = vsel %vm1578, %v437, %v1916
    %v1919 = vunpack.c.l.s4 1983009808
    %v1920 = vunpack.c.0.s8 %v1919
    %v1921 = vperm.slane %v1915, %v1920
    %v1923 = vunpack.c.l.s4 1983009808
    %v1924 = vunpack.c.0.s8 %v1923
    %v1925 = vperm.slane %v1917, %v1924
    %v1926 = vrot.slane %v631, 4
    %v1927 = vsel %vm1578, %v1926, %v243
    %v1928 = vrot.slane %v243, 4
    %v1929 = vsel %vm1578, %v631, %v1928
    %v1931 = vunpack.c.l.s4 1983009808
    %v1932 = vunpack.c.0.s8 %v1931
    %v1933 = vperm.slane %v1927, %v1932
    %v1935 = vunpack.c.l.s4 1983009808
    %v1936 = vunpack.c.0.s8 %v1935
    %v1937 = vperm.slane %v1929, %v1936
    %v1938 = vrot.slane %v1213, 4
    %v1939 = vsel %vm1578, %v1938, %v825
    %v1940 = vrot.slane %v825, 4
    %v1941 = vsel %vm1578, %v1213, %v1940
    %v1943 = vunpack.c.l.s4 1983009808
    %v1944 = vunpack.c.0.s8 %v1943
    %v1945 = vperm.slane %v1939, %v1944
    %v1947 = vunpack.c.l.s4 1983009808
    %v1948 = vunpack.c.0.s8 %v1947
    %v1949 = vperm.slane %v1941, %v1948
    %v1950 = vrot.slane %v1407, 4
    %v1951 = vsel %vm1578, %v1950, %v1019
    %v1952 = vrot.slane %v1019, 4
    %v1953 = vsel %vm1578, %v1407, %v1952
    %v1955 = vunpack.c.l.s4 1983009808
    %v1956 = vunpack.c.0.s8 %v1955
    %v1957 = vperm.slane %v1951, %v1956
    %v1959 = vunpack.c.l.s4 1983009808
    %v1960 = vunpack.c.0.s8 %v1959
    %v1961 = vperm.slane %v1953, %v1960
    %v1962 = vrot.slane %v1933, 4
    %v1963 = vsel %vm1578, %v1962, %v1921
    %v1964 = vrot.slane %v1921, 4
    %v1965 = vsel %vm1578, %v1933, %v1964
    %v1967 = vunpack.c.l.s4 1934713408
    %v1968 = vunpack.c.0.s8 %v1967
    %v1969 = vperm.slane %v1963, %v1968
    %v1971 = vunpack.c.l.s4 1934713408
    %v1972 = vunpack.c.0.s8 %v1971
    %v1973 = vperm.slane %v1965, %v1972
    %v1974 = vrot.slane %v1937, 4
    %v1975 = vsel %vm1578, %v1974, %v1925
    %v1976 = vrot.slane %v1925, 4
    %v1977 = vsel %vm1578, %v1937, %v1976
    %v1979 = vunpack.c.l.s4 1934713408
    %v1980 = vunpack.c.0.s8 %v1979
    %v1981 = vperm.slane %v1975, %v1980
    %v1983 = vunpack.c.l.s4 1934713408
    %v1984 = vunpack.c.0.s8 %v1983
    %v1985 = vperm.slane %v1977, %v1984
    %v1986 = vrot.slane %v1957, 4
    %v1987 = vsel %vm1578, %v1986, %v1945
    %v1988 = vrot.slane %v1945, 4
    %v1989 = vsel %vm1578, %v1957, %v1988
    %v1991 = vunpack.c.l.s4 1934713408
    %v1992 = vunpack.c.0.s8 %v1991
    %v1993 = vperm.slane %v1987, %v1992
    %v1995 = vunpack.c.l.s4 1934713408
    %v1996 = vunpack.c.0.s8 %v1995
    %v1997 = vperm.slane %v1989, %v1996
    %v1998 = vrot.slane %v1961, 4
    %v1999 = vsel %vm1578, %v1998, %v1949
    %v2000 = vrot.slane %v1949, 4
    %v2001 = vsel %vm1578, %v1961, %v2000
    %v2003 = vunpack.c.l.s4 1934713408
    %v2004 = vunpack.c.0.s8 %v2003
    %v2005 = vperm.slane %v1999, %v2004
    %v2007 = vunpack.c.l.s4 1934713408
    %v2008 = vunpack.c.0.s8 %v2007
    %v2009 = vperm.slane %v2001, %v2008
    %v2010 = vrot.slane %v1993, 4
    %v2011 = vsel %vm1578, %v2010, %v1969
    %v2012 = vrot.slane %v1969, 4
    %v2013 = vsel %vm1578, %v1993, %v2012
    %v2014 = vrot.slane %v1997, 4
    %v2015 = vsel %vm1578, %v2014, %v1973
    %v2016 = vrot.slane %v1973, 4
    %v2017 = vsel %vm1578, %v1997, %v2016
    %v2018 = vrot.slane %v2005, 4
    %v2019 = vsel %vm1578, %v2018, %v1981
    %v2020 = vrot.slane %v1981, 4
    %v2021 = vsel %vm1578, %v2005, %v2020
    %v2022 = vrot.slane %v2009, 4
    %v2023 = vsel %vm1578, %v2022, %v1985
    %v2024 = vrot.slane %v1985, 4
    %v2025 = vsel %vm1578, %v2009, %v2024
    %v2026 = vrot.slane %v443, 4
    %v2027 = vsel %vm1578, %v2026, %v55
    %v2028 = vrot.slane %v55, 4
    %v2029 = vsel %vm1578, %v443, %v2028
    %v2031 = vunpack.c.l.s4 1983009808
    %v2032 = vunpack.c.0.s8 %v2031
    %v2033 = vperm.slane %v2027, %v2032
    %v2035 = vunpack.c.l.s4 1983009808
    %v2036 = vunpack.c.0.s8 %v2035
    %v2037 = vperm.slane %v2029, %v2036
    %v2038 = vrot.slane %v637, 4
    %v2039 = vsel %vm1578, %v2038, %v249
    %v2040 = vrot.slane %v249, 4
    %v2041 = vsel %vm1578, %v637, %v2040
    %v2043 = vunpack.c.l.s4 1983009808
    %v2044 = vunpack.c.0.s8 %v2043
    %v2045 = vperm.slane %v2039, %v2044
    %v2047 = vunpack.c.l.s4 1983009808
    %v2048 = vunpack.c.0.s8 %v2047
    %v2049 = vperm.slane %v2041, %v2048
    %v2050 = vrot.slane %v1219, 4
    %v2051 = vsel %vm1578, %v2050, %v831
    %v2052 = vrot.slane %v831, 4
    %v2053 = vsel %vm1578, %v1219, %v2052
    %v2055 = vunpack.c.l.s4 1983009808
    %v2056 = vunpack.c.0.s8 %v2055
    %v2057 = vperm.slane %v2051, %v2056
    %v2059 = vunpack.c.l.s4 1983009808
    %v2060 = vunpack.c.0.s8 %v2059
    %v2061 = vperm.slane %v2053, %v2060
    %v2062 = vrot.slane %v1413, 4
    %v2063 = vsel %vm1578, %v2062, %v1025
    %v2064 = vrot.slane %v1025, 4
    %v2065 = vsel %vm1578, %v1413, %v2064
    %v2067 = vunpack.c.l.s4 1983009808
    %v2068 = vunpack.c.0.s8 %v2067
    %v2069 = vperm.slane %v2063, %v2068
    %v2071 = vunpack.c.l.s4 1983009808
    %v2072 = vunpack.c.0.s8 %v2071
    %v2073 = vperm.slane %v2065, %v2072
    %v2074 = vrot.slane %v2045, 4
    %v2075 = vsel %vm1578, %v2074, %v2033
    %v2076 = vrot.slane %v2033, 4
    %v2077 = vsel %vm1578, %v2045, %v2076
    %v2079 = vunpack.c.l.s4 1934713408
    %v2080 = vunpack.c.0.s8 %v2079
    %v2081 = vperm.slane %v2075, %v2080
    %v2083 = vunpack.c.l.s4 1934713408
    %v2084 = vunpack.c.0.s8 %v2083
    %v2085 = vperm.slane %v2077, %v2084
    %v2086 = vrot.slane %v2049, 4
    %v2087 = vsel %vm1578, %v2086, %v2037
    %v2088 = vrot.slane %v2037, 4
    %v2089 = vsel %vm1578, %v2049, %v2088
    %v2091 = vunpack.c.l.s4 1934713408
    %v2092 = vunpack.c.0.s8 %v2091
    %v2093 = vperm.slane %v2087, %v2092
    %v2095 = vunpack.c.l.s4 1934713408
    %v2096 = vunpack.c.0.s8 %v2095
    %v2097 = vperm.slane %v2089, %v2096
    %v2098 = vrot.slane %v2069, 4
    %v2099 = vsel %vm1578, %v2098, %v2057
    %v2100 = vrot.slane %v2057, 4
    %v2101 = vsel %vm1578, %v2069, %v2100
    %v2103 = vunpack.c.l.s4 1934713408
    %v2104 = vunpack.c.0.s8 %v2103
    %v2105 = vperm.slane %v2099, %v2104
    %v2107 = vunpack.c.l.s4 1934713408
    %v2108 = vunpack.c.0.s8 %v2107
    %v2109 = vperm.slane %v2101, %v2108
    %v2110 = vrot.slane %v2073, 4
    %v2111 = vsel %vm1578, %v2110, %v2061
    %v2112 = vrot.slane %v2061, 4
    %v2113 = vsel %vm1578, %v2073, %v2112
    %v2115 = vunpack.c.l.s4 1934713408
    %v2116 = vunpack.c.0.s8 %v2115
    %v2117 = vperm.slane %v2111, %v2116
    %v2119 = vunpack.c.l.s4 1934713408
    %v2120 = vunpack.c.0.s8 %v2119
    %v2121 = vperm.slane %v2113, %v2120
    %v2122 = vrot.slane %v2105, 4
    %v2123 = vsel %vm1578, %v2122, %v2081
    %v2124 = vrot.slane %v2081, 4
    %v2125 = vsel %vm1578, %v2105, %v2124
    %v2126 = vrot.slane %v2109, 4
    %v2127 = vsel %vm1578, %v2126, %v2085
    %v2128 = vrot.slane %v2085, 4
    %v2129 = vsel %vm1578, %v2109, %v2128
    %v2130 = vrot.slane %v2117, 4
    %v2131 = vsel %vm1578, %v2130, %v2093
    %v2132 = vrot.slane %v2093, 4
    %v2133 = vsel %vm1578, %v2117, %v2132
    %v2134 = vrot.slane %v2121, 4
    %v2135 = vsel %vm1578, %v2134, %v2097
    %v2136 = vrot.slane %v2097, 4
    %v2137 = vsel %vm1578, %v2121, %v2136
    %v2138 = vrot.slane %v449, 4
    %v2139 = vsel %vm1578, %v2138, %v61
    %v2140 = vrot.slane %v61, 4
    %v2141 = vsel %vm1578, %v449, %v2140
    %v2143 = vunpack.c.l.s4 1983009808
    %v2144 = vunpack.c.0.s8 %v2143
    %v2145 = vperm.slane %v2139, %v2144
    %v2147 = vunpack.c.l.s4 1983009808
    %v2148 = vunpack.c.0.s8 %v2147
    %v2149 = vperm.slane %v2141, %v2148
    %v2150 = vrot.slane %v643, 4
    %v2151 = vsel %vm1578, %v2150, %v255
    %v2152 = vrot.slane %v255, 4
    %v2153 = vsel %vm1578, %v643, %v2152
    %v2155 = vunpack.c.l.s4 1983009808
    %v2156 = vunpack.c.0.s8 %v2155
    %v2157 = vperm.slane %v2151, %v2156
    %v2159 = vunpack.c.l.s4 1983009808
    %v2160 = vunpack.c.0.s8 %v2159
    %v2161 = vperm.slane %v2153, %v2160
    %v2162 = vrot.slane %v1225, 4
    %v2163 = vsel %vm1578, %v2162, %v837
    %v2164 = vrot.slane %v837, 4
    %v2165 = vsel %vm1578, %v1225, %v2164
    %v2167 = vunpack.c.l.s4 1983009808
    %v2168 = vunpack.c.0.s8 %v2167
    %v2169 = vperm.slane %v2163, %v2168
    %v2171 = vunpack.c.l.s4 1983009808
    %v2172 = vunpack.c.0.s8 %v2171
    %v2173 = vperm.slane %v2165, %v2172
    %v2174 = vrot.slane %v1419, 4
    %v2175 = vsel %vm1578, %v2174, %v1031
    %v2176 = vrot.slane %v1031, 4
    %v2177 = vsel %vm1578, %v1419, %v2176
    %v2179 = vunpack.c.l.s4 1983009808
    %v2180 = vunpack.c.0.s8 %v2179
    %v2181 = vperm.slane %v2175, %v2180
    %v2183 = vunpack.c.l.s4 1983009808
    %v2184 = vunpack.c.0.s8 %v2183
    %v2185 = vperm.slane %v2177, %v2184
    %v2186 = vrot.slane %v2157, 4
    %v2187 = vsel %vm1578, %v2186, %v2145
    %v2188 = vrot.slane %v2145, 4
    %v2189 = vsel %vm1578, %v2157, %v2188
    %v2191 = vunpack.c.l.s4 1934713408
    %v2192 = vunpack.c.0.s8 %v2191
    %v2193 = vperm.slane %v2187, %v2192
    %v2195 = vunpack.c.l.s4 1934713408
    %v2196 = vunpack.c.0.s8 %v2195
    %v2197 = vperm.slane %v2189, %v2196
    %v2198 = vrot.slane %v2161, 4
    %v2199 = vsel %vm1578, %v2198, %v2149
    %v2200 = vrot.slane %v2149, 4
    %v2201 = vsel %vm1578, %v2161, %v2200
    %v2203 = vunpack.c.l.s4 1934713408
    %v2204 = vunpack.c.0.s8 %v2203
    %v2205 = vperm.slane %v2199, %v2204
    %v2207 = vunpack.c.l.s4 1934713408
    %v2208 = vunpack.c.0.s8 %v2207
    %v2209 = vperm.slane %v2201, %v2208
    %v2210 = vrot.slane %v2181, 4
    %v2211 = vsel %vm1578, %v2210, %v2169
    %v2212 = vrot.slane %v2169, 4
    %v2213 = vsel %vm1578, %v2181, %v2212
    %v2215 = vunpack.c.l.s4 1934713408
    %v2216 = vunpack.c.0.s8 %v2215
    %v2217 = vperm.slane %v2211, %v2216
    %v2219 = vunpack.c.l.s4 1934713408
    %v2220 = vunpack.c.0.s8 %v2219
    %v2221 = vperm.slane %v2213, %v2220
    %v2222 = vrot.slane %v2185, 4
    %v2223 = vsel %vm1578, %v2222, %v2173
    %v2224 = vrot.slane %v2173, 4
    %v2225 = vsel %vm1578, %v2185, %v2224
    %v2227 = vunpack.c.l.s4 1934713408
    %v2228 = vunpack.c.0.s8 %v2227
    %v2229 = vperm.slane %v2223, %v2228
    %v2231 = vunpack.c.l.s4 1934713408
    %v2232 = vunpack.c.0.s8 %v2231
    %v2233 = vperm.slane %v2225, %v2232
    %v2234 = vrot.slane %v2217, 4
    %v2235 = vsel %vm1578, %v2234, %v2193
    %v2236 = vrot.slane %v2193, 4
    %v2237 = vsel %vm1578, %v2217, %v2236
    %v2238 = vrot.slane %v2221, 4
    %v2239 = vsel %vm1578, %v2238, %v2197
    %v2240 = vrot.slane %v2197, 4
    %v2241 = vsel %vm1578, %v2221, %v2240
    %v2242 = vrot.slane %v2229, 4
    %v2243 = vsel %vm1578, %v2242, %v2205
    %v2244 = vrot.slane %v2205, 4
    %v2245 = vsel %vm1578, %v2229, %v2244
    %v2246 = vrot.slane %v2233, 4
    %v2247 = vsel %vm1578, %v2246, %v2209
    %v2248 = vrot.slane %v2209, 4
    %v2249 = vsel %vm1578, %v2233, %v2248
    %v2250 = vrot.slane %v455, 4
    %v2251 = vsel %vm1578, %v2250, %v67
    %v2252 = vrot.slane %v67, 4
    %v2253 = vsel %vm1578, %v455, %v2252
    %v2255 = vunpack.c.l.s4 1983009808
    %v2256 = vunpack.c.0.s8 %v2255
    %v2257 = vperm.slane %v2251, %v2256
    %v2259 = vunpack.c.l.s4 1983009808
    %v2260 = vunpack.c.0.s8 %v2259
    %v2261 = vperm.slane %v2253, %v2260
    %v2262 = vrot.slane %v649, 4
    %v2263 = vsel %vm1578, %v2262, %v261
    %v2264 = vrot.slane %v261, 4
    %v2265 = vsel %vm1578, %v649, %v2264
    %v2267 = vunpack.c.l.s4 1983009808
    %v2268 = vunpack.c.0.s8 %v2267
    %v2269 = vperm.slane %v2263, %v2268
    %v2271 = vunpack.c.l.s4 1983009808
    %v2272 = vunpack.c.0.s8 %v2271
    %v2273 = vperm.slane %v2265, %v2272
    %v2274 = vrot.slane %v1231, 4
    %v2275 = vsel %vm1578, %v2274, %v843
    %v2276 = vrot.slane %v843, 4
    %v2277 = vsel %vm1578, %v1231, %v2276
    %v2279 = vunpack.c.l.s4 1983009808
    %v2280 = vunpack.c.0.s8 %v2279
    %v2281 = vperm.slane %v2275, %v2280
    %v2283 = vunpack.c.l.s4 1983009808
    %v2284 = vunpack.c.0.s8 %v2283
    %v2285 = vperm.slane %v2277, %v2284
    %v2286 = vrot.slane %v1425, 4
    %v2287 = vsel %vm1578, %v2286, %v1037
    %v2288 = vrot.slane %v1037, 4
    %v2289 = vsel %vm1578, %v1425, %v2288
    %v2291 = vunpack.c.l.s4 1983009808
    %v2292 = vunpack.c.0.s8 %v2291
    %v2293 = vperm.slane %v2287, %v2292
    %v2295 = vunpack.c.l.s4 1983009808
    %v2296 = vunpack.c.0.s8 %v2295
    %v2297 = vperm.slane %v2289, %v2296
    %v2298 = vrot.slane %v2269, 4
    %v2299 = vsel %vm1578, %v2298, %v2257
    %v2300 = vrot.slane %v2257, 4
    %v2301 = vsel %vm1578, %v2269, %v2300
    %v2303 = vunpack.c.l.s4 1934713408
    %v2304 = vunpack.c.0.s8 %v2303
    %v2305 = vperm.slane %v2299, %v2304
    %v2307 = vunpack.c.l.s4 1934713408
    %v2308 = vunpack.c.0.s8 %v2307
    %v2309 = vperm.slane %v2301, %v2308
    %v2310 = vrot.slane %v2273, 4
    %v2311 = vsel %vm1578, %v2310, %v2261
    %v2312 = vrot.slane %v2261, 4
    %v2313 = vsel %vm1578, %v2273, %v2312
    %v2315 = vunpack.c.l.s4 1934713408
    %v2316 = vunpack.c.0.s8 %v2315
    %v2317 = vperm.slane %v2311, %v2316
    %v2319 = vunpack.c.l.s4 1934713408
    %v2320 = vunpack.c.0.s8 %v2319
    %v2321 = vperm.slane %v2313, %v2320
    %v2322 = vrot.slane %v2293, 4
    %v2323 = vsel %vm1578, %v2322, %v2281
    %v2324 = vrot.slane %v2281, 4
    %v2325 = vsel %vm1578, %v2293, %v2324
    %v2327 = vunpack.c.l.s4 1934713408
    %v2328 = vunpack.c.0.s8 %v2327
    %v2329 = vperm.slane %v2323, %v2328
    %v2331 = vunpack.c.l.s4 1934713408
    %v2332 = vunpack.c.0.s8 %v2331
    %v2333 = vperm.slane %v2325, %v2332
    %v2334 = vrot.slane %v2297, 4
    %v2335 = vsel %vm1578, %v2334, %v2285
    %v2336 = vrot.slane %v2285, 4
    %v2337 = vsel %vm1578, %v2297, %v2336
    %v2339 = vunpack.c.l.s4 1934713408
    %v2340 = vunpack.c.0.s8 %v2339
    %v2341 = vperm.slane %v2335, %v2340
    %v2343 = vunpack.c.l.s4 1934713408
    %v2344 = vunpack.c.0.s8 %v2343
    %v2345 = vperm.slane %v2337, %v2344
    %v2346 = vrot.slane %v2329, 4
    %v2347 = vsel %vm1578, %v2346, %v2305
    %v2348 = vrot.slane %v2305, 4
    %v2349 = vsel %vm1578, %v2329, %v2348
    %v2350 = vrot.slane %v2333, 4
    %v2351 = vsel %vm1578, %v2350, %v2309
    %v2352 = vrot.slane %v2309, 4
    %v2353 = vsel %vm1578, %v2333, %v2352
    %v2354 = vrot.slane %v2341, 4
    %v2355 = vsel %vm1578, %v2354, %v2317
    %v2356 = vrot.slane %v2317, 4
    %v2357 = vsel %vm1578, %v2341, %v2356
    %v2358 = vrot.slane %v2345, 4
    %v2359 = vsel %vm1578, %v2358, %v2321
    %v2360 = vrot.slane %v2321, 4
    %v2361 = vsel %vm1578, %v2345, %v2360
    %v2362 = vrot.slane %v461, 4
    %v2363 = vsel %vm1578, %v2362, %v73
    %v2364 = vrot.slane %v73, 4
    %v2365 = vsel %vm1578, %v461, %v2364
    %v2367 = vunpack.c.l.s4 1983009808
    %v2368 = vunpack.c.0.s8 %v2367
    %v2369 = vperm.slane %v2363, %v2368
    %v2371 = vunpack.c.l.s4 1983009808
    %v2372 = vunpack.c.0.s8 %v2371
    %v2373 = vperm.slane %v2365, %v2372
    %v2374 = vrot.slane %v655, 4
    %v2375 = vsel %vm1578, %v2374, %v267
    %v2376 = vrot.slane %v267, 4
    %v2377 = vsel %vm1578, %v655, %v2376
    %v2379 = vunpack.c.l.s4 1983009808
    %v2380 = vunpack.c.0.s8 %v2379
    %v2381 = vperm.slane %v2375, %v2380
    %v2383 = vunpack.c.l.s4 1983009808
    %v2384 = vunpack.c.0.s8 %v2383
    %v2385 = vperm.slane %v2377, %v2384
    %v2386 = vrot.slane %v1237, 4
    %v2387 = vsel %vm1578, %v2386, %v849
    %v2388 = vrot.slane %v849, 4
    %v2389 = vsel %vm1578, %v1237, %v2388
    %v2391 = vunpack.c.l.s4 1983009808
    %v2392 = vunpack.c.0.s8 %v2391
    %v2393 = vperm.slane %v2387, %v2392
    %v2395 = vunpack.c.l.s4 1983009808
    %v2396 = vunpack.c.0.s8 %v2395
    %v2397 = vperm.slane %v2389, %v2396
    %v2398 = vrot.slane %v1431, 4
    %v2399 = vsel %vm1578, %v2398, %v1043
    %v2400 = vrot.slane %v1043, 4
    %v2401 = vsel %vm1578, %v1431, %v2400
    %v2403 = vunpack.c.l.s4 1983009808
    %v2404 = vunpack.c.0.s8 %v2403
    %v2405 = vperm.slane %v2399, %v2404
    %v2407 = vunpack.c.l.s4 1983009808
    %v2408 = vunpack.c.0.s8 %v2407
    %v2409 = vperm.slane %v2401, %v2408
    %v2410 = vrot.slane %v2381, 4
    %v2411 = vsel %vm1578, %v2410, %v2369
    %v2412 = vrot.slane %v2369, 4
    %v2413 = vsel %vm1578, %v2381, %v2412
    %v2415 = vunpack.c.l.s4 1934713408
    %v2416 = vunpack.c.0.s8 %v2415
    %v2417 = vperm.slane %v2411, %v2416
    %v2419 = vunpack.c.l.s4 1934713408
    %v2420 = vunpack.c.0.s8 %v2419
    %v2421 = vperm.slane %v2413, %v2420
    %v2422 = vrot.slane %v2385, 4
    %v2423 = vsel %vm1578, %v2422, %v2373
    %v2424 = vrot.slane %v2373, 4
    %v2425 = vsel %vm1578, %v2385, %v2424
    %v2427 = vunpack.c.l.s4 1934713408
    %v2428 = vunpack.c.0.s8 %v2427
    %v2429 = vperm.slane %v2423, %v2428
    %v2431 = vunpack.c.l.s4 1934713408
    %v2432 = vunpack.c.0.s8 %v2431
    %v2433 = vperm.slane %v2425, %v2432
    %v2434 = vrot.slane %v2405, 4
    %v2435 = vsel %vm1578, %v2434, %v2393
    %v2436 = vrot.slane %v2393, 4
    %v2437 = vsel %vm1578, %v2405, %v2436
    %v2439 = vunpack.c.l.s4 1934713408
    %v2440 = vunpack.c.0.s8 %v2439
    %v2441 = vperm.slane %v2435, %v2440
    %v2443 = vunpack.c.l.s4 1934713408
    %v2444 = vunpack.c.0.s8 %v2443
    %v2445 = vperm.slane %v2437, %v2444
    %v2446 = vrot.slane %v2409, 4
    %v2447 = vsel %vm1578, %v2446, %v2397
    %v2448 = vrot.slane %v2397, 4
    %v2449 = vsel %vm1578, %v2409, %v2448
    %v2451 = vunpack.c.l.s4 1934713408
    %v2452 = vunpack.c.0.s8 %v2451
    %v2453 = vperm.slane %v2447, %v2452
    %v2455 = vunpack.c.l.s4 1934713408
    %v2456 = vunpack.c.0.s8 %v2455
    %v2457 = vperm.slane %v2449, %v2456
    %v2458 = vrot.slane %v2441, 4
    %v2459 = vsel %vm1578, %v2458, %v2417
    %v2460 = vrot.slane %v2417, 4
    %v2461 = vsel %vm1578, %v2441, %v2460
    %v2462 = vrot.slane %v2445, 4
    %v2463 = vsel %vm1578, %v2462, %v2421
    %v2464 = vrot.slane %v2421, 4
    %v2465 = vsel %vm1578, %v2445, %v2464
    %v2466 = vrot.slane %v2453, 4
    %v2467 = vsel %vm1578, %v2466, %v2429
    %v2468 = vrot.slane %v2429, 4
    %v2469 = vsel %vm1578, %v2453, %v2468
    %v2470 = vrot.slane %v2457, 4
    %v2471 = vsel %vm1578, %v2470, %v2433
    %v2472 = vrot.slane %v2433, 4
    %v2473 = vsel %vm1578, %v2457, %v2472
    %v2474 = vrot.slane %v467, 4
    %v2475 = vsel %vm1578, %v2474, %v79
    %v2476 = vrot.slane %v79, 4
    %v2477 = vsel %vm1578, %v467, %v2476
    %v2479 = vunpack.c.l.s4 1983009808
    %v2480 = vunpack.c.0.s8 %v2479
    %v2481 = vperm.slane %v2475, %v2480
    %v2483 = vunpack.c.l.s4 1983009808
    %v2484 = vunpack.c.0.s8 %v2483
    %v2485 = vperm.slane %v2477, %v2484
    %v2486 = vrot.slane %v661, 4
    %v2487 = vsel %vm1578, %v2486, %v273
    %v2488 = vrot.slane %v273, 4
    %v2489 = vsel %vm1578, %v661, %v2488
    %v2491 = vunpack.c.l.s4 1983009808
    %v2492 = vunpack.c.0.s8 %v2491
    %v2493 = vperm.slane %v2487, %v2492
    %v2495 = vunpack.c.l.s4 1983009808
    %v2496 = vunpack.c.0.s8 %v2495
    %v2497 = vperm.slane %v2489, %v2496
    %v2498 = vrot.slane %v1243, 4
    %v2499 = vsel %vm1578, %v2498, %v855
    %v2500 = vrot.slane %v855, 4
    %v2501 = vsel %vm1578, %v1243, %v2500
    %v2503 = vunpack.c.l.s4 1983009808
    %v2504 = vunpack.c.0.s8 %v2503
    %v2505 = vperm.slane %v2499, %v2504
    %v2507 = vunpack.c.l.s4 1983009808
    %v2508 = vunpack.c.0.s8 %v2507
    %v2509 = vperm.slane %v2501, %v2508
    %v2510 = vrot.slane %v1437, 4
    %v2511 = vsel %vm1578, %v2510, %v1049
    %v2512 = vrot.slane %v1049, 4
    %v2513 = vsel %vm1578, %v1437, %v2512
    %v2515 = vunpack.c.l.s4 1983009808
    %v2516 = vunpack.c.0.s8 %v2515
    %v2517 = vperm.slane %v2511, %v2516
    %v2519 = vunpack.c.l.s4 1983009808
    %v2520 = vunpack.c.0.s8 %v2519
    %v2521 = vperm.slane %v2513, %v2520
    %v2522 = vrot.slane %v2493, 4
    %v2523 = vsel %vm1578, %v2522, %v2481
    %v2524 = vrot.slane %v2481, 4
    %v2525 = vsel %vm1578, %v2493, %v2524
    %v2527 = vunpack.c.l.s4 1934713408
    %v2528 = vunpack.c.0.s8 %v2527
    %v2529 = vperm.slane %v2523, %v2528
    %v2531 = vunpack.c.l.s4 1934713408
    %v2532 = vunpack.c.0.s8 %v2531
    %v2533 = vperm.slane %v2525, %v2532
    %v2534 = vrot.slane %v2497, 4
    %v2535 = vsel %vm1578, %v2534, %v2485
    %v2536 = vrot.slane %v2485, 4
    %v2537 = vsel %vm1578, %v2497, %v2536
    %v2539 = vunpack.c.l.s4 1934713408
    %v2540 = vunpack.c.0.s8 %v2539
    %v2541 = vperm.slane %v2535, %v2540
    %v2543 = vunpack.c.l.s4 1934713408
    %v2544 = vunpack.c.0.s8 %v2543
    %v2545 = vperm.slane %v2537, %v2544
    %v2546 = vrot.slane %v2517, 4
    %v2547 = vsel %vm1578, %v2546, %v2505
    %v2548 = vrot.slane %v2505, 4
    %v2549 = vsel %vm1578, %v2517, %v2548
    %v2551 = vunpack.c.l.s4 1934713408
    %v2552 = vunpack.c.0.s8 %v2551
    %v2553 = vperm.slane %v2547, %v2552
    %v2555 = vunpack.c.l.s4 1934713408
    %v2556 = vunpack.c.0.s8 %v2555
    %v2557 = vperm.slane %v2549, %v2556
    %v2558 = vrot.slane %v2521, 4
    %v2559 = vsel %vm1578, %v2558, %v2509
    %v2560 = vrot.slane %v2509, 4
    %v2561 = vsel %vm1578, %v2521, %v2560
    %v2563 = vunpack.c.l.s4 1934713408
    %v2564 = vunpack.c.0.s8 %v2563
    %v2565 = vperm.slane %v2559, %v2564
    %v2567 = vunpack.c.l.s4 1934713408
    %v2568 = vunpack.c.0.s8 %v2567
    %v2569 = vperm.slane %v2561, %v2568
    %v2570 = vrot.slane %v2553, 4
    %v2571 = vsel %vm1578, %v2570, %v2529
    %v2572 = vrot.slane %v2529, 4
    %v2573 = vsel %vm1578, %v2553, %v2572
    %v2574 = vrot.slane %v2557, 4
    %v2575 = vsel %vm1578, %v2574, %v2533
    %v2576 = vrot.slane %v2533, 4
    %v2577 = vsel %vm1578, %v2557, %v2576
    %v2578 = vrot.slane %v2565, 4
    %v2579 = vsel %vm1578, %v2578, %v2541
    %v2580 = vrot.slane %v2541, 4
    %v2581 = vsel %vm1578, %v2565, %v2580
    %v2582 = vrot.slane %v2569, 4
    %v2583 = vsel %vm1578, %v2582, %v2545
    %v2584 = vrot.slane %v2545, 4
    %v2585 = vsel %vm1578, %v2569, %v2584
    %v2586 = vrot.slane %v473, 4
    %v2587 = vsel %vm1578, %v2586, %v85
    %v2588 = vrot.slane %v85, 4
    %v2589 = vsel %vm1578, %v473, %v2588
    %v2591 = vunpack.c.l.s4 1983009808
    %v2592 = vunpack.c.0.s8 %v2591
    %v2593 = vperm.slane %v2587, %v2592
    %v2595 = vunpack.c.l.s4 1983009808
    %v2596 = vunpack.c.0.s8 %v2595
    %v2597 = vperm.slane %v2589, %v2596
    %v2598 = vrot.slane %v667, 4
    %v2599 = vsel %vm1578, %v2598, %v279
    %v2600 = vrot.slane %v279, 4
    %v2601 = vsel %vm1578, %v667, %v2600
    %v2603 = vunpack.c.l.s4 1983009808
    %v2604 = vunpack.c.0.s8 %v2603
    %v2605 = vperm.slane %v2599, %v2604
    %v2607 = vunpack.c.l.s4 1983009808
    %v2608 = vunpack.c.0.s8 %v2607
    %v2609 = vperm.slane %v2601, %v2608
    %v2610 = vrot.slane %v1249, 4
    %v2611 = vsel %vm1578, %v2610, %v861
    %v2612 = vrot.slane %v861, 4
    %v2613 = vsel %vm1578, %v1249, %v2612
    %v2615 = vunpack.c.l.s4 1983009808
    %v2616 = vunpack.c.0.s8 %v2615
    %v2617 = vperm.slane %v2611, %v2616
    %v2619 = vunpack.c.l.s4 1983009808
    %v2620 = vunpack.c.0.s8 %v2619
    %v2621 = vperm.slane %v2613, %v2620
    %v2622 = vrot.slane %v1443, 4
    %v2623 = vsel %vm1578, %v2622, %v1055
    %v2624 = vrot.slane %v1055, 4
    %v2625 = vsel %vm1578, %v1443, %v2624
    %v2627 = vunpack.c.l.s4 1983009808
    %v2628 = vunpack.c.0.s8 %v2627
    %v2629 = vperm.slane %v2623, %v2628
    %v2631 = vunpack.c.l.s4 1983009808
    %v2632 = vunpack.c.0.s8 %v2631
    %v2633 = vperm.slane %v2625, %v2632
    %v2634 = vrot.slane %v2605, 4
    %v2635 = vsel %vm1578, %v2634, %v2593
    %v2636 = vrot.slane %v2593, 4
    %v2637 = vsel %vm1578, %v2605, %v2636
    %v2639 = vunpack.c.l.s4 1934713408
    %v2640 = vunpack.c.0.s8 %v2639
    %v2641 = vperm.slane %v2635, %v2640
    %v2643 = vunpack.c.l.s4 1934713408
    %v2644 = vunpack.c.0.s8 %v2643
    %v2645 = vperm.slane %v2637, %v2644
    %v2646 = vrot.slane %v2609, 4
    %v2647 = vsel %vm1578, %v2646, %v2597
    %v2648 = vrot.slane %v2597, 4
    %v2649 = vsel %vm1578, %v2609, %v2648
    %v2651 = vunpack.c.l.s4 1934713408
    %v2652 = vunpack.c.0.s8 %v2651
    %v2653 = vperm.slane %v2647, %v2652
    %v2655 = vunpack.c.l.s4 1934713408
    %v2656 = vunpack.c.0.s8 %v2655
    %v2657 = vperm.slane %v2649, %v2656
    %v2658 = vrot.slane %v2629, 4
    %v2659 = vsel %vm1578, %v2658, %v2617
    %v2660 = vrot.slane %v2617, 4
    %v2661 = vsel %vm1578, %v2629, %v2660
    %v2663 = vunpack.c.l.s4 1934713408
    %v2664 = vunpack.c.0.s8 %v2663
    %v2665 = vperm.slane %v2659, %v2664
    %v2667 = vunpack.c.l.s4 1934713408
    %v2668 = vunpack.c.0.s8 %v2667
    %v2669 = vperm.slane %v2661, %v2668
    %v2670 = vrot.slane %v2633, 4
    %v2671 = vsel %vm1578, %v2670, %v2621
    %v2672 = vrot.slane %v2621, 4
    %v2673 = vsel %vm1578, %v2633, %v2672
    %v2675 = vunpack.c.l.s4 1934713408
    %v2676 = vunpack.c.0.s8 %v2675
    %v2677 = vperm.slane %v2671, %v2676
    %v2679 = vunpack.c.l.s4 1934713408
    %v2680 = vunpack.c.0.s8 %v2679
    %v2681 = vperm.slane %v2673, %v2680
    %v2682 = vrot.slane %v2665, 4
    %v2683 = vsel %vm1578, %v2682, %v2641
    %v2684 = vrot.slane %v2641, 4
    %v2685 = vsel %vm1578, %v2665, %v2684
    %v2686 = vrot.slane %v2669, 4
    %v2687 = vsel %vm1578, %v2686, %v2645
    %v2688 = vrot.slane %v2645, 4
    %v2689 = vsel %vm1578, %v2669, %v2688
    %v2690 = vrot.slane %v2677, 4
    %v2691 = vsel %vm1578, %v2690, %v2653
    %v2692 = vrot.slane %v2653, 4
    %v2693 = vsel %vm1578, %v2677, %v2692
    %v2694 = vrot.slane %v2681, 4
    %v2695 = vsel %vm1578, %v2694, %v2657
    %v2696 = vrot.slane %v2657, 4
    %v2697 = vsel %vm1578, %v2681, %v2696
    %v2698 = vrot.slane %v479, 4
    %v2699 = vsel %vm1578, %v2698, %v91
    %v2700 = vrot.slane %v91, 4
    %v2701 = vsel %vm1578, %v479, %v2700
    %v2703 = vunpack.c.l.s4 1983009808
    %v2704 = vunpack.c.0.s8 %v2703
    %v2705 = vperm.slane %v2699, %v2704
    %v2707 = vunpack.c.l.s4 1983009808
    %v2708 = vunpack.c.0.s8 %v2707
    %v2709 = vperm.slane %v2701, %v2708
    %v2710 = vrot.slane %v673, 4
    %v2711 = vsel %vm1578, %v2710, %v285
    %v2712 = vrot.slane %v285, 4
    %v2713 = vsel %vm1578, %v673, %v2712
    %v2715 = vunpack.c.l.s4 1983009808
    %v2716 = vunpack.c.0.s8 %v2715
    %v2717 = vperm.slane %v2711, %v2716
    %v2719 = vunpack.c.l.s4 1983009808
    %v2720 = vunpack.c.0.s8 %v2719
    %v2721 = vperm.slane %v2713, %v2720
    %v2722 = vrot.slane %v1255, 4
    %v2723 = vsel %vm1578, %v2722, %v867
    %v2724 = vrot.slane %v867, 4
    %v2725 = vsel %vm1578, %v1255, %v2724
    %v2727 = vunpack.c.l.s4 1983009808
    %v2728 = vunpack.c.0.s8 %v2727
    %v2729 = vperm.slane %v2723, %v2728
    %v2731 = vunpack.c.l.s4 1983009808
    %v2732 = vunpack.c.0.s8 %v2731
    %v2733 = vperm.slane %v2725, %v2732
    %v2734 = vrot.slane %v1449, 4
    %v2735 = vsel %vm1578, %v2734, %v1061
    %v2736 = vrot.slane %v1061, 4
    %v2737 = vsel %vm1578, %v1449, %v2736
    %v2739 = vunpack.c.l.s4 1983009808
    %v2740 = vunpack.c.0.s8 %v2739
    %v2741 = vperm.slane %v2735, %v2740
    %v2743 = vunpack.c.l.s4 1983009808
    %v2744 = vunpack.c.0.s8 %v2743
    %v2745 = vperm.slane %v2737, %v2744
    %v2746 = vrot.slane %v2717, 4
    %v2747 = vsel %vm1578, %v2746, %v2705
    %v2748 = vrot.slane %v2705, 4
    %v2749 = vsel %vm1578, %v2717, %v2748
    %v2751 = vunpack.c.l.s4 1934713408
    %v2752 = vunpack.c.0.s8 %v2751
    %v2753 = vperm.slane %v2747, %v2752
    %v2755 = vunpack.c.l.s4 1934713408
    %v2756 = vunpack.c.0.s8 %v2755
    %v2757 = vperm.slane %v2749, %v2756
    %v2758 = vrot.slane %v2721, 4
    %v2759 = vsel %vm1578, %v2758, %v2709
    %v2760 = vrot.slane %v2709, 4
    %v2761 = vsel %vm1578, %v2721, %v2760
    %v2763 = vunpack.c.l.s4 1934713408
    %v2764 = vunpack.c.0.s8 %v2763
    %v2765 = vperm.slane %v2759, %v2764
    %v2767 = vunpack.c.l.s4 1934713408
    %v2768 = vunpack.c.0.s8 %v2767
    %v2769 = vperm.slane %v2761, %v2768
    %v2770 = vrot.slane %v2741, 4
    %v2771 = vsel %vm1578, %v2770, %v2729
    %v2772 = vrot.slane %v2729, 4
    %v2773 = vsel %vm1578, %v2741, %v2772
    %v2775 = vunpack.c.l.s4 1934713408
    %v2776 = vunpack.c.0.s8 %v2775
    %v2777 = vperm.slane %v2771, %v2776
    %v2779 = vunpack.c.l.s4 1934713408
    %v2780 = vunpack.c.0.s8 %v2779
    %v2781 = vperm.slane %v2773, %v2780
    %v2782 = vrot.slane %v2745, 4
    %v2783 = vsel %vm1578, %v2782, %v2733
    %v2784 = vrot.slane %v2733, 4
    %v2785 = vsel %vm1578, %v2745, %v2784
    %v2787 = vunpack.c.l.s4 1934713408
    %v2788 = vunpack.c.0.s8 %v2787
    %v2789 = vperm.slane %v2783, %v2788
    %v2791 = vunpack.c.l.s4 1934713408
    %v2792 = vunpack.c.0.s8 %v2791
    %v2793 = vperm.slane %v2785, %v2792
    %v2794 = vrot.slane %v2777, 4
    %v2795 = vsel %vm1578, %v2794, %v2753
    %v2796 = vrot.slane %v2753, 4
    %v2797 = vsel %vm1578, %v2777, %v2796
    %v2798 = vrot.slane %v2781, 4
    %v2799 = vsel %vm1578, %v2798, %v2757
    %v2800 = vrot.slane %v2757, 4
    %v2801 = vsel %vm1578, %v2781, %v2800
    %v2802 = vrot.slane %v2789, 4
    %v2803 = vsel %vm1578, %v2802, %v2765
    %v2804 = vrot.slane %v2765, 4
    %v2805 = vsel %vm1578, %v2789, %v2804
    %v2806 = vrot.slane %v2793, 4
    %v2807 = vsel %vm1578, %v2806, %v2769
    %v2808 = vrot.slane %v2769, 4
    %v2809 = vsel %vm1578, %v2793, %v2808
    %v2810 = vrot.slane %v485, 4
    %v2811 = vsel %vm1578, %v2810, %v97
    %v2812 = vrot.slane %v97, 4
    %v2813 = vsel %vm1578, %v485, %v2812
    %v2815 = vunpack.c.l.s4 1983009808
    %v2816 = vunpack.c.0.s8 %v2815
    %v2817 = vperm.slane %v2811, %v2816
    %v2819 = vunpack.c.l.s4 1983009808
    %v2820 = vunpack.c.0.s8 %v2819
    %v2821 = vperm.slane %v2813, %v2820
    %v2822 = vrot.slane %v679, 4
    %v2823 = vsel %vm1578, %v2822, %v291
    %v2824 = vrot.slane %v291, 4
    %v2825 = vsel %vm1578, %v679, %v2824
    %v2827 = vunpack.c.l.s4 1983009808
    %v2828 = vunpack.c.0.s8 %v2827
    %v2829 = vperm.slane %v2823, %v2828
    %v2831 = vunpack.c.l.s4 1983009808
    %v2832 = vunpack.c.0.s8 %v2831
    %v2833 = vperm.slane %v2825, %v2832
    %v2834 = vrot.slane %v1261, 4
    %v2835 = vsel %vm1578, %v2834, %v873
    %v2836 = vrot.slane %v873, 4
    %v2837 = vsel %vm1578, %v1261, %v2836
    %v2839 = vunpack.c.l.s4 1983009808
    %v2840 = vunpack.c.0.s8 %v2839
    %v2841 = vperm.slane %v2835, %v2840
    %v2843 = vunpack.c.l.s4 1983009808
    %v2844 = vunpack.c.0.s8 %v2843
    %v2845 = vperm.slane %v2837, %v2844
    %v2846 = vrot.slane %v1455, 4
    %v2847 = vsel %vm1578, %v2846, %v1067
    %v2848 = vrot.slane %v1067, 4
    %v2849 = vsel %vm1578, %v1455, %v2848
    %v2851 = vunpack.c.l.s4 1983009808
    %v2852 = vunpack.c.0.s8 %v2851
    %v2853 = vperm.slane %v2847, %v2852
    %v2855 = vunpack.c.l.s4 1983009808
    %v2856 = vunpack.c.0.s8 %v2855
    %v2857 = vperm.slane %v2849, %v2856
    %v2858 = vrot.slane %v2829, 4
    %v2859 = vsel %vm1578, %v2858, %v2817
    %v2860 = vrot.slane %v2817, 4
    %v2861 = vsel %vm1578, %v2829, %v2860
    %v2863 = vunpack.c.l.s4 1934713408
    %v2864 = vunpack.c.0.s8 %v2863
    %v2865 = vperm.slane %v2859, %v2864
    %v2867 = vunpack.c.l.s4 1934713408
    %v2868 = vunpack.c.0.s8 %v2867
    %v2869 = vperm.slane %v2861, %v2868
    %v2870 = vrot.slane %v2833, 4
    %v2871 = vsel %vm1578, %v2870, %v2821
    %v2872 = vrot.slane %v2821, 4
    %v2873 = vsel %vm1578, %v2833, %v2872
    %v2875 = vunpack.c.l.s4 1934713408
    %v2876 = vunpack.c.0.s8 %v2875
    %v2877 = vperm.slane %v2871, %v2876
    %v2879 = vunpack.c.l.s4 1934713408
    %v2880 = vunpack.c.0.s8 %v2879
    %v2881 = vperm.slane %v2873, %v2880
    %v2882 = vrot.slane %v2853, 4
    %v2883 = vsel %vm1578, %v2882, %v2841
    %v2884 = vrot.slane %v2841, 4
    %v2885 = vsel %vm1578, %v2853, %v2884
    %v2887 = vunpack.c.l.s4 1934713408
    %v2888 = vunpack.c.0.s8 %v2887
    %v2889 = vperm.slane %v2883, %v2888
    %v2891 = vunpack.c.l.s4 1934713408
    %v2892 = vunpack.c.0.s8 %v2891
    %v2893 = vperm.slane %v2885, %v2892
    %v2894 = vrot.slane %v2857, 4
    %v2895 = vsel %vm1578, %v2894, %v2845
    %v2896 = vrot.slane %v2845, 4
    %v2897 = vsel %vm1578, %v2857, %v2896
    %v2899 = vunpack.c.l.s4 1934713408
    %v2900 = vunpack.c.0.s8 %v2899
    %v2901 = vperm.slane %v2895, %v2900
    %v2903 = vunpack.c.l.s4 1934713408
    %v2904 = vunpack.c.0.s8 %v2903
    %v2905 = vperm.slane %v2897, %v2904
    %v2906 = vrot.slane %v2889, 4
    %v2907 = vsel %vm1578, %v2906, %v2865
    %v2908 = vrot.slane %v2865, 4
    %v2909 = vsel %vm1578, %v2889, %v2908
    %v2910 = vrot.slane %v2893, 4
    %v2911 = vsel %vm1578, %v2910, %v2869
    %v2912 = vrot.slane %v2869, 4
    %v2913 = vsel %vm1578, %v2893, %v2912
    %v2914 = vrot.slane %v2901, 4
    %v2915 = vsel %vm1578, %v2914, %v2877
    %v2916 = vrot.slane %v2877, 4
    %v2917 = vsel %vm1578, %v2901, %v2916
    %v2918 = vrot.slane %v2905, 4
    %v2919 = vsel %vm1578, %v2918, %v2881
    %v2920 = vrot.slane %v2881, 4
    %v2921 = vsel %vm1578, %v2905, %v2920
    %v2922 = vrot.slane %v491, 4
    %v2923 = vsel %vm1578, %v2922, %v103
    %v2924 = vrot.slane %v103, 4
    %v2925 = vsel %vm1578, %v491, %v2924
    %v2927 = vunpack.c.l.s4 1983009808
    %v2928 = vunpack.c.0.s8 %v2927
    %v2929 = vperm.slane %v2923, %v2928
    %v2931 = vunpack.c.l.s4 1983009808
    %v2932 = vunpack.c.0.s8 %v2931
    %v2933 = vperm.slane %v2925, %v2932
    %v2934 = vrot.slane %v685, 4
    %v2935 = vsel %vm1578, %v2934, %v297
    %v2936 = vrot.slane %v297, 4
    %v2937 = vsel %vm1578, %v685, %v2936
    %v2939 = vunpack.c.l.s4 1983009808
    %v2940 = vunpack.c.0.s8 %v2939
    %v2941 = vperm.slane %v2935, %v2940
    %v2943 = vunpack.c.l.s4 1983009808
    %v2944 = vunpack.c.0.s8 %v2943
    %v2945 = vperm.slane %v2937, %v2944
    %v2946 = vrot.slane %v1267, 4
    %v2947 = vsel %vm1578, %v2946, %v879
    %v2948 = vrot.slane %v879, 4
    %v2949 = vsel %vm1578, %v1267, %v2948
    %v2951 = vunpack.c.l.s4 1983009808
    %v2952 = vunpack.c.0.s8 %v2951
    %v2953 = vperm.slane %v2947, %v2952
    %v2955 = vunpack.c.l.s4 1983009808
    %v2956 = vunpack.c.0.s8 %v2955
    %v2957 = vperm.slane %v2949, %v2956
    %v2958 = vrot.slane %v1461, 4
    %v2959 = vsel %vm1578, %v2958, %v1073
    %v2960 = vrot.slane %v1073, 4
    %v2961 = vsel %vm1578, %v1461, %v2960
    %v2963 = vunpack.c.l.s4 1983009808
    %v2964 = vunpack.c.0.s8 %v2963
    %v2965 = vperm.slane %v2959, %v2964
    %v2967 = vunpack.c.l.s4 1983009808
    %v2968 = vunpack.c.0.s8 %v2967
    %v2969 = vperm.slane %v2961, %v2968
    %v2970 = vrot.slane %v2941, 4
    %v2971 = vsel %vm1578, %v2970, %v2929
    %v2972 = vrot.slane %v2929, 4
    %v2973 = vsel %vm1578, %v2941, %v2972
    %v2975 = vunpack.c.l.s4 1934713408
    %v2976 = vunpack.c.0.s8 %v2975
    %v2977 = vperm.slane %v2971, %v2976
    %v2979 = vunpack.c.l.s4 1934713408
    %v2980 = vunpack.c.0.s8 %v2979
    %v2981 = vperm.slane %v2973, %v2980
    %v2982 = vrot.slane %v2945, 4
    %v2983 = vsel %vm1578, %v2982, %v2933
    %v2984 = vrot.slane %v2933, 4
    %v2985 = vsel %vm1578, %v2945, %v2984
    %v2987 = vunpack.c.l.s4 1934713408
    %v2988 = vunpack.c.0.s8 %v2987
    %v2989 = vperm.slane %v2983, %v2988
    %v2991 = vunpack.c.l.s4 1934713408
    %v2992 = vunpack.c.0.s8 %v2991
    %v2993 = vperm.slane %v2985, %v2992
    %v2994 = vrot.slane %v2965, 4
    %v2995 = vsel %vm1578, %v2994, %v2953
    %v2996 = vrot.slane %v2953, 4
    %v2997 = vsel %vm1578, %v2965, %v2996
    %v2999 = vunpack.c.l.s4 1934713408
    %v3000 = vunpack.c.0.s8 %v2999
    %v3001 = vperm.slane %v2995, %v3000
    %v3003 = vunpack.c.l.s4 1934713408
    %v3004 = vunpack.c.0.s8 %v3003
    %v3005 = vperm.slane %v2997, %v3004
    %v3006 = vrot.slane %v2969, 4
    %v3007 = vsel %vm1578, %v3006, %v2957
    %v3008 = vrot.slane %v2957, 4
    %v3009 = vsel %vm1578, %v2969, %v3008
    %v3011 = vunpack.c.l.s4 1934713408
    %v3012 = vunpack.c.0.s8 %v3011
    %v3013 = vperm.slane %v3007, %v3012
    %v3015 = vunpack.c.l.s4 1934713408
    %v3016 = vunpack.c.0.s8 %v3015
    %v3017 = vperm.slane %v3009, %v3016
    %v3018 = vrot.slane %v3001, 4
    %v3019 = vsel %vm1578, %v3018, %v2977
    %v3020 = vrot.slane %v2977, 4
    %v3021 = vsel %vm1578, %v3001, %v3020
    %v3022 = vrot.slane %v3005, 4
    %v3023 = vsel %vm1578, %v3022, %v2981
    %v3024 = vrot.slane %v2981, 4
    %v3025 = vsel %vm1578, %v3005, %v3024
    %v3026 = vrot.slane %v3013, 4
    %v3027 = vsel %vm1578, %v3026, %v2989
    %v3028 = vrot.slane %v2989, 4
    %v3029 = vsel %vm1578, %v3013, %v3028
    %v3030 = vrot.slane %v3017, 4
    %v3031 = vsel %vm1578, %v3030, %v2993
    %v3032 = vrot.slane %v2993, 4
    %v3033 = vsel %vm1578, %v3017, %v3032
    %v3034 = vrot.slane %v497, 4
    %v3035 = vsel %vm1578, %v3034, %v109
    %v3036 = vrot.slane %v109, 4
    %v3037 = vsel %vm1578, %v497, %v3036
    %v3039 = vunpack.c.l.s4 1983009808
    %v3040 = vunpack.c.0.s8 %v3039
    %v3041 = vperm.slane %v3035, %v3040
    %v3043 = vunpack.c.l.s4 1983009808
    %v3044 = vunpack.c.0.s8 %v3043
    %v3045 = vperm.slane %v3037, %v3044
    %v3046 = vrot.slane %v691, 4
    %v3047 = vsel %vm1578, %v3046, %v303
    %v3048 = vrot.slane %v303, 4
    %v3049 = vsel %vm1578, %v691, %v3048
    %v3051 = vunpack.c.l.s4 1983009808
    %v3052 = vunpack.c.0.s8 %v3051
    %v3053 = vperm.slane %v3047, %v3052
    %v3055 = vunpack.c.l.s4 1983009808
    %v3056 = vunpack.c.0.s8 %v3055
    %v3057 = vperm.slane %v3049, %v3056
    %v3058 = vrot.slane %v1273, 4
    %v3059 = vsel %vm1578, %v3058, %v885
    %v3060 = vrot.slane %v885, 4
    %v3061 = vsel %vm1578, %v1273, %v3060
    %v3063 = vunpack.c.l.s4 1983009808
    %v3064 = vunpack.c.0.s8 %v3063
    %v3065 = vperm.slane %v3059, %v3064
    %v3067 = vunpack.c.l.s4 1983009808
    %v3068 = vunpack.c.0.s8 %v3067
    %v3069 = vperm.slane %v3061, %v3068
    %v3070 = vrot.slane %v1467, 4
    %v3071 = vsel %vm1578, %v3070, %v1079
    %v3072 = vrot.slane %v1079, 4
    %v3073 = vsel %vm1578, %v1467, %v3072
    %v3075 = vunpack.c.l.s4 1983009808
    %v3076 = vunpack.c.0.s8 %v3075
    %v3077 = vperm.slane %v3071, %v3076
    %v3079 = vunpack.c.l.s4 1983009808
    %v3080 = vunpack.c.0.s8 %v3079
    %v3081 = vperm.slane %v3073, %v3080
    %v3082 = vrot.slane %v3053, 4
    %v3083 = vsel %vm1578, %v3082, %v3041
    %v3084 = vrot.slane %v3041, 4
    %v3085 = vsel %vm1578, %v3053, %v3084
    %v3087 = vunpack.c.l.s4 1934713408
    %v3088 = vunpack.c.0.s8 %v3087
    %v3089 = vperm.slane %v3083, %v3088
    %v3091 = vunpack.c.l.s4 1934713408
    %v3092 = vunpack.c.0.s8 %v3091
    %v3093 = vperm.slane %v3085, %v3092
    %v3094 = vrot.slane %v3057, 4
    %v3095 = vsel %vm1578, %v3094, %v3045
    %v3096 = vrot.slane %v3045, 4
    %v3097 = vsel %vm1578, %v3057, %v3096
    %v3099 = vunpack.c.l.s4 1934713408
    %v3100 = vunpack.c.0.s8 %v3099
    %v3101 = vperm.slane %v3095, %v3100
    %v3103 = vunpack.c.l.s4 1934713408
    %v3104 = vunpack.c.0.s8 %v3103
    %v3105 = vperm.slane %v3097, %v3104
    %v3106 = vrot.slane %v3077, 4
    %v3107 = vsel %vm1578, %v3106, %v3065
    %v3108 = vrot.slane %v3065, 4
    %v3109 = vsel %vm1578, %v3077, %v3108
    %v3111 = vunpack.c.l.s4 1934713408
    %v3112 = vunpack.c.0.s8 %v3111
    %v3113 = vperm.slane %v3107, %v3112
    %v3115 = vunpack.c.l.s4 1934713408
    %v3116 = vunpack.c.0.s8 %v3115
    %v3117 = vperm.slane %v3109, %v3116
    %v3118 = vrot.slane %v3081, 4
    %v3119 = vsel %vm1578, %v3118, %v3069
    %v3120 = vrot.slane %v3069, 4
    %v3121 = vsel %vm1578, %v3081, %v3120
    %v3123 = vunpack.c.l.s4 1934713408
    %v3124 = vunpack.c.0.s8 %v3123
    %v3125 = vperm.slane %v3119, %v3124
    %v3127 = vunpack.c.l.s4 1934713408
    %v3128 = vunpack.c.0.s8 %v3127
    %v3129 = vperm.slane %v3121, %v3128
    %v3130 = vrot.slane %v3113, 4
    %v3131 = vsel %vm1578, %v3130, %v3089
    %v3132 = vrot.slane %v3089, 4
    %v3133 = vsel %vm1578, %v3113, %v3132
    %v3134 = vrot.slane %v3117, 4
    %v3135 = vsel %vm1578, %v3134, %v3093
    %v3136 = vrot.slane %v3093, 4
    %v3137 = vsel %vm1578, %v3117, %v3136
    %v3138 = vrot.slane %v3125, 4
    %v3139 = vsel %vm1578, %v3138, %v3101
    %v3140 = vrot.slane %v3101, 4
    %v3141 = vsel %vm1578, %v3125, %v3140
    %v3142 = vrot.slane %v3129, 4
    %v3143 = vsel %vm1578, %v3142, %v3105
    %v3144 = vrot.slane %v3105, 4
    %v3145 = vsel %vm1578, %v3129, %v3144
    %v3146 = vrot.slane %v503, 4
    %v3147 = vsel %vm1578, %v3146, %v115
    %v3148 = vrot.slane %v115, 4
    %v3149 = vsel %vm1578, %v503, %v3148
    %v3151 = vunpack.c.l.s4 1983009808
    %v3152 = vunpack.c.0.s8 %v3151
    %v3153 = vperm.slane %v3147, %v3152
    %v3155 = vunpack.c.l.s4 1983009808
    %v3156 = vunpack.c.0.s8 %v3155
    %v3157 = vperm.slane %v3149, %v3156
    %v3158 = vrot.slane %v697, 4
    %v3159 = vsel %vm1578, %v3158, %v309
    %v3160 = vrot.slane %v309, 4
    %v3161 = vsel %vm1578, %v697, %v3160
    %v3163 = vunpack.c.l.s4 1983009808
    %v3164 = vunpack.c.0.s8 %v3163
    %v3165 = vperm.slane %v3159, %v3164
    %v3167 = vunpack.c.l.s4 1983009808
    %v3168 = vunpack.c.0.s8 %v3167
    %v3169 = vperm.slane %v3161, %v3168
    %v3170 = vrot.slane %v1279, 4
    %v3171 = vsel %vm1578, %v3170, %v891
    %v3172 = vrot.slane %v891, 4
    %v3173 = vsel %vm1578, %v1279, %v3172
    %v3175 = vunpack.c.l.s4 1983009808
    %v3176 = vunpack.c.0.s8 %v3175
    %v3177 = vperm.slane %v3171, %v3176
    %v3179 = vunpack.c.l.s4 1983009808
    %v3180 = vunpack.c.0.s8 %v3179
    %v3181 = vperm.slane %v3173, %v3180
    %v3182 = vrot.slane %v1473, 4
    %v3183 = vsel %vm1578, %v3182, %v1085
    %v3184 = vrot.slane %v1085, 4
    %v3185 = vsel %vm1578, %v1473, %v3184
    %v3187 = vunpack.c.l.s4 1983009808
    %v3188 = vunpack.c.0.s8 %v3187
    %v3189 = vperm.slane %v3183, %v3188
    %v3191 = vunpack.c.l.s4 1983009808
    %v3192 = vunpack.c.0.s8 %v3191
    %v3193 = vperm.slane %v3185, %v3192
    %v3194 = vrot.slane %v3165, 4
    %v3195 = vsel %vm1578, %v3194, %v3153
    %v3196 = vrot.slane %v3153, 4
    %v3197 = vsel %vm1578, %v3165, %v3196
    %v3199 = vunpack.c.l.s4 1934713408
    %v3200 = vunpack.c.0.s8 %v3199
    %v3201 = vperm.slane %v3195, %v3200
    %v3203 = vunpack.c.l.s4 1934713408
    %v3204 = vunpack.c.0.s8 %v3203
    %v3205 = vperm.slane %v3197, %v3204
    %v3206 = vrot.slane %v3169, 4
    %v3207 = vsel %vm1578, %v3206, %v3157
    %v3208 = vrot.slane %v3157, 4
    %v3209 = vsel %vm1578, %v3169, %v3208
    %v3211 = vunpack.c.l.s4 1934713408
    %v3212 = vunpack.c.0.s8 %v3211
    %v3213 = vperm.slane %v3207, %v3212
    %v3215 = vunpack.c.l.s4 1934713408
    %v3216 = vunpack.c.0.s8 %v3215
    %v3217 = vperm.slane %v3209, %v3216
    %v3218 = vrot.slane %v3189, 4
    %v3219 = vsel %vm1578, %v3218, %v3177
    %v3220 = vrot.slane %v3177, 4
    %v3221 = vsel %vm1578, %v3189, %v3220
    %v3223 = vunpack.c.l.s4 1934713408
    %v3224 = vunpack.c.0.s8 %v3223
    %v3225 = vperm.slane %v3219, %v3224
    %v3227 = vunpack.c.l.s4 1934713408
    %v3228 = vunpack.c.0.s8 %v3227
    %v3229 = vperm.slane %v3221, %v3228
    %v3230 = vrot.slane %v3193, 4
    %v3231 = vsel %vm1578, %v3230, %v3181
    %v3232 = vrot.slane %v3181, 4
    %v3233 = vsel %vm1578, %v3193, %v3232
    %v3235 = vunpack.c.l.s4 1934713408
    %v3236 = vunpack.c.0.s8 %v3235
    %v3237 = vperm.slane %v3231, %v3236
    %v3239 = vunpack.c.l.s4 1934713408
    %v3240 = vunpack.c.0.s8 %v3239
    %v3241 = vperm.slane %v3233, %v3240
    %v3242 = vrot.slane %v3225, 4
    %v3243 = vsel %vm1578, %v3242, %v3201
    %v3244 = vrot.slane %v3201, 4
    %v3245 = vsel %vm1578, %v3225, %v3244
    %v3246 = vrot.slane %v3229, 4
    %v3247 = vsel %vm1578, %v3246, %v3205
    %v3248 = vrot.slane %v3205, 4
    %v3249 = vsel %vm1578, %v3229, %v3248
    %v3250 = vrot.slane %v3237, 4
    %v3251 = vsel %vm1578, %v3250, %v3213
    %v3252 = vrot.slane %v3213, 4
    %v3253 = vsel %vm1578, %v3237, %v3252
    %v3254 = vrot.slane %v3241, 4
    %v3255 = vsel %vm1578, %v3254, %v3217
    %v3256 = vrot.slane %v3217, 4
    %v3257 = vsel %vm1578, %v3241, %v3256
    %v3258 = vrot.slane %v509, 4
    %v3259 = vsel %vm1578, %v3258, %v121
    %v3260 = vrot.slane %v121, 4
    %v3261 = vsel %vm1578, %v509, %v3260
    %v3263 = vunpack.c.l.s4 1983009808
    %v3264 = vunpack.c.0.s8 %v3263
    %v3265 = vperm.slane %v3259, %v3264
    %v3267 = vunpack.c.l.s4 1983009808
    %v3268 = vunpack.c.0.s8 %v3267
    %v3269 = vperm.slane %v3261, %v3268
    %v3270 = vrot.slane %v703, 4
    %v3271 = vsel %vm1578, %v3270, %v315
    %v3272 = vrot.slane %v315, 4
    %v3273 = vsel %vm1578, %v703, %v3272
    %v3275 = vunpack.c.l.s4 1983009808
    %v3276 = vunpack.c.0.s8 %v3275
    %v3277 = vperm.slane %v3271, %v3276
    %v3279 = vunpack.c.l.s4 1983009808
    %v3280 = vunpack.c.0.s8 %v3279
    %v3281 = vperm.slane %v3273, %v3280
    %v3282 = vrot.slane %v1285, 4
    %v3283 = vsel %vm1578, %v3282, %v897
    %v3284 = vrot.slane %v897, 4
    %v3285 = vsel %vm1578, %v1285, %v3284
    %v3287 = vunpack.c.l.s4 1983009808
    %v3288 = vunpack.c.0.s8 %v3287
    %v3289 = vperm.slane %v3283, %v3288
    %v3291 = vunpack.c.l.s4 1983009808
    %v3292 = vunpack.c.0.s8 %v3291
    %v3293 = vperm.slane %v3285, %v3292
    %v3294 = vrot.slane %v1479, 4
    %v3295 = vsel %vm1578, %v3294, %v1091
    %v3296 = vrot.slane %v1091, 4
    %v3297 = vsel %vm1578, %v1479, %v3296
    %v3299 = vunpack.c.l.s4 1983009808
    %v3300 = vunpack.c.0.s8 %v3299
    %v3301 = vperm.slane %v3295, %v3300
    %v3303 = vunpack.c.l.s4 1983009808
    %v3304 = vunpack.c.0.s8 %v3303
    %v3305 = vperm.slane %v3297, %v3304
    %v3306 = vrot.slane %v3277, 4
    %v3307 = vsel %vm1578, %v3306, %v3265
    %v3308 = vrot.slane %v3265, 4
    %v3309 = vsel %vm1578, %v3277, %v3308
    %v3311 = vunpack.c.l.s4 1934713408
    %v3312 = vunpack.c.0.s8 %v3311
    %v3313 = vperm.slane %v3307, %v3312
    %v3315 = vunpack.c.l.s4 1934713408
    %v3316 = vunpack.c.0.s8 %v3315
    %v3317 = vperm.slane %v3309, %v3316
    %v3318 = vrot.slane %v3281, 4
    %v3319 = vsel %vm1578, %v3318, %v3269
    %v3320 = vrot.slane %v3269, 4
    %v3321 = vsel %vm1578, %v3281, %v3320
    %v3323 = vunpack.c.l.s4 1934713408
    %v3324 = vunpack.c.0.s8 %v3323
    %v3325 = vperm.slane %v3319, %v3324
    %v3327 = vunpack.c.l.s4 1934713408
    %v3328 = vunpack.c.0.s8 %v3327
    %v3329 = vperm.slane %v3321, %v3328
    %v3330 = vrot.slane %v3301, 4
    %v3331 = vsel %vm1578, %v3330, %v3289
    %v3332 = vrot.slane %v3289, 4
    %v3333 = vsel %vm1578, %v3301, %v3332
    %v3335 = vunpack.c.l.s4 1934713408
    %v3336 = vunpack.c.0.s8 %v3335
    %v3337 = vperm.slane %v3331, %v3336
    %v3339 = vunpack.c.l.s4 1934713408
    %v3340 = vunpack.c.0.s8 %v3339
    %v3341 = vperm.slane %v3333, %v3340
    %v3342 = vrot.slane %v3305, 4
    %v3343 = vsel %vm1578, %v3342, %v3293
    %v3344 = vrot.slane %v3293, 4
    %v3345 = vsel %vm1578, %v3305, %v3344
    %v3347 = vunpack.c.l.s4 1934713408
    %v3348 = vunpack.c.0.s8 %v3347
    %v3349 = vperm.slane %v3343, %v3348
    %v3351 = vunpack.c.l.s4 1934713408
    %v3352 = vunpack.c.0.s8 %v3351
    %v3353 = vperm.slane %v3345, %v3352
    %v3354 = vrot.slane %v3337, 4
    %v3355 = vsel %vm1578, %v3354, %v3313
    %v3356 = vrot.slane %v3313, 4
    %v3357 = vsel %vm1578, %v3337, %v3356
    %v3358 = vrot.slane %v3341, 4
    %v3359 = vsel %vm1578, %v3358, %v3317
    %v3360 = vrot.slane %v3317, 4
    %v3361 = vsel %vm1578, %v3341, %v3360
    %v3362 = vrot.slane %v3349, 4
    %v3363 = vsel %vm1578, %v3362, %v3325
    %v3364 = vrot.slane %v3325, 4
    %v3365 = vsel %vm1578, %v3349, %v3364
    %v3366 = vrot.slane %v3353, 4
    %v3367 = vsel %vm1578, %v3366, %v3329
    %v3368 = vrot.slane %v3329, 4
    %v3369 = vsel %vm1578, %v3353, %v3368
    %v3370 = vrot.slane %v516, 4
    %v3371 = vsel %vm1578, %v3370, %v128
    %v3372 = vrot.slane %v128, 4
    %v3373 = vsel %vm1578, %v516, %v3372
    %v3375 = vunpack.c.l.s4 1983009808
    %v3376 = vunpack.c.0.s8 %v3375
    %v3377 = vperm.slane %v3371, %v3376
    %v3379 = vunpack.c.l.s4 1983009808
    %v3380 = vunpack.c.0.s8 %v3379
    %v3381 = vperm.slane %v3373, %v3380
    %v3382 = vrot.slane %v710, 4
    %v3383 = vsel %vm1578, %v3382, %v322
    %v3384 = vrot.slane %v322, 4
    %v3385 = vsel %vm1578, %v710, %v3384
    %v3387 = vunpack.c.l.s4 1983009808
    %v3388 = vunpack.c.0.s8 %v3387
    %v3389 = vperm.slane %v3383, %v3388
    %v3391 = vunpack.c.l.s4 1983009808
    %v3392 = vunpack.c.0.s8 %v3391
    %v3393 = vperm.slane %v3385, %v3392
    %v3394 = vrot.slane %v1292, 4
    %v3395 = vsel %vm1578, %v3394, %v904
    %v3396 = vrot.slane %v904, 4
    %v3397 = vsel %vm1578, %v1292, %v3396
    %v3399 = vunpack.c.l.s4 1983009808
    %v3400 = vunpack.c.0.s8 %v3399
    %v3401 = vperm.slane %v3395, %v3400
    %v3403 = vunpack.c.l.s4 1983009808
    %v3404 = vunpack.c.0.s8 %v3403
    %v3405 = vperm.slane %v3397, %v3404
    %v3406 = vrot.slane %v1486, 4
    %v3407 = vsel %vm1578, %v3406, %v1098
    %v3408 = vrot.slane %v1098, 4
    %v3409 = vsel %vm1578, %v1486, %v3408
    %v3411 = vunpack.c.l.s4 1983009808
    %v3412 = vunpack.c.0.s8 %v3411
    %v3413 = vperm.slane %v3407, %v3412
    %v3415 = vunpack.c.l.s4 1983009808
    %v3416 = vunpack.c.0.s8 %v3415
    %v3417 = vperm.slane %v3409, %v3416
    %v3418 = vrot.slane %v3389, 4
    %v3419 = vsel %vm1578, %v3418, %v3377
    %v3420 = vrot.slane %v3377, 4
    %v3421 = vsel %vm1578, %v3389, %v3420
    %v3423 = vunpack.c.l.s4 1934713408
    %v3424 = vunpack.c.0.s8 %v3423
    %v3425 = vperm.slane %v3419, %v3424
    %v3427 = vunpack.c.l.s4 1934713408
    %v3428 = vunpack.c.0.s8 %v3427
    %v3429 = vperm.slane %v3421, %v3428
    %v3430 = vrot.slane %v3393, 4
    %v3431 = vsel %vm1578, %v3430, %v3381
    %v3432 = vrot.slane %v3381, 4
    %v3433 = vsel %vm1578, %v3393, %v3432
    %v3435 = vunpack.c.l.s4 1934713408
    %v3436 = vunpack.c.0.s8 %v3435
    %v3437 = vperm.slane %v3431, %v3436
    %v3439 = vunpack.c.l.s4 1934713408
    %v3440 = vunpack.c.0.s8 %v3439
    %v3441 = vperm.slane %v3433, %v3440
    %v3442 = vrot.slane %v3413, 4
    %v3443 = vsel %vm1578, %v3442, %v3401
    %v3444 = vrot.slane %v3401, 4
    %v3445 = vsel %vm1578, %v3413, %v3444
    %v3447 = vunpack.c.l.s4 1934713408
    %v3448 = vunpack.c.0.s8 %v3447
    %v3449 = vperm.slane %v3443, %v3448
    %v3451 = vunpack.c.l.s4 1934713408
    %v3452 = vunpack.c.0.s8 %v3451
    %v3453 = vperm.slane %v3445, %v3452
    %v3454 = vrot.slane %v3417, 4
    %v3455 = vsel %vm1578, %v3454, %v3405
    %v3456 = vrot.slane %v3405, 4
    %v3457 = vsel %vm1578, %v3417, %v3456
    %v3459 = vunpack.c.l.s4 1934713408
    %v3460 = vunpack.c.0.s8 %v3459
    %v3461 = vperm.slane %v3455, %v3460
    %v3463 = vunpack.c.l.s4 1934713408
    %v3464 = vunpack.c.0.s8 %v3463
    %v3465 = vperm.slane %v3457, %v3464
    %v3466 = vrot.slane %v3449, 4
    %v3467 = vsel %vm1578, %v3466, %v3425
    %v3468 = vrot.slane %v3425, 4
    %v3469 = vsel %vm1578, %v3449, %v3468
    %v3470 = vrot.slane %v3453, 4
    %v3471 = vsel %vm1578, %v3470, %v3429
    %v3472 = vrot.slane %v3429, 4
    %v3473 = vsel %vm1578, %v3453, %v3472
    %v3474 = vrot.slane %v3461, 4
    %v3475 = vsel %vm1578, %v3474, %v3437
    %v3476 = vrot.slane %v3437, 4
    %v3477 = vsel %vm1578, %v3461, %v3476
    %v3478 = vrot.slane %v3465, 4
    %v3479 = vsel %vm1578, %v3478, %v3441
    %v3480 = vrot.slane %v3441, 4
    %v3481 = vsel %vm1578, %v3465, %v3480
    %v3482 = vrot.slane %v522, 4
    %v3483 = vsel %vm1578, %v3482, %v134
    %v3484 = vrot.slane %v134, 4
    %v3485 = vsel %vm1578, %v522, %v3484
    %v3487 = vunpack.c.l.s4 1983009808
    %v3488 = vunpack.c.0.s8 %v3487
    %v3489 = vperm.slane %v3483, %v3488
    %v3491 = vunpack.c.l.s4 1983009808
    %v3492 = vunpack.c.0.s8 %v3491
    %v3493 = vperm.slane %v3485, %v3492
    %v3494 = vrot.slane %v716, 4
    %v3495 = vsel %vm1578, %v3494, %v328
    %v3496 = vrot.slane %v328, 4
    %v3497 = vsel %vm1578, %v716, %v3496
    %v3499 = vunpack.c.l.s4 1983009808
    %v3500 = vunpack.c.0.s8 %v3499
    %v3501 = vperm.slane %v3495, %v3500
    %v3503 = vunpack.c.l.s4 1983009808
    %v3504 = vunpack.c.0.s8 %v3503
    %v3505 = vperm.slane %v3497, %v3504
    %v3506 = vrot.slane %v1298, 4
    %v3507 = vsel %vm1578, %v3506, %v910
    %v3508 = vrot.slane %v910, 4
    %v3509 = vsel %vm1578, %v1298, %v3508
    %v3511 = vunpack.c.l.s4 1983009808
    %v3512 = vunpack.c.0.s8 %v3511
    %v3513 = vperm.slane %v3507, %v3512
    %v3515 = vunpack.c.l.s4 1983009808
    %v3516 = vunpack.c.0.s8 %v3515
    %v3517 = vperm.slane %v3509, %v3516
    %v3518 = vrot.slane %v1492, 4
    %v3519 = vsel %vm1578, %v3518, %v1104
    %v3520 = vrot.slane %v1104, 4
    %v3521 = vsel %vm1578, %v1492, %v3520
    %v3523 = vunpack.c.l.s4 1983009808
    %v3524 = vunpack.c.0.s8 %v3523
    %v3525 = vperm.slane %v3519, %v3524
    %v3527 = vunpack.c.l.s4 1983009808
    %v3528 = vunpack.c.0.s8 %v3527
    %v3529 = vperm.slane %v3521, %v3528
    %v3530 = vrot.slane %v3501, 4
    %v3531 = vsel %vm1578, %v3530, %v3489
    %v3532 = vrot.slane %v3489, 4
    %v3533 = vsel %vm1578, %v3501, %v3532
    %v3535 = vunpack.c.l.s4 1934713408
    %v3536 = vunpack.c.0.s8 %v3535
    %v3537 = vperm.slane %v3531, %v3536
    %v3539 = vunpack.c.l.s4 1934713408
    %v3540 = vunpack.c.0.s8 %v3539
    %v3541 = vperm.slane %v3533, %v3540
    %v3542 = vrot.slane %v3505, 4
    %v3543 = vsel %vm1578, %v3542, %v3493
    %v3544 = vrot.slane %v3493, 4
    %v3545 = vsel %vm1578, %v3505, %v3544
    %v3547 = vunpack.c.l.s4 1934713408
    %v3548 = vunpack.c.0.s8 %v3547
    %v3549 = vperm.slane %v3543, %v3548
    %v3551 = vunpack.c.l.s4 1934713408
    %v3552 = vunpack.c.0.s8 %v3551
    %v3553 = vperm.slane %v3545, %v3552
    %v3554 = vrot.slane %v3525, 4
    %v3555 = vsel %vm1578, %v3554, %v3513
    %v3556 = vrot.slane %v3513, 4
    %v3557 = vsel %vm1578, %v3525, %v3556
    %v3559 = vunpack.c.l.s4 1934713408
    %v3560 = vunpack.c.0.s8 %v3559
    %v3561 = vperm.slane %v3555, %v3560
    %v3563 = vunpack.c.l.s4 1934713408
    %v3564 = vunpack.c.0.s8 %v3563
    %v3565 = vperm.slane %v3557, %v3564
    %v3566 = vrot.slane %v3529, 4
    %v3567 = vsel %vm1578, %v3566, %v3517
    %v3568 = vrot.slane %v3517, 4
    %v3569 = vsel %vm1578, %v3529, %v3568
    %v3571 = vunpack.c.l.s4 1934713408
    %v3572 = vunpack.c.0.s8 %v3571
    %v3573 = vperm.slane %v3567, %v3572
    %v3575 = vunpack.c.l.s4 1934713408
    %v3576 = vunpack.c.0.s8 %v3575
    %v3577 = vperm.slane %v3569, %v3576
    %v3578 = vrot.slane %v3561, 4
    %v3579 = vsel %vm1578, %v3578, %v3537
    %v3580 = vrot.slane %v3537, 4
    %v3581 = vsel %vm1578, %v3561, %v3580
    %v3582 = vrot.slane %v3565, 4
    %v3583 = vsel %vm1578, %v3582, %v3541
    %v3584 = vrot.slane %v3541, 4
    %v3585 = vsel %vm1578, %v3565, %v3584
    %v3586 = vrot.slane %v3573, 4
    %v3587 = vsel %vm1578, %v3586, %v3549
    %v3588 = vrot.slane %v3549, 4
    %v3589 = vsel %vm1578, %v3573, %v3588
    %v3590 = vrot.slane %v3577, 4
    %v3591 = vsel %vm1578, %v3590, %v3553
    %v3592 = vrot.slane %v3553, 4
    %v3593 = vsel %vm1578, %v3577, %v3592
    %v3594 = vrot.slane %v528, 4
    %v3595 = vsel %vm1578, %v3594, %v140
    %v3596 = vrot.slane %v140, 4
    %v3597 = vsel %vm1578, %v528, %v3596
    %v3599 = vunpack.c.l.s4 1983009808
    %v3600 = vunpack.c.0.s8 %v3599
    %v3601 = vperm.slane %v3595, %v3600
    %v3603 = vunpack.c.l.s4 1983009808
    %v3604 = vunpack.c.0.s8 %v3603
    %v3605 = vperm.slane %v3597, %v3604
    %v3606 = vrot.slane %v722, 4
    %v3607 = vsel %vm1578, %v3606, %v334
    %v3608 = vrot.slane %v334, 4
    %v3609 = vsel %vm1578, %v722, %v3608
    %v3611 = vunpack.c.l.s4 1983009808
    %v3612 = vunpack.c.0.s8 %v3611
    %v3613 = vperm.slane %v3607, %v3612
    %v3615 = vunpack.c.l.s4 1983009808
    %v3616 = vunpack.c.0.s8 %v3615
    %v3617 = vperm.slane %v3609, %v3616
    %v3618 = vrot.slane %v1304, 4
    %v3619 = vsel %vm1578, %v3618, %v916
    %v3620 = vrot.slane %v916, 4
    %v3621 = vsel %vm1578, %v1304, %v3620
    %v3623 = vunpack.c.l.s4 1983009808
    %v3624 = vunpack.c.0.s8 %v3623
    %v3625 = vperm.slane %v3619, %v3624
    %v3627 = vunpack.c.l.s4 1983009808
    %v3628 = vunpack.c.0.s8 %v3627
    %v3629 = vperm.slane %v3621, %v3628
    %v3630 = vrot.slane %v1498, 4
    %v3631 = vsel %vm1578, %v3630, %v1110
    %v3632 = vrot.slane %v1110, 4
    %v3633 = vsel %vm1578, %v1498, %v3632
    %v3635 = vunpack.c.l.s4 1983009808
    %v3636 = vunpack.c.0.s8 %v3635
    %v3637 = vperm.slane %v3631, %v3636
    %v3639 = vunpack.c.l.s4 1983009808
    %v3640 = vunpack.c.0.s8 %v3639
    %v3641 = vperm.slane %v3633, %v3640
    %v3642 = vrot.slane %v3613, 4
    %v3643 = vsel %vm1578, %v3642, %v3601
    %v3644 = vrot.slane %v3601, 4
    %v3645 = vsel %vm1578, %v3613, %v3644
    %v3647 = vunpack.c.l.s4 1934713408
    %v3648 = vunpack.c.0.s8 %v3647
    %v3649 = vperm.slane %v3643, %v3648
    %v3651 = vunpack.c.l.s4 1934713408
    %v3652 = vunpack.c.0.s8 %v3651
    %v3653 = vperm.slane %v3645, %v3652
    %v3654 = vrot.slane %v3617, 4
    %v3655 = vsel %vm1578, %v3654, %v3605
    %v3656 = vrot.slane %v3605, 4
    %v3657 = vsel %vm1578, %v3617, %v3656
    %v3659 = vunpack.c.l.s4 1934713408
    %v3660 = vunpack.c.0.s8 %v3659
    %v3661 = vperm.slane %v3655, %v3660
    %v3663 = vunpack.c.l.s4 1934713408
    %v3664 = vunpack.c.0.s8 %v3663
    %v3665 = vperm.slane %v3657, %v3664
    %v3666 = vrot.slane %v3637, 4
    %v3667 = vsel %vm1578, %v3666, %v3625
    %v3668 = vrot.slane %v3625, 4
    %v3669 = vsel %vm1578, %v3637, %v3668
    %v3671 = vunpack.c.l.s4 1934713408
    %v3672 = vunpack.c.0.s8 %v3671
    %v3673 = vperm.slane %v3667, %v3672
    %v3675 = vunpack.c.l.s4 1934713408
    %v3676 = vunpack.c.0.s8 %v3675
    %v3677 = vperm.slane %v3669, %v3676
    %v3678 = vrot.slane %v3641, 4
    %v3679 = vsel %vm1578, %v3678, %v3629
    %v3680 = vrot.slane %v3629, 4
    %v3681 = vsel %vm1578, %v3641, %v3680
    %v3683 = vunpack.c.l.s4 1934713408
    %v3684 = vunpack.c.0.s8 %v3683
    %v3685 = vperm.slane %v3679, %v3684
    %v3687 = vunpack.c.l.s4 1934713408
    %v3688 = vunpack.c.0.s8 %v3687
    %v3689 = vperm.slane %v3681, %v3688
    %v3690 = vrot.slane %v3673, 4
    %v3691 = vsel %vm1578, %v3690, %v3649
    %v3692 = vrot.slane %v3649, 4
    %v3693 = vsel %vm1578, %v3673, %v3692
    %v3694 = vrot.slane %v3677, 4
    %v3695 = vsel %vm1578, %v3694, %v3653
    %v3696 = vrot.slane %v3653, 4
    %v3697 = vsel %vm1578, %v3677, %v3696
    %v3698 = vrot.slane %v3685, 4
    %v3699 = vsel %vm1578, %v3698, %v3661
    %v3700 = vrot.slane %v3661, 4
    %v3701 = vsel %vm1578, %v3685, %v3700
    %v3702 = vrot.slane %v3689, 4
    %v3703 = vsel %vm1578, %v3702, %v3665
    %v3704 = vrot.slane %v3665, 4
    %v3705 = vsel %vm1578, %v3689, %v3704
    %v3706 = vrot.slane %v534, 4
    %v3707 = vsel %vm1578, %v3706, %v146
    %v3708 = vrot.slane %v146, 4
    %v3709 = vsel %vm1578, %v534, %v3708
    %v3711 = vunpack.c.l.s4 1983009808
    %v3712 = vunpack.c.0.s8 %v3711
    %v3713 = vperm.slane %v3707, %v3712
    %v3715 = vunpack.c.l.s4 1983009808
    %v3716 = vunpack.c.0.s8 %v3715
    %v3717 = vperm.slane %v3709, %v3716
    %v3718 = vrot.slane %v728, 4
    %v3719 = vsel %vm1578, %v3718, %v340
    %v3720 = vrot.slane %v340, 4
    %v3721 = vsel %vm1578, %v728, %v3720
    %v3723 = vunpack.c.l.s4 1983009808
    %v3724 = vunpack.c.0.s8 %v3723
    %v3725 = vperm.slane %v3719, %v3724
    %v3727 = vunpack.c.l.s4 1983009808
    %v3728 = vunpack.c.0.s8 %v3727
    %v3729 = vperm.slane %v3721, %v3728
    %v3730 = vrot.slane %v1310, 4
    %v3731 = vsel %vm1578, %v3730, %v922
    %v3732 = vrot.slane %v922, 4
    %v3733 = vsel %vm1578, %v1310, %v3732
    %v3735 = vunpack.c.l.s4 1983009808
    %v3736 = vunpack.c.0.s8 %v3735
    %v3737 = vperm.slane %v3731, %v3736
    %v3739 = vunpack.c.l.s4 1983009808
    %v3740 = vunpack.c.0.s8 %v3739
    %v3741 = vperm.slane %v3733, %v3740
    %v3742 = vrot.slane %v1504, 4
    %v3743 = vsel %vm1578, %v3742, %v1116
    %v3744 = vrot.slane %v1116, 4
    %v3745 = vsel %vm1578, %v1504, %v3744
    %v3747 = vunpack.c.l.s4 1983009808
    %v3748 = vunpack.c.0.s8 %v3747
    %v3749 = vperm.slane %v3743, %v3748
    %v3751 = vunpack.c.l.s4 1983009808
    %v3752 = vunpack.c.0.s8 %v3751
    %v3753 = vperm.slane %v3745, %v3752
    %v3754 = vrot.slane %v3725, 4
    %v3755 = vsel %vm1578, %v3754, %v3713
    %v3756 = vrot.slane %v3713, 4
    %v3757 = vsel %vm1578, %v3725, %v3756
    %v3759 = vunpack.c.l.s4 1934713408
    %v3760 = vunpack.c.0.s8 %v3759
    %v3761 = vperm.slane %v3755, %v3760
    %v3763 = vunpack.c.l.s4 1934713408
    %v3764 = vunpack.c.0.s8 %v3763
    %v3765 = vperm.slane %v3757, %v3764
    %v3766 = vrot.slane %v3729, 4
    %v3767 = vsel %vm1578, %v3766, %v3717
    %v3768 = vrot.slane %v3717, 4
    %v3769 = vsel %vm1578, %v3729, %v3768
    %v3771 = vunpack.c.l.s4 1934713408
    %v3772 = vunpack.c.0.s8 %v3771
    %v3773 = vperm.slane %v3767, %v3772
    %v3775 = vunpack.c.l.s4 1934713408
    %v3776 = vunpack.c.0.s8 %v3775
    %v3777 = vperm.slane %v3769, %v3776
    %v3778 = vrot.slane %v3749, 4
    %v3779 = vsel %vm1578, %v3778, %v3737
    %v3780 = vrot.slane %v3737, 4
    %v3781 = vsel %vm1578, %v3749, %v3780
    %v3783 = vunpack.c.l.s4 1934713408
    %v3784 = vunpack.c.0.s8 %v3783
    %v3785 = vperm.slane %v3779, %v3784
    %v3787 = vunpack.c.l.s4 1934713408
    %v3788 = vunpack.c.0.s8 %v3787
    %v3789 = vperm.slane %v3781, %v3788
    %v3790 = vrot.slane %v3753, 4
    %v3791 = vsel %vm1578, %v3790, %v3741
    %v3792 = vrot.slane %v3741, 4
    %v3793 = vsel %vm1578, %v3753, %v3792
    %v3795 = vunpack.c.l.s4 1934713408
    %v3796 = vunpack.c.0.s8 %v3795
    %v3797 = vperm.slane %v3791, %v3796
    %v3799 = vunpack.c.l.s4 1934713408
    %v3800 = vunpack.c.0.s8 %v3799
    %v3801 = vperm.slane %v3793, %v3800
    %v3802 = vrot.slane %v3785, 4
    %v3803 = vsel %vm1578, %v3802, %v3761
    %v3804 = vrot.slane %v3761, 4
    %v3805 = vsel %vm1578, %v3785, %v3804
    %v3806 = vrot.slane %v3789, 4
    %v3807 = vsel %vm1578, %v3806, %v3765
    %v3808 = vrot.slane %v3765, 4
    %v3809 = vsel %vm1578, %v3789, %v3808
    %v3810 = vrot.slane %v3797, 4
    %v3811 = vsel %vm1578, %v3810, %v3773
    %v3812 = vrot.slane %v3773, 4
    %v3813 = vsel %vm1578, %v3797, %v3812
    %v3814 = vrot.slane %v3801, 4
    %v3815 = vsel %vm1578, %v3814, %v3777
    %v3816 = vrot.slane %v3777, 4
    %v3817 = vsel %vm1578, %v3801, %v3816
    %v3818 = vrot.slane %v540, 4
    %v3819 = vsel %vm1578, %v3818, %v152
    %v3820 = vrot.slane %v152, 4
    %v3821 = vsel %vm1578, %v540, %v3820
    %v3823 = vunpack.c.l.s4 1983009808
    %v3824 = vunpack.c.0.s8 %v3823
    %v3825 = vperm.slane %v3819, %v3824
    %v3827 = vunpack.c.l.s4 1983009808
    %v3828 = vunpack.c.0.s8 %v3827
    %v3829 = vperm.slane %v3821, %v3828
    %v3830 = vrot.slane %v734, 4
    %v3831 = vsel %vm1578, %v3830, %v346
    %v3832 = vrot.slane %v346, 4
    %v3833 = vsel %vm1578, %v734, %v3832
    %v3835 = vunpack.c.l.s4 1983009808
    %v3836 = vunpack.c.0.s8 %v3835
    %v3837 = vperm.slane %v3831, %v3836
    %v3839 = vunpack.c.l.s4 1983009808
    %v3840 = vunpack.c.0.s8 %v3839
    %v3841 = vperm.slane %v3833, %v3840
    %v3842 = vrot.slane %v1316, 4
    %v3843 = vsel %vm1578, %v3842, %v928
    %v3844 = vrot.slane %v928, 4
    %v3845 = vsel %vm1578, %v1316, %v3844
    %v3847 = vunpack.c.l.s4 1983009808
    %v3848 = vunpack.c.0.s8 %v3847
    %v3849 = vperm.slane %v3843, %v3848
    %v3851 = vunpack.c.l.s4 1983009808
    %v3852 = vunpack.c.0.s8 %v3851
    %v3853 = vperm.slane %v3845, %v3852
    %v3854 = vrot.slane %v1510, 4
    %v3855 = vsel %vm1578, %v3854, %v1122
    %v3856 = vrot.slane %v1122, 4
    %v3857 = vsel %vm1578, %v1510, %v3856
    %v3859 = vunpack.c.l.s4 1983009808
    %v3860 = vunpack.c.0.s8 %v3859
    %v3861 = vperm.slane %v3855, %v3860
    %v3863 = vunpack.c.l.s4 1983009808
    %v3864 = vunpack.c.0.s8 %v3863
    %v3865 = vperm.slane %v3857, %v3864
    %v3866 = vrot.slane %v3837, 4
    %v3867 = vsel %vm1578, %v3866, %v3825
    %v3868 = vrot.slane %v3825, 4
    %v3869 = vsel %vm1578, %v3837, %v3868
    %v3871 = vunpack.c.l.s4 1934713408
    %v3872 = vunpack.c.0.s8 %v3871
    %v3873 = vperm.slane %v3867, %v3872
    %v3875 = vunpack.c.l.s4 1934713408
    %v3876 = vunpack.c.0.s8 %v3875
    %v3877 = vperm.slane %v3869, %v3876
    %v3878 = vrot.slane %v3841, 4
    %v3879 = vsel %vm1578, %v3878, %v3829
    %v3880 = vrot.slane %v3829, 4
    %v3881 = vsel %vm1578, %v3841, %v3880
    %v3883 = vunpack.c.l.s4 1934713408
    %v3884 = vunpack.c.0.s8 %v3883
    %v3885 = vperm.slane %v3879, %v3884
    %v3887 = vunpack.c.l.s4 1934713408
    %v3888 = vunpack.c.0.s8 %v3887
    %v3889 = vperm.slane %v3881, %v3888
    %v3890 = vrot.slane %v3861, 4
    %v3891 = vsel %vm1578, %v3890, %v3849
    %v3892 = vrot.slane %v3849, 4
    %v3893 = vsel %vm1578, %v3861, %v3892
    %v3895 = vunpack.c.l.s4 1934713408
    %v3896 = vunpack.c.0.s8 %v3895
    %v3897 = vperm.slane %v3891, %v3896
    %v3899 = vunpack.c.l.s4 1934713408
    %v3900 = vunpack.c.0.s8 %v3899
    %v3901 = vperm.slane %v3893, %v3900
    %v3902 = vrot.slane %v3865, 4
    %v3903 = vsel %vm1578, %v3902, %v3853
    %v3904 = vrot.slane %v3853, 4
    %v3905 = vsel %vm1578, %v3865, %v3904
    %v3907 = vunpack.c.l.s4 1934713408
    %v3908 = vunpack.c.0.s8 %v3907
    %v3909 = vperm.slane %v3903, %v3908
    %v3911 = vunpack.c.l.s4 1934713408
    %v3912 = vunpack.c.0.s8 %v3911
    %v3913 = vperm.slane %v3905, %v3912
    %v3914 = vrot.slane %v3897, 4
    %v3915 = vsel %vm1578, %v3914, %v3873
    %v3916 = vrot.slane %v3873, 4
    %v3917 = vsel %vm1578, %v3897, %v3916
    %v3918 = vrot.slane %v3901, 4
    %v3919 = vsel %vm1578, %v3918, %v3877
    %v3920 = vrot.slane %v3877, 4
    %v3921 = vsel %vm1578, %v3901, %v3920
    %v3922 = vrot.slane %v3909, 4
    %v3923 = vsel %vm1578, %v3922, %v3885
    %v3924 = vrot.slane %v3885, 4
    %v3925 = vsel %vm1578, %v3909, %v3924
    %v3926 = vrot.slane %v3913, 4
    %v3927 = vsel %vm1578, %v3926, %v3889
    %v3928 = vrot.slane %v3889, 4
    %v3929 = vsel %vm1578, %v3913, %v3928
    %v3930 = vrot.slane %v546, 4
    %v3931 = vsel %vm1578, %v3930, %v158
    %v3932 = vrot.slane %v158, 4
    %v3933 = vsel %vm1578, %v546, %v3932
    %v3935 = vunpack.c.l.s4 1983009808
    %v3936 = vunpack.c.0.s8 %v3935
    %v3937 = vperm.slane %v3931, %v3936
    %v3939 = vunpack.c.l.s4 1983009808
    %v3940 = vunpack.c.0.s8 %v3939
    %v3941 = vperm.slane %v3933, %v3940
    %v3942 = vrot.slane %v740, 4
    %v3943 = vsel %vm1578, %v3942, %v352
    %v3944 = vrot.slane %v352, 4
    %v3945 = vsel %vm1578, %v740, %v3944
    %v3947 = vunpack.c.l.s4 1983009808
    %v3948 = vunpack.c.0.s8 %v3947
    %v3949 = vperm.slane %v3943, %v3948
    %v3951 = vunpack.c.l.s4 1983009808
    %v3952 = vunpack.c.0.s8 %v3951
    %v3953 = vperm.slane %v3945, %v3952
    %v3954 = vrot.slane %v1322, 4
    %v3955 = vsel %vm1578, %v3954, %v934
    %v3956 = vrot.slane %v934, 4
    %v3957 = vsel %vm1578, %v1322, %v3956
    %v3959 = vunpack.c.l.s4 1983009808
    %v3960 = vunpack.c.0.s8 %v3959
    %v3961 = vperm.slane %v3955, %v3960
    %v3963 = vunpack.c.l.s4 1983009808
    %v3964 = vunpack.c.0.s8 %v3963
    %v3965 = vperm.slane %v3957, %v3964
    %v3966 = vrot.slane %v1516, 4
    %v3967 = vsel %vm1578, %v3966, %v1128
    %v3968 = vrot.slane %v1128, 4
    %v3969 = vsel %vm1578, %v1516, %v3968
    %v3971 = vunpack.c.l.s4 1983009808
    %v3972 = vunpack.c.0.s8 %v3971
    %v3973 = vperm.slane %v3967, %v3972
    %v3975 = vunpack.c.l.s4 1983009808
    %v3976 = vunpack.c.0.s8 %v3975
    %v3977 = vperm.slane %v3969, %v3976
    %v3978 = vrot.slane %v3949, 4
    %v3979 = vsel %vm1578, %v3978, %v3937
    %v3980 = vrot.slane %v3937, 4
    %v3981 = vsel %vm1578, %v3949, %v3980
    %v3983 = vunpack.c.l.s4 1934713408
    %v3984 = vunpack.c.0.s8 %v3983
    %v3985 = vperm.slane %v3979, %v3984
    %v3987 = vunpack.c.l.s4 1934713408
    %v3988 = vunpack.c.0.s8 %v3987
    %v3989 = vperm.slane %v3981, %v3988
    %v3990 = vrot.slane %v3953, 4
    %v3991 = vsel %vm1578, %v3990, %v3941
    %v3992 = vrot.slane %v3941, 4
    %v3993 = vsel %vm1578, %v3953, %v3992
    %v3995 = vunpack.c.l.s4 1934713408
    %v3996 = vunpack.c.0.s8 %v3995
    %v3997 = vperm.slane %v3991, %v3996
    %v3999 = vunpack.c.l.s4 1934713408
    %v4000 = vunpack.c.0.s8 %v3999
    %v4001 = vperm.slane %v3993, %v4000
    %v4002 = vrot.slane %v3973, 4
    %v4003 = vsel %vm1578, %v4002, %v3961
    %v4004 = vrot.slane %v3961, 4
    %v4005 = vsel %vm1578, %v3973, %v4004
    %v4007 = vunpack.c.l.s4 1934713408
    %v4008 = vunpack.c.0.s8 %v4007
    %v4009 = vperm.slane %v4003, %v4008
    %v4011 = vunpack.c.l.s4 1934713408
    %v4012 = vunpack.c.0.s8 %v4011
    %v4013 = vperm.slane %v4005, %v4012
    %v4014 = vrot.slane %v3977, 4
    %v4015 = vsel %vm1578, %v4014, %v3965
    %v4016 = vrot.slane %v3965, 4
    %v4017 = vsel %vm1578, %v3977, %v4016
    %v4019 = vunpack.c.l.s4 1934713408
    %v4020 = vunpack.c.0.s8 %v4019
    %v4021 = vperm.slane %v4015, %v4020
    %v4023 = vunpack.c.l.s4 1934713408
    %v4024 = vunpack.c.0.s8 %v4023
    %v4025 = vperm.slane %v4017, %v4024
    %v4026 = vrot.slane %v4009, 4
    %v4027 = vsel %vm1578, %v4026, %v3985
    %v4028 = vrot.slane %v3985, 4
    %v4029 = vsel %vm1578, %v4009, %v4028
    %v4030 = vrot.slane %v4013, 4
    %v4031 = vsel %vm1578, %v4030, %v3989
    %v4032 = vrot.slane %v3989, 4
    %v4033 = vsel %vm1578, %v4013, %v4032
    %v4034 = vrot.slane %v4021, 4
    %v4035 = vsel %vm1578, %v4034, %v3997
    %v4036 = vrot.slane %v3997, 4
    %v4037 = vsel %vm1578, %v4021, %v4036
    %v4038 = vrot.slane %v4025, 4
    %v4039 = vsel %vm1578, %v4038, %v4001
    %v4040 = vrot.slane %v4001, 4
    %v4041 = vsel %vm1578, %v4025, %v4040
    %v4042 = vrot.slane %v552, 4
    %v4043 = vsel %vm1578, %v4042, %v164
    %v4044 = vrot.slane %v164, 4
    %v4045 = vsel %vm1578, %v552, %v4044
    %v4047 = vunpack.c.l.s4 1983009808
    %v4048 = vunpack.c.0.s8 %v4047
    %v4049 = vperm.slane %v4043, %v4048
    %v4051 = vunpack.c.l.s4 1983009808
    %v4052 = vunpack.c.0.s8 %v4051
    %v4053 = vperm.slane %v4045, %v4052
    %v4054 = vrot.slane %v746, 4
    %v4055 = vsel %vm1578, %v4054, %v358
    %v4056 = vrot.slane %v358, 4
    %v4057 = vsel %vm1578, %v746, %v4056
    %v4059 = vunpack.c.l.s4 1983009808
    %v4060 = vunpack.c.0.s8 %v4059
    %v4061 = vperm.slane %v4055, %v4060
    %v4063 = vunpack.c.l.s4 1983009808
    %v4064 = vunpack.c.0.s8 %v4063
    %v4065 = vperm.slane %v4057, %v4064
    %v4066 = vrot.slane %v1328, 4
    %v4067 = vsel %vm1578, %v4066, %v940
    %v4068 = vrot.slane %v940, 4
    %v4069 = vsel %vm1578, %v1328, %v4068
    %v4071 = vunpack.c.l.s4 1983009808
    %v4072 = vunpack.c.0.s8 %v4071
    %v4073 = vperm.slane %v4067, %v4072
    %v4075 = vunpack.c.l.s4 1983009808
    %v4076 = vunpack.c.0.s8 %v4075
    %v4077 = vperm.slane %v4069, %v4076
    %v4078 = vrot.slane %v1522, 4
    %v4079 = vsel %vm1578, %v4078, %v1134
    %v4080 = vrot.slane %v1134, 4
    %v4081 = vsel %vm1578, %v1522, %v4080
    %v4083 = vunpack.c.l.s4 1983009808
    %v4084 = vunpack.c.0.s8 %v4083
    %v4085 = vperm.slane %v4079, %v4084
    %v4087 = vunpack.c.l.s4 1983009808
    %v4088 = vunpack.c.0.s8 %v4087
    %v4089 = vperm.slane %v4081, %v4088
    %v4090 = vrot.slane %v4061, 4
    %v4091 = vsel %vm1578, %v4090, %v4049
    %v4092 = vrot.slane %v4049, 4
    %v4093 = vsel %vm1578, %v4061, %v4092
    %v4095 = vunpack.c.l.s4 1934713408
    %v4096 = vunpack.c.0.s8 %v4095
    %v4097 = vperm.slane %v4091, %v4096
    %v4099 = vunpack.c.l.s4 1934713408
    %v4100 = vunpack.c.0.s8 %v4099
    %v4101 = vperm.slane %v4093, %v4100
    %v4102 = vrot.slane %v4065, 4
    %v4103 = vsel %vm1578, %v4102, %v4053
    %v4104 = vrot.slane %v4053, 4
    %v4105 = vsel %vm1578, %v4065, %v4104
    %v4107 = vunpack.c.l.s4 1934713408
    %v4108 = vunpack.c.0.s8 %v4107
    %v4109 = vperm.slane %v4103, %v4108
    %v4111 = vunpack.c.l.s4 1934713408
    %v4112 = vunpack.c.0.s8 %v4111
    %v4113 = vperm.slane %v4105, %v4112
    %v4114 = vrot.slane %v4085, 4
    %v4115 = vsel %vm1578, %v4114, %v4073
    %v4116 = vrot.slane %v4073, 4
    %v4117 = vsel %vm1578, %v4085, %v4116
    %v4119 = vunpack.c.l.s4 1934713408
    %v4120 = vunpack.c.0.s8 %v4119
    %v4121 = vperm.slane %v4115, %v4120
    %v4123 = vunpack.c.l.s4 1934713408
    %v4124 = vunpack.c.0.s8 %v4123
    %v4125 = vperm.slane %v4117, %v4124
    %v4126 = vrot.slane %v4089, 4
    %v4127 = vsel %vm1578, %v4126, %v4077
    %v4128 = vrot.slane %v4077, 4
    %v4129 = vsel %vm1578, %v4089, %v4128
    %v4131 = vunpack.c.l.s4 1934713408
    %v4132 = vunpack.c.0.s8 %v4131
    %v4133 = vperm.slane %v4127, %v4132
    %v4135 = vunpack.c.l.s4 1934713408
    %v4136 = vunpack.c.0.s8 %v4135
    %v4137 = vperm.slane %v4129, %v4136
    %v4138 = vrot.slane %v4121, 4
    %v4139 = vsel %vm1578, %v4138, %v4097
    %v4140 = vrot.slane %v4097, 4
    %v4141 = vsel %vm1578, %v4121, %v4140
    %v4142 = vrot.slane %v4125, 4
    %v4143 = vsel %vm1578, %v4142, %v4101
    %v4144 = vrot.slane %v4101, 4
    %v4145 = vsel %vm1578, %v4125, %v4144
    %v4146 = vrot.slane %v4133, 4
    %v4147 = vsel %vm1578, %v4146, %v4109
    %v4148 = vrot.slane %v4109, 4
    %v4149 = vsel %vm1578, %v4133, %v4148
    %v4150 = vrot.slane %v4137, 4
    %v4151 = vsel %vm1578, %v4150, %v4113
    %v4152 = vrot.slane %v4113, 4
    %v4153 = vsel %vm1578, %v4137, %v4152
    %v4154 = vrot.slane %v558, 4
    %v4155 = vsel %vm1578, %v4154, %v170
    %v4156 = vrot.slane %v170, 4
    %v4157 = vsel %vm1578, %v558, %v4156
    %v4159 = vunpack.c.l.s4 1983009808
    %v4160 = vunpack.c.0.s8 %v4159
    %v4161 = vperm.slane %v4155, %v4160
    %v4163 = vunpack.c.l.s4 1983009808
    %v4164 = vunpack.c.0.s8 %v4163
    %v4165 = vperm.slane %v4157, %v4164
    %v4166 = vrot.slane %v752, 4
    %v4167 = vsel %vm1578, %v4166, %v364
    %v4168 = vrot.slane %v364, 4
    %v4169 = vsel %vm1578, %v752, %v4168
    %v4171 = vunpack.c.l.s4 1983009808
    %v4172 = vunpack.c.0.s8 %v4171
    %v4173 = vperm.slane %v4167, %v4172
    %v4175 = vunpack.c.l.s4 1983009808
    %v4176 = vunpack.c.0.s8 %v4175
    %v4177 = vperm.slane %v4169, %v4176
    %v4178 = vrot.slane %v1334, 4
    %v4179 = vsel %vm1578, %v4178, %v946
    %v4180 = vrot.slane %v946, 4
    %v4181 = vsel %vm1578, %v1334, %v4180
    %v4183 = vunpack.c.l.s4 1983009808
    %v4184 = vunpack.c.0.s8 %v4183
    %v4185 = vperm.slane %v4179, %v4184
    %v4187 = vunpack.c.l.s4 1983009808
    %v4188 = vunpack.c.0.s8 %v4187
    %v4189 = vperm.slane %v4181, %v4188
    %v4190 = vrot.slane %v1528, 4
    %v4191 = vsel %vm1578, %v4190, %v1140
    %v4192 = vrot.slane %v1140, 4
    %v4193 = vsel %vm1578, %v1528, %v4192
    %v4195 = vunpack.c.l.s4 1983009808
    %v4196 = vunpack.c.0.s8 %v4195
    %v4197 = vperm.slane %v4191, %v4196
    %v4199 = vunpack.c.l.s4 1983009808
    %v4200 = vunpack.c.0.s8 %v4199
    %v4201 = vperm.slane %v4193, %v4200
    %v4202 = vrot.slane %v4173, 4
    %v4203 = vsel %vm1578, %v4202, %v4161
    %v4204 = vrot.slane %v4161, 4
    %v4205 = vsel %vm1578, %v4173, %v4204
    %v4207 = vunpack.c.l.s4 1934713408
    %v4208 = vunpack.c.0.s8 %v4207
    %v4209 = vperm.slane %v4203, %v4208
    %v4211 = vunpack.c.l.s4 1934713408
    %v4212 = vunpack.c.0.s8 %v4211
    %v4213 = vperm.slane %v4205, %v4212
    %v4214 = vrot.slane %v4177, 4
    %v4215 = vsel %vm1578, %v4214, %v4165
    %v4216 = vrot.slane %v4165, 4
    %v4217 = vsel %vm1578, %v4177, %v4216
    %v4219 = vunpack.c.l.s4 1934713408
    %v4220 = vunpack.c.0.s8 %v4219
    %v4221 = vperm.slane %v4215, %v4220
    %v4223 = vunpack.c.l.s4 1934713408
    %v4224 = vunpack.c.0.s8 %v4223
    %v4225 = vperm.slane %v4217, %v4224
    %v4226 = vrot.slane %v4197, 4
    %v4227 = vsel %vm1578, %v4226, %v4185
    %v4228 = vrot.slane %v4185, 4
    %v4229 = vsel %vm1578, %v4197, %v4228
    %v4231 = vunpack.c.l.s4 1934713408
    %v4232 = vunpack.c.0.s8 %v4231
    %v4233 = vperm.slane %v4227, %v4232
    %v4235 = vunpack.c.l.s4 1934713408
    %v4236 = vunpack.c.0.s8 %v4235
    %v4237 = vperm.slane %v4229, %v4236
    %v4238 = vrot.slane %v4201, 4
    %v4239 = vsel %vm1578, %v4238, %v4189
    %v4240 = vrot.slane %v4189, 4
    %v4241 = vsel %vm1578, %v4201, %v4240
    %v4243 = vunpack.c.l.s4 1934713408
    %v4244 = vunpack.c.0.s8 %v4243
    %v4245 = vperm.slane %v4239, %v4244
    %v4247 = vunpack.c.l.s4 1934713408
    %v4248 = vunpack.c.0.s8 %v4247
    %v4249 = vperm.slane %v4241, %v4248
    %v4250 = vrot.slane %v4233, 4
    %v4251 = vsel %vm1578, %v4250, %v4209
    %v4252 = vrot.slane %v4209, 4
    %v4253 = vsel %vm1578, %v4233, %v4252
    %v4254 = vrot.slane %v4237, 4
    %v4255 = vsel %vm1578, %v4254, %v4213
    %v4256 = vrot.slane %v4213, 4
    %v4257 = vsel %vm1578, %v4237, %v4256
    %v4258 = vrot.slane %v4245, 4
    %v4259 = vsel %vm1578, %v4258, %v4221
    %v4260 = vrot.slane %v4221, 4
    %v4261 = vsel %vm1578, %v4245, %v4260
    %v4262 = vrot.slane %v4249, 4
    %v4263 = vsel %vm1578, %v4262, %v4225
    %v4264 = vrot.slane %v4225, 4
    %v4265 = vsel %vm1578, %v4249, %v4264
    %v4266 = vrot.slane %v564, 4
    %v4267 = vsel %vm1578, %v4266, %v176
    %v4268 = vrot.slane %v176, 4
    %v4269 = vsel %vm1578, %v564, %v4268
    %v4271 = vunpack.c.l.s4 1983009808
    %v4272 = vunpack.c.0.s8 %v4271
    %v4273 = vperm.slane %v4267, %v4272
    %v4275 = vunpack.c.l.s4 1983009808
    %v4276 = vunpack.c.0.s8 %v4275
    %v4277 = vperm.slane %v4269, %v4276
    %v4278 = vrot.slane %v758, 4
    %v4279 = vsel %vm1578, %v4278, %v370
    %v4280 = vrot.slane %v370, 4
    %v4281 = vsel %vm1578, %v758, %v4280
    %v4283 = vunpack.c.l.s4 1983009808
    %v4284 = vunpack.c.0.s8 %v4283
    %v4285 = vperm.slane %v4279, %v4284
    %v4287 = vunpack.c.l.s4 1983009808
    %v4288 = vunpack.c.0.s8 %v4287
    %v4289 = vperm.slane %v4281, %v4288
    %v4290 = vrot.slane %v1340, 4
    %v4291 = vsel %vm1578, %v4290, %v952
    %v4292 = vrot.slane %v952, 4
    %v4293 = vsel %vm1578, %v1340, %v4292
    %v4295 = vunpack.c.l.s4 1983009808
    %v4296 = vunpack.c.0.s8 %v4295
    %v4297 = vperm.slane %v4291, %v4296
    %v4299 = vunpack.c.l.s4 1983009808
    %v4300 = vunpack.c.0.s8 %v4299
    %v4301 = vperm.slane %v4293, %v4300
    %v4302 = vrot.slane %v1534, 4
    %v4303 = vsel %vm1578, %v4302, %v1146
    %v4304 = vrot.slane %v1146, 4
    %v4305 = vsel %vm1578, %v1534, %v4304
    %v4307 = vunpack.c.l.s4 1983009808
    %v4308 = vunpack.c.0.s8 %v4307
    %v4309 = vperm.slane %v4303, %v4308
    %v4311 = vunpack.c.l.s4 1983009808
    %v4312 = vunpack.c.0.s8 %v4311
    %v4313 = vperm.slane %v4305, %v4312
    %v4314 = vrot.slane %v4285, 4
    %v4315 = vsel %vm1578, %v4314, %v4273
    %v4316 = vrot.slane %v4273, 4
    %v4317 = vsel %vm1578, %v4285, %v4316
    %v4319 = vunpack.c.l.s4 1934713408
    %v4320 = vunpack.c.0.s8 %v4319
    %v4321 = vperm.slane %v4315, %v4320
    %v4323 = vunpack.c.l.s4 1934713408
    %v4324 = vunpack.c.0.s8 %v4323
    %v4325 = vperm.slane %v4317, %v4324
    %v4326 = vrot.slane %v4289, 4
    %v4327 = vsel %vm1578, %v4326, %v4277
    %v4328 = vrot.slane %v4277, 4
    %v4329 = vsel %vm1578, %v4289, %v4328
    %v4331 = vunpack.c.l.s4 1934713408
    %v4332 = vunpack.c.0.s8 %v4331
    %v4333 = vperm.slane %v4327, %v4332
    %v4335 = vunpack.c.l.s4 1934713408
    %v4336 = vunpack.c.0.s8 %v4335
    %v4337 = vperm.slane %v4329, %v4336
    %v4338 = vrot.slane %v4309, 4
    %v4339 = vsel %vm1578, %v4338, %v4297
    %v4340 = vrot.slane %v4297, 4
    %v4341 = vsel %vm1578, %v4309, %v4340
    %v4343 = vunpack.c.l.s4 1934713408
    %v4344 = vunpack.c.0.s8 %v4343
    %v4345 = vperm.slane %v4339, %v4344
    %v4347 = vunpack.c.l.s4 1934713408
    %v4348 = vunpack.c.0.s8 %v4347
    %v4349 = vperm.slane %v4341, %v4348
    %v4350 = vrot.slane %v4313, 4
    %v4351 = vsel %vm1578, %v4350, %v4301
    %v4352 = vrot.slane %v4301, 4
    %v4353 = vsel %vm1578, %v4313, %v4352
    %v4355 = vunpack.c.l.s4 1934713408
    %v4356 = vunpack.c.0.s8 %v4355
    %v4357 = vperm.slane %v4351, %v4356
    %v4359 = vunpack.c.l.s4 1934713408
    %v4360 = vunpack.c.0.s8 %v4359
    %v4361 = vperm.slane %v4353, %v4360
    %v4362 = vrot.slane %v4345, 4
    %v4363 = vsel %vm1578, %v4362, %v4321
    %v4364 = vrot.slane %v4321, 4
    %v4365 = vsel %vm1578, %v4345, %v4364
    %v4366 = vrot.slane %v4349, 4
    %v4367 = vsel %vm1578, %v4366, %v4325
    %v4368 = vrot.slane %v4325, 4
    %v4369 = vsel %vm1578, %v4349, %v4368
    %v4370 = vrot.slane %v4357, 4
    %v4371 = vsel %vm1578, %v4370, %v4333
    %v4372 = vrot.slane %v4333, 4
    %v4373 = vsel %vm1578, %v4357, %v4372
    %v4374 = vrot.slane %v4361, 4
    %v4375 = vsel %vm1578, %v4374, %v4337
    %v4376 = vrot.slane %v4337, 4
    %v4377 = vsel %vm1578, %v4361, %v4376
    %v4378 = vrot.slane %v570, 4
    %v4379 = vsel %vm1578, %v4378, %v182
    %v4380 = vrot.slane %v182, 4
    %v4381 = vsel %vm1578, %v570, %v4380
    %v4383 = vunpack.c.l.s4 1983009808
    %v4384 = vunpack.c.0.s8 %v4383
    %v4385 = vperm.slane %v4379, %v4384
    %v4387 = vunpack.c.l.s4 1983009808
    %v4388 = vunpack.c.0.s8 %v4387
    %v4389 = vperm.slane %v4381, %v4388
    %v4390 = vrot.slane %v764, 4
    %v4391 = vsel %vm1578, %v4390, %v376
    %v4392 = vrot.slane %v376, 4
    %v4393 = vsel %vm1578, %v764, %v4392
    %v4395 = vunpack.c.l.s4 1983009808
    %v4396 = vunpack.c.0.s8 %v4395
    %v4397 = vperm.slane %v4391, %v4396
    %v4399 = vunpack.c.l.s4 1983009808
    %v4400 = vunpack.c.0.s8 %v4399
    %v4401 = vperm.slane %v4393, %v4400
    %v4402 = vrot.slane %v1346, 4
    %v4403 = vsel %vm1578, %v4402, %v958
    %v4404 = vrot.slane %v958, 4
    %v4405 = vsel %vm1578, %v1346, %v4404
    %v4407 = vunpack.c.l.s4 1983009808
    %v4408 = vunpack.c.0.s8 %v4407
    %v4409 = vperm.slane %v4403, %v4408
    %v4411 = vunpack.c.l.s4 1983009808
    %v4412 = vunpack.c.0.s8 %v4411
    %v4413 = vperm.slane %v4405, %v4412
    %v4414 = vrot.slane %v1540, 4
    %v4415 = vsel %vm1578, %v4414, %v1152
    %v4416 = vrot.slane %v1152, 4
    %v4417 = vsel %vm1578, %v1540, %v4416
    %v4419 = vunpack.c.l.s4 1983009808
    %v4420 = vunpack.c.0.s8 %v4419
    %v4421 = vperm.slane %v4415, %v4420
    %v4423 = vunpack.c.l.s4 1983009808
    %v4424 = vunpack.c.0.s8 %v4423
    %v4425 = vperm.slane %v4417, %v4424
    %v4426 = vrot.slane %v4397, 4
    %v4427 = vsel %vm1578, %v4426, %v4385
    %v4428 = vrot.slane %v4385, 4
    %v4429 = vsel %vm1578, %v4397, %v4428
    %v4431 = vunpack.c.l.s4 1934713408
    %v4432 = vunpack.c.0.s8 %v4431
    %v4433 = vperm.slane %v4427, %v4432
    %v4435 = vunpack.c.l.s4 1934713408
    %v4436 = vunpack.c.0.s8 %v4435
    %v4437 = vperm.slane %v4429, %v4436
    %v4438 = vrot.slane %v4401, 4
    %v4439 = vsel %vm1578, %v4438, %v4389
    %v4440 = vrot.slane %v4389, 4
    %v4441 = vsel %vm1578, %v4401, %v4440
    %v4443 = vunpack.c.l.s4 1934713408
    %v4444 = vunpack.c.0.s8 %v4443
    %v4445 = vperm.slane %v4439, %v4444
    %v4447 = vunpack.c.l.s4 1934713408
    %v4448 = vunpack.c.0.s8 %v4447
    %v4449 = vperm.slane %v4441, %v4448
    %v4450 = vrot.slane %v4421, 4
    %v4451 = vsel %vm1578, %v4450, %v4409
    %v4452 = vrot.slane %v4409, 4
    %v4453 = vsel %vm1578, %v4421, %v4452
    %v4455 = vunpack.c.l.s4 1934713408
    %v4456 = vunpack.c.0.s8 %v4455
    %v4457 = vperm.slane %v4451, %v4456
    %v4459 = vunpack.c.l.s4 1934713408
    %v4460 = vunpack.c.0.s8 %v4459
    %v4461 = vperm.slane %v4453, %v4460
    %v4462 = vrot.slane %v4425, 4
    %v4463 = vsel %vm1578, %v4462, %v4413
    %v4464 = vrot.slane %v4413, 4
    %v4465 = vsel %vm1578, %v4425, %v4464
    %v4467 = vunpack.c.l.s4 1934713408
    %v4468 = vunpack.c.0.s8 %v4467
    %v4469 = vperm.slane %v4463, %v4468
    %v4471 = vunpack.c.l.s4 1934713408
    %v4472 = vunpack.c.0.s8 %v4471
    %v4473 = vperm.slane %v4465, %v4472
    %v4474 = vrot.slane %v4457, 4
    %v4475 = vsel %vm1578, %v4474, %v4433
    %v4476 = vrot.slane %v4433, 4
    %v4477 = vsel %vm1578, %v4457, %v4476
    %v4478 = vrot.slane %v4461, 4
    %v4479 = vsel %vm1578, %v4478, %v4437
    %v4480 = vrot.slane %v4437, 4
    %v4481 = vsel %vm1578, %v4461, %v4480
    %v4482 = vrot.slane %v4469, 4
    %v4483 = vsel %vm1578, %v4482, %v4445
    %v4484 = vrot.slane %v4445, 4
    %v4485 = vsel %vm1578, %v4469, %v4484
    %v4486 = vrot.slane %v4473, 4
    %v4487 = vsel %vm1578, %v4486, %v4449
    %v4488 = vrot.slane %v4449, 4
    %v4489 = vsel %vm1578, %v4473, %v4488
    %v4490 = vrot.slane %v576, 4
    %v4491 = vsel %vm1578, %v4490, %v188
    %v4492 = vrot.slane %v188, 4
    %v4493 = vsel %vm1578, %v576, %v4492
    %v4495 = vunpack.c.l.s4 1983009808
    %v4496 = vunpack.c.0.s8 %v4495
    %v4497 = vperm.slane %v4491, %v4496
    %v4499 = vunpack.c.l.s4 1983009808
    %v4500 = vunpack.c.0.s8 %v4499
    %v4501 = vperm.slane %v4493, %v4500
    %v4502 = vrot.slane %v770, 4
    %v4503 = vsel %vm1578, %v4502, %v382
    %v4504 = vrot.slane %v382, 4
    %v4505 = vsel %vm1578, %v770, %v4504
    %v4507 = vunpack.c.l.s4 1983009808
    %v4508 = vunpack.c.0.s8 %v4507
    %v4509 = vperm.slane %v4503, %v4508
    %v4511 = vunpack.c.l.s4 1983009808
    %v4512 = vunpack.c.0.s8 %v4511
    %v4513 = vperm.slane %v4505, %v4512
    %v4514 = vrot.slane %v1352, 4
    %v4515 = vsel %vm1578, %v4514, %v964
    %v4516 = vrot.slane %v964, 4
    %v4517 = vsel %vm1578, %v1352, %v4516
    %v4519 = vunpack.c.l.s4 1983009808
    %v4520 = vunpack.c.0.s8 %v4519
    %v4521 = vperm.slane %v4515, %v4520
    %v4523 = vunpack.c.l.s4 1983009808
    %v4524 = vunpack.c.0.s8 %v4523
    %v4525 = vperm.slane %v4517, %v4524
    %v4526 = vrot.slane %v1546, 4
    %v4527 = vsel %vm1578, %v4526, %v1158
    %v4528 = vrot.slane %v1158, 4
    %v4529 = vsel %vm1578, %v1546, %v4528
    %v4531 = vunpack.c.l.s4 1983009808
    %v4532 = vunpack.c.0.s8 %v4531
    %v4533 = vperm.slane %v4527, %v4532
    %v4535 = vunpack.c.l.s4 1983009808
    %v4536 = vunpack.c.0.s8 %v4535
    %v4537 = vperm.slane %v4529, %v4536
    %v4538 = vrot.slane %v4509, 4
    %v4539 = vsel %vm1578, %v4538, %v4497
    %v4540 = vrot.slane %v4497, 4
    %v4541 = vsel %vm1578, %v4509, %v4540
    %v4543 = vunpack.c.l.s4 1934713408
    %v4544 = vunpack.c.0.s8 %v4543
    %v4545 = vperm.slane %v4539, %v4544
    %v4547 = vunpack.c.l.s4 1934713408
    %v4548 = vunpack.c.0.s8 %v4547
    %v4549 = vperm.slane %v4541, %v4548
    %v4550 = vrot.slane %v4513, 4
    %v4551 = vsel %vm1578, %v4550, %v4501
    %v4552 = vrot.slane %v4501, 4
    %v4553 = vsel %vm1578, %v4513, %v4552
    %v4555 = vunpack.c.l.s4 1934713408
    %v4556 = vunpack.c.0.s8 %v4555
    %v4557 = vperm.slane %v4551, %v4556
    %v4559 = vunpack.c.l.s4 1934713408
    %v4560 = vunpack.c.0.s8 %v4559
    %v4561 = vperm.slane %v4553, %v4560
    %v4562 = vrot.slane %v4533, 4
    %v4563 = vsel %vm1578, %v4562, %v4521
    %v4564 = vrot.slane %v4521, 4
    %v4565 = vsel %vm1578, %v4533, %v4564
    %v4567 = vunpack.c.l.s4 1934713408
    %v4568 = vunpack.c.0.s8 %v4567
    %v4569 = vperm.slane %v4563, %v4568
    %v4571 = vunpack.c.l.s4 1934713408
    %v4572 = vunpack.c.0.s8 %v4571
    %v4573 = vperm.slane %v4565, %v4572
    %v4574 = vrot.slane %v4537, 4
    %v4575 = vsel %vm1578, %v4574, %v4525
    %v4576 = vrot.slane %v4525, 4
    %v4577 = vsel %vm1578, %v4537, %v4576
    %v4579 = vunpack.c.l.s4 1934713408
    %v4580 = vunpack.c.0.s8 %v4579
    %v4581 = vperm.slane %v4575, %v4580
    %v4583 = vunpack.c.l.s4 1934713408
    %v4584 = vunpack.c.0.s8 %v4583
    %v4585 = vperm.slane %v4577, %v4584
    %v4586 = vrot.slane %v4569, 4
    %v4587 = vsel %vm1578, %v4586, %v4545
    %v4588 = vrot.slane %v4545, 4
    %v4589 = vsel %vm1578, %v4569, %v4588
    %v4590 = vrot.slane %v4573, 4
    %v4591 = vsel %vm1578, %v4590, %v4549
    %v4592 = vrot.slane %v4549, 4
    %v4593 = vsel %vm1578, %v4573, %v4592
    %v4594 = vrot.slane %v4581, 4
    %v4595 = vsel %vm1578, %v4594, %v4557
    %v4596 = vrot.slane %v4557, 4
    %v4597 = vsel %vm1578, %v4581, %v4596
    %v4598 = vrot.slane %v4585, 4
    %v4599 = vsel %vm1578, %v4598, %v4561
    %v4600 = vrot.slane %v4561, 4
    %v4601 = vsel %vm1578, %v4585, %v4600
    %v4602 = vrot.slane %v582, 4
    %v4603 = vsel %vm1578, %v4602, %v194
    %v4604 = vrot.slane %v194, 4
    %v4605 = vsel %vm1578, %v582, %v4604
    %v4607 = vunpack.c.l.s4 1983009808
    %v4608 = vunpack.c.0.s8 %v4607
    %v4609 = vperm.slane %v4603, %v4608
    %v4611 = vunpack.c.l.s4 1983009808
    %v4612 = vunpack.c.0.s8 %v4611
    %v4613 = vperm.slane %v4605, %v4612
    %v4614 = vrot.slane %v776, 4
    %v4615 = vsel %vm1578, %v4614, %v388
    %v4616 = vrot.slane %v388, 4
    %v4617 = vsel %vm1578, %v776, %v4616
    %v4619 = vunpack.c.l.s4 1983009808
    %v4620 = vunpack.c.0.s8 %v4619
    %v4621 = vperm.slane %v4615, %v4620
    %v4623 = vunpack.c.l.s4 1983009808
    %v4624 = vunpack.c.0.s8 %v4623
    %v4625 = vperm.slane %v4617, %v4624
    %v4626 = vrot.slane %v1358, 4
    %v4627 = vsel %vm1578, %v4626, %v970
    %v4628 = vrot.slane %v970, 4
    %v4629 = vsel %vm1578, %v1358, %v4628
    %v4631 = vunpack.c.l.s4 1983009808
    %v4632 = vunpack.c.0.s8 %v4631
    %v4633 = vperm.slane %v4627, %v4632
    %v4635 = vunpack.c.l.s4 1983009808
    %v4636 = vunpack.c.0.s8 %v4635
    %v4637 = vperm.slane %v4629, %v4636
    %v4638 = vrot.slane %v1552, 4
    %v4639 = vsel %vm1578, %v4638, %v1164
    %v4640 = vrot.slane %v1164, 4
    %v4641 = vsel %vm1578, %v1552, %v4640
    %v4643 = vunpack.c.l.s4 1983009808
    %v4644 = vunpack.c.0.s8 %v4643
    %v4645 = vperm.slane %v4639, %v4644
    %v4647 = vunpack.c.l.s4 1983009808
    %v4648 = vunpack.c.0.s8 %v4647
    %v4649 = vperm.slane %v4641, %v4648
    %v4650 = vrot.slane %v4621, 4
    %v4651 = vsel %vm1578, %v4650, %v4609
    %v4652 = vrot.slane %v4609, 4
    %v4653 = vsel %vm1578, %v4621, %v4652
    %v4655 = vunpack.c.l.s4 1934713408
    %v4656 = vunpack.c.0.s8 %v4655
    %v4657 = vperm.slane %v4651, %v4656
    %v4659 = vunpack.c.l.s4 1934713408
    %v4660 = vunpack.c.0.s8 %v4659
    %v4661 = vperm.slane %v4653, %v4660
    %v4662 = vrot.slane %v4625, 4
    %v4663 = vsel %vm1578, %v4662, %v4613
    %v4664 = vrot.slane %v4613, 4
    %v4665 = vsel %vm1578, %v4625, %v4664
    %v4667 = vunpack.c.l.s4 1934713408
    %v4668 = vunpack.c.0.s8 %v4667
    %v4669 = vperm.slane %v4663, %v4668
    %v4671 = vunpack.c.l.s4 1934713408
    %v4672 = vunpack.c.0.s8 %v4671
    %v4673 = vperm.slane %v4665, %v4672
    %v4674 = vrot.slane %v4645, 4
    %v4675 = vsel %vm1578, %v4674, %v4633
    %v4676 = vrot.slane %v4633, 4
    %v4677 = vsel %vm1578, %v4645, %v4676
    %v4679 = vunpack.c.l.s4 1934713408
    %v4680 = vunpack.c.0.s8 %v4679
    %v4681 = vperm.slane %v4675, %v4680
    %v4683 = vunpack.c.l.s4 1934713408
    %v4684 = vunpack.c.0.s8 %v4683
    %v4685 = vperm.slane %v4677, %v4684
    %v4686 = vrot.slane %v4649, 4
    %v4687 = vsel %vm1578, %v4686, %v4637
    %v4688 = vrot.slane %v4637, 4
    %v4689 = vsel %vm1578, %v4649, %v4688
    %v4691 = vunpack.c.l.s4 1934713408
    %v4692 = vunpack.c.0.s8 %v4691
    %v4693 = vperm.slane %v4687, %v4692
    %v4695 = vunpack.c.l.s4 1934713408
    %v4696 = vunpack.c.0.s8 %v4695
    %v4697 = vperm.slane %v4689, %v4696
    %v4698 = vrot.slane %v4681, 4
    %v4699 = vsel %vm1578, %v4698, %v4657
    %v4700 = vrot.slane %v4657, 4
    %v4701 = vsel %vm1578, %v4681, %v4700
    %v4702 = vrot.slane %v4685, 4
    %v4703 = vsel %vm1578, %v4702, %v4661
    %v4704 = vrot.slane %v4661, 4
    %v4705 = vsel %vm1578, %v4685, %v4704
    %v4706 = vrot.slane %v4693, 4
    %v4707 = vsel %vm1578, %v4706, %v4669
    %v4708 = vrot.slane %v4669, 4
    %v4709 = vsel %vm1578, %v4693, %v4708
    %v4710 = vrot.slane %v4697, 4
    %v4711 = vsel %vm1578, %v4710, %v4673
    %v4712 = vrot.slane %v4673, 4
    %v4713 = vsel %vm1578, %v4697, %v4712
    %v4714 = vrot.slane %v588, 4
    %v4715 = vsel %vm1578, %v4714, %v200
    %v4716 = vrot.slane %v200, 4
    %v4717 = vsel %vm1578, %v588, %v4716
    %v4719 = vunpack.c.l.s4 1983009808
    %v4720 = vunpack.c.0.s8 %v4719
    %v4721 = vperm.slane %v4715, %v4720
    %v4723 = vunpack.c.l.s4 1983009808
    %v4724 = vunpack.c.0.s8 %v4723
    %v4725 = vperm.slane %v4717, %v4724
    %v4726 = vrot.slane %v782, 4
    %v4727 = vsel %vm1578, %v4726, %v394
    %v4728 = vrot.slane %v394, 4
    %v4729 = vsel %vm1578, %v782, %v4728
    %v4731 = vunpack.c.l.s4 1983009808
    %v4732 = vunpack.c.0.s8 %v4731
    %v4733 = vperm.slane %v4727, %v4732
    %v4735 = vunpack.c.l.s4 1983009808
    %v4736 = vunpack.c.0.s8 %v4735
    %v4737 = vperm.slane %v4729, %v4736
    %v4738 = vrot.slane %v1364, 4
    %v4739 = vsel %vm1578, %v4738, %v976
    %v4740 = vrot.slane %v976, 4
    %v4741 = vsel %vm1578, %v1364, %v4740
    %v4743 = vunpack.c.l.s4 1983009808
    %v4744 = vunpack.c.0.s8 %v4743
    %v4745 = vperm.slane %v4739, %v4744
    %v4747 = vunpack.c.l.s4 1983009808
    %v4748 = vunpack.c.0.s8 %v4747
    %v4749 = vperm.slane %v4741, %v4748
    %v4750 = vrot.slane %v1558, 4
    %v4751 = vsel %vm1578, %v4750, %v1170
    %v4752 = vrot.slane %v1170, 4
    %v4753 = vsel %vm1578, %v1558, %v4752
    %v4755 = vunpack.c.l.s4 1983009808
    %v4756 = vunpack.c.0.s8 %v4755
    %v4757 = vperm.slane %v4751, %v4756
    %v4759 = vunpack.c.l.s4 1983009808
    %v4760 = vunpack.c.0.s8 %v4759
    %v4761 = vperm.slane %v4753, %v4760
    %v4762 = vrot.slane %v4733, 4
    %v4763 = vsel %vm1578, %v4762, %v4721
    %v4764 = vrot.slane %v4721, 4
    %v4765 = vsel %vm1578, %v4733, %v4764
    %v4767 = vunpack.c.l.s4 1934713408
    %v4768 = vunpack.c.0.s8 %v4767
    %v4769 = vperm.slane %v4763, %v4768
    %v4771 = vunpack.c.l.s4 1934713408
    %v4772 = vunpack.c.0.s8 %v4771
    %v4773 = vperm.slane %v4765, %v4772
    %v4774 = vrot.slane %v4737, 4
    %v4775 = vsel %vm1578, %v4774, %v4725
    %v4776 = vrot.slane %v4725, 4
    %v4777 = vsel %vm1578, %v4737, %v4776
    %v4779 = vunpack.c.l.s4 1934713408
    %v4780 = vunpack.c.0.s8 %v4779
    %v4781 = vperm.slane %v4775, %v4780
    %v4783 = vunpack.c.l.s4 1934713408
    %v4784 = vunpack.c.0.s8 %v4783
    %v4785 = vperm.slane %v4777, %v4784
    %v4786 = vrot.slane %v4757, 4
    %v4787 = vsel %vm1578, %v4786, %v4745
    %v4788 = vrot.slane %v4745, 4
    %v4789 = vsel %vm1578, %v4757, %v4788
    %v4791 = vunpack.c.l.s4 1934713408
    %v4792 = vunpack.c.0.s8 %v4791
    %v4793 = vperm.slane %v4787, %v4792
    %v4795 = vunpack.c.l.s4 1934713408
    %v4796 = vunpack.c.0.s8 %v4795
    %v4797 = vperm.slane %v4789, %v4796
    %v4798 = vrot.slane %v4761, 4
    %v4799 = vsel %vm1578, %v4798, %v4749
    %v4800 = vrot.slane %v4749, 4
    %v4801 = vsel %vm1578, %v4761, %v4800
    %v4803 = vunpack.c.l.s4 1934713408
    %v4804 = vunpack.c.0.s8 %v4803
    %v4805 = vperm.slane %v4799, %v4804
    %v4807 = vunpack.c.l.s4 1934713408
    %v4808 = vunpack.c.0.s8 %v4807
    %v4809 = vperm.slane %v4801, %v4808
    %v4810 = vrot.slane %v4793, 4
    %v4811 = vsel %vm1578, %v4810, %v4769
    %v4812 = vrot.slane %v4769, 4
    %v4813 = vsel %vm1578, %v4793, %v4812
    %v4814 = vrot.slane %v4797, 4
    %v4815 = vsel %vm1578, %v4814, %v4773
    %v4816 = vrot.slane %v4773, 4
    %v4817 = vsel %vm1578, %v4797, %v4816
    %v4818 = vrot.slane %v4805, 4
    %v4819 = vsel %vm1578, %v4818, %v4781
    %v4820 = vrot.slane %v4781, 4
    %v4821 = vsel %vm1578, %v4805, %v4820
    %v4822 = vrot.slane %v4809, 4
    %v4823 = vsel %vm1578, %v4822, %v4785
    %v4824 = vrot.slane %v4785, 4
    %v4825 = vsel %vm1578, %v4809, %v4824
    %v4826 = vrot.slane %v594, 4
    %v4827 = vsel %vm1578, %v4826, %v206
    %v4828 = vrot.slane %v206, 4
    %v4829 = vsel %vm1578, %v594, %v4828
    %v4831 = vunpack.c.l.s4 1983009808
    %v4832 = vunpack.c.0.s8 %v4831
    %v4833 = vperm.slane %v4827, %v4832
    %v4835 = vunpack.c.l.s4 1983009808
    %v4836 = vunpack.c.0.s8 %v4835
    %v4837 = vperm.slane %v4829, %v4836
    %v4838 = vrot.slane %v788, 4
    %v4839 = vsel %vm1578, %v4838, %v400
    %v4840 = vrot.slane %v400, 4
    %v4841 = vsel %vm1578, %v788, %v4840
    %v4843 = vunpack.c.l.s4 1983009808
    %v4844 = vunpack.c.0.s8 %v4843
    %v4845 = vperm.slane %v4839, %v4844
    %v4847 = vunpack.c.l.s4 1983009808
    %v4848 = vunpack.c.0.s8 %v4847
    %v4849 = vperm.slane %v4841, %v4848
    %v4850 = vrot.slane %v1370, 4
    %v4851 = vsel %vm1578, %v4850, %v982
    %v4852 = vrot.slane %v982, 4
    %v4853 = vsel %vm1578, %v1370, %v4852
    %v4855 = vunpack.c.l.s4 1983009808
    %v4856 = vunpack.c.0.s8 %v4855
    %v4857 = vperm.slane %v4851, %v4856
    %v4859 = vunpack.c.l.s4 1983009808
    %v4860 = vunpack.c.0.s8 %v4859
    %v4861 = vperm.slane %v4853, %v4860
    %v4862 = vrot.slane %v1564, 4
    %v4863 = vsel %vm1578, %v4862, %v1176
    %v4864 = vrot.slane %v1176, 4
    %v4865 = vsel %vm1578, %v1564, %v4864
    %v4867 = vunpack.c.l.s4 1983009808
    %v4868 = vunpack.c.0.s8 %v4867
    %v4869 = vperm.slane %v4863, %v4868
    %v4871 = vunpack.c.l.s4 1983009808
    %v4872 = vunpack.c.0.s8 %v4871
    %v4873 = vperm.slane %v4865, %v4872
    %v4874 = vrot.slane %v4845, 4
    %v4875 = vsel %vm1578, %v4874, %v4833
    %v4876 = vrot.slane %v4833, 4
    %v4877 = vsel %vm1578, %v4845, %v4876
    %v4879 = vunpack.c.l.s4 1934713408
    %v4880 = vunpack.c.0.s8 %v4879
    %v4881 = vperm.slane %v4875, %v4880
    %v4883 = vunpack.c.l.s4 1934713408
    %v4884 = vunpack.c.0.s8 %v4883
    %v4885 = vperm.slane %v4877, %v4884
    %v4886 = vrot.slane %v4849, 4
    %v4887 = vsel %vm1578, %v4886, %v4837
    %v4888 = vrot.slane %v4837, 4
    %v4889 = vsel %vm1578, %v4849, %v4888
    %v4891 = vunpack.c.l.s4 1934713408
    %v4892 = vunpack.c.0.s8 %v4891
    %v4893 = vperm.slane %v4887, %v4892
    %v4895 = vunpack.c.l.s4 1934713408
    %v4896 = vunpack.c.0.s8 %v4895
    %v4897 = vperm.slane %v4889, %v4896
    %v4898 = vrot.slane %v4869, 4
    %v4899 = vsel %vm1578, %v4898, %v4857
    %v4900 = vrot.slane %v4857, 4
    %v4901 = vsel %vm1578, %v4869, %v4900
    %v4903 = vunpack.c.l.s4 1934713408
    %v4904 = vunpack.c.0.s8 %v4903
    %v4905 = vperm.slane %v4899, %v4904
    %v4907 = vunpack.c.l.s4 1934713408
    %v4908 = vunpack.c.0.s8 %v4907
    %v4909 = vperm.slane %v4901, %v4908
    %v4910 = vrot.slane %v4873, 4
    %v4911 = vsel %vm1578, %v4910, %v4861
    %v4912 = vrot.slane %v4861, 4
    %v4913 = vsel %vm1578, %v4873, %v4912
    %v4915 = vunpack.c.l.s4 1934713408
    %v4916 = vunpack.c.0.s8 %v4915
    %v4917 = vperm.slane %v4911, %v4916
    %v4919 = vunpack.c.l.s4 1934713408
    %v4920 = vunpack.c.0.s8 %v4919
    %v4921 = vperm.slane %v4913, %v4920
    %v4922 = vrot.slane %v4905, 4
    %v4923 = vsel %vm1578, %v4922, %v4881
    %v4924 = vrot.slane %v4881, 4
    %v4925 = vsel %vm1578, %v4905, %v4924
    %v4926 = vrot.slane %v4909, 4
    %v4927 = vsel %vm1578, %v4926, %v4885
    %v4928 = vrot.slane %v4885, 4
    %v4929 = vsel %vm1578, %v4909, %v4928
    %v4930 = vrot.slane %v4917, 4
    %v4931 = vsel %vm1578, %v4930, %v4893
    %v4932 = vrot.slane %v4893, 4
    %v4933 = vsel %vm1578, %v4917, %v4932
    %v4934 = vrot.slane %v4921, 4
    %v4935 = vsel %vm1578, %v4934, %v4897
    %v4936 = vrot.slane %v4897, 4
    %v4937 = vsel %vm1578, %v4921, %v4936
    %v4938 = vrot.slane %v600, 4
    %v4939 = vsel %vm1578, %v4938, %v212
    %v4940 = vrot.slane %v212, 4
    %v4941 = vsel %vm1578, %v600, %v4940
    %v4943 = vunpack.c.l.s4 1983009808
    %v4944 = vunpack.c.0.s8 %v4943
    %v4945 = vperm.slane %v4939, %v4944
    %v4947 = vunpack.c.l.s4 1983009808
    %v4948 = vunpack.c.0.s8 %v4947
    %v4949 = vperm.slane %v4941, %v4948
    %v4950 = vrot.slane %v794, 4
    %v4951 = vsel %vm1578, %v4950, %v406
    %v4952 = vrot.slane %v406, 4
    %v4953 = vsel %vm1578, %v794, %v4952
    %v4955 = vunpack.c.l.s4 1983009808
    %v4956 = vunpack.c.0.s8 %v4955
    %v4957 = vperm.slane %v4951, %v4956
    %v4959 = vunpack.c.l.s4 1983009808
    %v4960 = vunpack.c.0.s8 %v4959
    %v4961 = vperm.slane %v4953, %v4960
    %v4962 = vrot.slane %v1376, 4
    %v4963 = vsel %vm1578, %v4962, %v988
    %v4964 = vrot.slane %v988, 4
    %v4965 = vsel %vm1578, %v1376, %v4964
    %v4967 = vunpack.c.l.s4 1983009808
    %v4968 = vunpack.c.0.s8 %v4967
    %v4969 = vperm.slane %v4963, %v4968
    %v4971 = vunpack.c.l.s4 1983009808
    %v4972 = vunpack.c.0.s8 %v4971
    %v4973 = vperm.slane %v4965, %v4972
    %v4974 = vrot.slane %v1570, 4
    %v4975 = vsel %vm1578, %v4974, %v1182
    %v4976 = vrot.slane %v1182, 4
    %v4977 = vsel %vm1578, %v1570, %v4976
    %v4979 = vunpack.c.l.s4 1983009808
    %v4980 = vunpack.c.0.s8 %v4979
    %v4981 = vperm.slane %v4975, %v4980
    %v4983 = vunpack.c.l.s4 1983009808
    %v4984 = vunpack.c.0.s8 %v4983
    %v4985 = vperm.slane %v4977, %v4984
    %v4986 = vrot.slane %v4957, 4
    %v4987 = vsel %vm1578, %v4986, %v4945
    %v4988 = vrot.slane %v4945, 4
    %v4989 = vsel %vm1578, %v4957, %v4988
    %v4991 = vunpack.c.l.s4 1934713408
    %v4992 = vunpack.c.0.s8 %v4991
    %v4993 = vperm.slane %v4987, %v4992
    %v4995 = vunpack.c.l.s4 1934713408
    %v4996 = vunpack.c.0.s8 %v4995
    %v4997 = vperm.slane %v4989, %v4996
    %v4998 = vrot.slane %v4961, 4
    %v4999 = vsel %vm1578, %v4998, %v4949
    %v5000 = vrot.slane %v4949, 4
    %v5001 = vsel %vm1578, %v4961, %v5000
    %v5003 = vunpack.c.l.s4 1934713408
    %v5004 = vunpack.c.0.s8 %v5003
    %v5005 = vperm.slane %v4999, %v5004
    %v5007 = vunpack.c.l.s4 1934713408
    %v5008 = vunpack.c.0.s8 %v5007
    %v5009 = vperm.slane %v5001, %v5008
    %v5010 = vrot.slane %v4981, 4
    %v5011 = vsel %vm1578, %v5010, %v4969
    %v5012 = vrot.slane %v4969, 4
    %v5013 = vsel %vm1578, %v4981, %v5012
    %v5015 = vunpack.c.l.s4 1934713408
    %v5016 = vunpack.c.0.s8 %v5015
    %v5017 = vperm.slane %v5011, %v5016
    %v5019 = vunpack.c.l.s4 1934713408
    %v5020 = vunpack.c.0.s8 %v5019
    %v5021 = vperm.slane %v5013, %v5020
    %v5022 = vrot.slane %v4985, 4
    %v5023 = vsel %vm1578, %v5022, %v4973
    %v5024 = vrot.slane %v4973, 4
    %v5025 = vsel %vm1578, %v4985, %v5024
    %v5027 = vunpack.c.l.s4 1934713408
    %v5028 = vunpack.c.0.s8 %v5027
    %v5029 = vperm.slane %v5023, %v5028
    %v5031 = vunpack.c.l.s4 1934713408
    %v5032 = vunpack.c.0.s8 %v5031
    %v5033 = vperm.slane %v5025, %v5032
    %v5034 = vrot.slane %v5017, 4
    %v5035 = vsel %vm1578, %v5034, %v4993
    %v5036 = vrot.slane %v4993, 4
    %v5037 = vsel %vm1578, %v5017, %v5036
    %v5038 = vrot.slane %v5021, 4
    %v5039 = vsel %vm1578, %v5038, %v4997
    %v5040 = vrot.slane %v4997, 4
    %v5041 = vsel %vm1578, %v5021, %v5040
    %v5042 = vrot.slane %v5029, 4
    %v5043 = vsel %vm1578, %v5042, %v5005
    %v5044 = vrot.slane %v5005, 4
    %v5045 = vsel %vm1578, %v5029, %v5044
    %v5046 = vrot.slane %v5033, 4
    %v5047 = vsel %vm1578, %v5046, %v5009
    %v5048 = vrot.slane %v5009, 4
    %v5049 = vsel %vm1578, %v5033, %v5048
    %v5050 = vrot.slane %v606, 4
    %v5051 = vsel %vm1578, %v5050, %v218
    %v5052 = vrot.slane %v218, 4
    %v5053 = vsel %vm1578, %v606, %v5052
    %v5055 = vunpack.c.l.s4 1983009808
    %v5056 = vunpack.c.0.s8 %v5055
    %v5057 = vperm.slane %v5051, %v5056
    %v5059 = vunpack.c.l.s4 1983009808
    %v5060 = vunpack.c.0.s8 %v5059
    %v5061 = vperm.slane %v5053, %v5060
    %v5062 = vrot.slane %v800, 4
    %v5063 = vsel %vm1578, %v5062, %v412
    %v5064 = vrot.slane %v412, 4
    %v5065 = vsel %vm1578, %v800, %v5064
    %v5067 = vunpack.c.l.s4 1983009808
    %v5068 = vunpack.c.0.s8 %v5067
    %v5069 = vperm.slane %v5063, %v5068
    %v5071 = vunpack.c.l.s4 1983009808
    %v5072 = vunpack.c.0.s8 %v5071
    %v5073 = vperm.slane %v5065, %v5072
    %v5074 = vrot.slane %v1382, 4
    %v5075 = vsel %vm1578, %v5074, %v994
    %v5076 = vrot.slane %v994, 4
    %v5077 = vsel %vm1578, %v1382, %v5076
    %v5079 = vunpack.c.l.s4 1983009808
    %v5080 = vunpack.c.0.s8 %v5079
    %v5081 = vperm.slane %v5075, %v5080
    %v5083 = vunpack.c.l.s4 1983009808
    %v5084 = vunpack.c.0.s8 %v5083
    %v5085 = vperm.slane %v5077, %v5084
    %v5086 = vrot.slane %v1576, 4
    %v5087 = vsel %vm1578, %v5086, %v1188
    %v5088 = vrot.slane %v1188, 4
    %v5089 = vsel %vm1578, %v1576, %v5088
    %v5091 = vunpack.c.l.s4 1983009808
    %v5092 = vunpack.c.0.s8 %v5091
    %v5093 = vperm.slane %v5087, %v5092
    %v5095 = vunpack.c.l.s4 1983009808
    %v5096 = vunpack.c.0.s8 %v5095
    %v5097 = vperm.slane %v5089, %v5096
    %v5098 = vrot.slane %v5069, 4
    %v5099 = vsel %vm1578, %v5098, %v5057
    %v5100 = vrot.slane %v5057, 4
    %v5101 = vsel %vm1578, %v5069, %v5100
    %v5103 = vunpack.c.l.s4 1934713408
    %v5104 = vunpack.c.0.s8 %v5103
    %v5105 = vperm.slane %v5099, %v5104
    %v5107 = vunpack.c.l.s4 1934713408
    %v5108 = vunpack.c.0.s8 %v5107
    %v5109 = vperm.slane %v5101, %v5108
    %v5110 = vrot.slane %v5073, 4
    %v5111 = vsel %vm1578, %v5110, %v5061
    %v5112 = vrot.slane %v5061, 4
    %v5113 = vsel %vm1578, %v5073, %v5112
    %v5115 = vunpack.c.l.s4 1934713408
    %v5116 = vunpack.c.0.s8 %v5115
    %v5117 = vperm.slane %v5111, %v5116
    %v5119 = vunpack.c.l.s4 1934713408
    %v5120 = vunpack.c.0.s8 %v5119
    %v5121 = vperm.slane %v5113, %v5120
    %v5122 = vrot.slane %v5093, 4
    %v5123 = vsel %vm1578, %v5122, %v5081
    %v5124 = vrot.slane %v5081, 4
    %v5125 = vsel %vm1578, %v5093, %v5124
    %v5127 = vunpack.c.l.s4 1934713408
    %v5128 = vunpack.c.0.s8 %v5127
    %v5129 = vperm.slane %v5123, %v5128
    %v5131 = vunpack.c.l.s4 1934713408
    %v5132 = vunpack.c.0.s8 %v5131
    %v5133 = vperm.slane %v5125, %v5132
    %v5134 = vrot.slane %v5097, 4
    %v5135 = vsel %vm1578, %v5134, %v5085
    %v5136 = vrot.slane %v5085, 4
    %v5137 = vsel %vm1578, %v5097, %v5136
    %v5139 = vunpack.c.l.s4 1934713408
    %v5140 = vunpack.c.0.s8 %v5139
    %v5141 = vperm.slane %v5135, %v5140
    %v5143 = vunpack.c.l.s4 1934713408
    %v5144 = vunpack.c.0.s8 %v5143
    %v5145 = vperm.slane %v5137, %v5144
    %v5146 = vrot.slane %v5129, 4
    %v5147 = vsel %vm1578, %v5146, %v5105
    %v5148 = vrot.slane %v5105, 4
    %v5149 = vsel %vm1578, %v5129, %v5148
    %v5150 = vrot.slane %v5133, 4
    %v5151 = vsel %vm1578, %v5150, %v5109
    %v5152 = vrot.slane %v5109, 4
    %v5153 = vsel %vm1578, %v5133, %v5152
    %v5154 = vrot.slane %v5141, 4
    %v5155 = vsel %vm1578, %v5154, %v5117
    %v5156 = vrot.slane %v5117, 4
    %v5157 = vsel %vm1578, %v5141, %v5156
    %v5158 = vrot.slane %v5145, 4
    %v5159 = vsel %vm1578, %v5158, %v5121
    %v5160 = vrot.slane %v5121, 4
    %v5161 = vsel %vm1578, %v5145, %v5160
    %5163 = vrot.lane.b32.xlu0 %v1677, 2
    %v5164 = vpop.permute.xlu0 %5163
    %5167 = vrot.lane.b32.xlu0 %v1679, 4
    %v5168 = vpop.permute.xlu0 %5167
    %5171 = vrot.lane.b32.xlu0 %v1681, 6
    %v5172 = vpop.permute.xlu0 %5171
    %5175 = vrot.lane.b32.xlu0 %v1683, 8
    %v5176 = vpop.permute.xlu0 %5175
    %5179 = vrot.lane.b32.xlu0 %v1685, 10
    %v5180 = vpop.permute.xlu0 %5179
    %5183 = vrot.lane.b32.xlu0 %v1687, 12
    %v5184 = vpop.permute.xlu0 %5183
    %5187 = vrot.lane.b32.xlu0 %v1689, 14
    %v5188 = vpop.permute.xlu0 %5187
    %5191 = vrot.lane.b32.xlu0 %v1787, 16
    %v5192 = vpop.permute.xlu0 %5191
    %5195 = vrot.lane.b32.xlu0 %v1789, 18
    %v5196 = vpop.permute.xlu0 %5195
    %5199 = vrot.lane.b32.xlu0 %v1791, 20
    %v5200 = vpop.permute.xlu0 %5199
    %5203 = vrot.lane.b32.xlu0 %v1793, 22
    %v5204 = vpop.permute.xlu0 %5203
    %5207 = vrot.lane.b32.xlu0 %v1795, 24
    %v5208 = vpop.permute.xlu0 %5207
    %5211 = vrot.lane.b32.xlu0 %v1797, 26
    %v5212 = vpop.permute.xlu0 %5211
    %5215 = vrot.lane.b32.xlu0 %v1799, 28
    %v5216 = vpop.permute.xlu0 %5215
    %5219 = vrot.lane.b32.xlu0 %v1801, 30
    %v5220 = vpop.permute.xlu0 %5219
    %5223 = vrot.lane.b32.xlu0 %v1899, 32
    %v5224 = vpop.permute.xlu0 %5223
    %5227 = vrot.lane.b32.xlu0 %v1901, 34
    %v5228 = vpop.permute.xlu0 %5227
    %5231 = vrot.lane.b32.xlu0 %v1903, 36
    %v5232 = vpop.permute.xlu0 %5231
    %5235 = vrot.lane.b32.xlu0 %v1905, 38
    %v5236 = vpop.permute.xlu0 %5235
    %5239 = vrot.lane.b32.xlu0 %v1907, 40
    %v5240 = vpop.permute.xlu0 %5239
    %5243 = vrot.lane.b32.xlu0 %v1909, 42
    %v5244 = vpop.permute.xlu0 %5243
    %5247 = vrot.lane.b32.xlu0 %v1911, 44
    %v5248 = vpop.permute.xlu0 %5247
    %5251 = vrot.lane.b32.xlu0 %v1913, 46
    %v5252 = vpop.permute.xlu0 %5251
    %5255 = vrot.lane.b32.xlu0 %v2011, 48
    %v5256 = vpop.permute.xlu0 %5255
    %5259 = vrot.lane.b32.xlu0 %v2013, 50
    %v5260 = vpop.permute.xlu0 %5259
    %5263 = vrot.lane.b32.xlu0 %v2015, 52
    %v5264 = vpop.permute.xlu0 %5263
    %5267 = vrot.lane.b32.xlu0 %v2017, 54
    %v5268 = vpop.permute.xlu0 %5267
    %5271 = vrot.lane.b32.xlu0 %v2019, 56
    %v5272 = vpop.permute.xlu0 %5271
    %5275 = vrot.lane.b32.xlu0 %v2021, 58
    %v5276 = vpop.permute.xlu0 %5275
    %5279 = vrot.lane.b32.xlu0 %v2023, 60
    %v5280 = vpop.permute.xlu0 %5279
    %5283 = vrot.lane.b32.xlu0 %v2025, 62
    %v5284 = vpop.permute.xlu0 %5283
    %5287 = vrot.lane.b32.xlu0 %v2123, 64
    %v5288 = vpop.permute.xlu0 %5287
    %5291 = vrot.lane.b32.xlu0 %v2125, 66
    %v5292 = vpop.permute.xlu0 %5291
    %5295 = vrot.lane.b32.xlu0 %v2127, 68
    %v5296 = vpop.permute.xlu0 %5295
    %5299 = vrot.lane.b32.xlu0 %v2129, 70
    %v5300 = vpop.permute.xlu0 %5299
    %5303 = vrot.lane.b32.xlu0 %v2131, 72
    %v5304 = vpop.permute.xlu0 %5303
    %5307 = vrot.lane.b32.xlu0 %v2133, 74
    %v5308 = vpop.permute.xlu0 %5307
    %5311 = vrot.lane.b32.xlu0 %v2135, 76
    %v5312 = vpop.permute.xlu0 %5311
    %5315 = vrot.lane.b32.xlu0 %v2137, 78
    %v5316 = vpop.permute.xlu0 %5315
    %5319 = vrot.lane.b32.xlu0 %v2235, 80
    %v5320 = vpop.permute.xlu0 %5319
    %5323 = vrot.lane.b32.xlu0 %v2237, 82
    %v5324 = vpop.permute.xlu0 %5323
    %5327 = vrot.lane.b32.xlu0 %v2239, 84
    %v5328 = vpop.permute.xlu0 %5327
    %5331 = vrot.lane.b32.xlu0 %v2241, 86
    %v5332 = vpop.permute.xlu0 %5331
    %5335 = vrot.lane.b32.xlu0 %v2243, 88
    %v5336 = vpop.permute.xlu0 %5335
    %5339 = vrot.lane.b32.xlu0 %v2245, 90
    %v5340 = vpop.permute.xlu0 %5339
    %5343 = vrot.lane.b32.xlu0 %v2247, 92
    %v5344 = vpop.permute.xlu0 %5343
    %5347 = vrot.lane.b32.xlu0 %v2249, 94
    %v5348 = vpop.permute.xlu0 %5347
    %5351 = vrot.lane.b32.xlu0 %v2347, 96
    %v5352 = vpop.permute.xlu0 %5351
    %5355 = vrot.lane.b32.xlu0 %v2349, 98
    %v5356 = vpop.permute.xlu0 %5355
    %5359 = vrot.lane.b32.xlu0 %v2351, 100
    %v5360 = vpop.permute.xlu0 %5359
    %5363 = vrot.lane.b32.xlu0 %v2353, 102
    %v5364 = vpop.permute.xlu0 %5363
    %5367 = vrot.lane.b32.xlu0 %v2355, 104
    %v5368 = vpop.permute.xlu0 %5367
    %5371 = vrot.lane.b32.xlu0 %v2357, 106
    %v5372 = vpop.permute.xlu0 %5371
    %5375 = vrot.lane.b32.xlu0 %v2359, 108
    %v5376 = vpop.permute.xlu0 %5375
    %5379 = vrot.lane.b32.xlu0 %v2361, 110
    %v5380 = vpop.permute.xlu0 %5379
    %5383 = vrot.lane.b32.xlu0 %v2459, 112
    %v5384 = vpop.permute.xlu0 %5383
    %5387 = vrot.lane.b32.xlu0 %v2461, 114
    %v5388 = vpop.permute.xlu0 %5387
    %5391 = vrot.lane.b32.xlu0 %v2463, 116
    %v5392 = vpop.permute.xlu0 %5391
    %5395 = vrot.lane.b32.xlu0 %v2465, 118
    %v5396 = vpop.permute.xlu0 %5395
    %5399 = vrot.lane.b32.xlu0 %v2467, 120
    %v5400 = vpop.permute.xlu0 %5399
    %5403 = vrot.lane.b32.xlu0 %v2469, 122
    %v5404 = vpop.permute.xlu0 %5403
    %5407 = vrot.lane.b32.xlu0 %v2471, 124
    %v5408 = vpop.permute.xlu0 %5407
    %5411 = vrot.lane.b32.xlu0 %v2473, 126
    %v5412 = vpop.permute.xlu0 %5411
    %5415 = vrot.lane.b32.xlu0 %v2573, 2
    %v5416 = vpop.permute.xlu0 %5415
    %5419 = vrot.lane.b32.xlu0 %v2575, 4
    %v5420 = vpop.permute.xlu0 %5419
    %5423 = vrot.lane.b32.xlu0 %v2577, 6
    %v5424 = vpop.permute.xlu0 %5423
    %5427 = vrot.lane.b32.xlu0 %v2579, 8
    %v5428 = vpop.permute.xlu0 %5427
    %5431 = vrot.lane.b32.xlu0 %v2581, 10
    %v5432 = vpop.permute.xlu0 %5431
    %5435 = vrot.lane.b32.xlu0 %v2583, 12
    %v5436 = vpop.permute.xlu0 %5435
    %5439 = vrot.lane.b32.xlu0 %v2585, 14
    %v5440 = vpop.permute.xlu0 %5439
    %5443 = vrot.lane.b32.xlu0 %v2683, 16
    %v5444 = vpop.permute.xlu0 %5443
    %5447 = vrot.lane.b32.xlu0 %v2685, 18
    %v5448 = vpop.permute.xlu0 %5447
    %5451 = vrot.lane.b32.xlu0 %v2687, 20
    %v5452 = vpop.permute.xlu0 %5451
    %5455 = vrot.lane.b32.xlu0 %v2689, 22
    %v5456 = vpop.permute.xlu0 %5455
    %5459 = vrot.lane.b32.xlu0 %v2691, 24
    %v5460 = vpop.permute.xlu0 %5459
    %5463 = vrot.lane.b32.xlu0 %v2693, 26
    %v5464 = vpop.permute.xlu0 %5463
    %5467 = vrot.lane.b32.xlu0 %v2695, 28
    %v5468 = vpop.permute.xlu0 %5467
    %5471 = vrot.lane.b32.xlu0 %v2697, 30
    %v5472 = vpop.permute.xlu0 %5471
    %5475 = vrot.lane.b32.xlu0 %v2795, 32
    %v5476 = vpop.permute.xlu0 %5475
    %5479 = vrot.lane.b32.xlu0 %v2797, 34
    %v5480 = vpop.permute.xlu0 %5479
    %5483 = vrot.lane.b32.xlu0 %v2799, 36
    %v5484 = vpop.permute.xlu0 %5483
    %5487 = vrot.lane.b32.xlu0 %v2801, 38
    %v5488 = vpop.permute.xlu0 %5487
    %5491 = vrot.lane.b32.xlu0 %v2803, 40
    %v5492 = vpop.permute.xlu0 %5491
    %5495 = vrot.lane.b32.xlu0 %v2805, 42
    %v5496 = vpop.permute.xlu0 %5495
    %5499 = vrot.lane.b32.xlu0 %v2807, 44
    %v5500 = vpop.permute.xlu0 %5499
    %5503 = vrot.lane.b32.xlu0 %v2809, 46
    %v5504 = vpop.permute.xlu0 %5503
    %5507 = vrot.lane.b32.xlu0 %v2907, 48
    %v5508 = vpop.permute.xlu0 %5507
    %5511 = vrot.lane.b32.xlu0 %v2909, 50
    %v5512 = vpop.permute.xlu0 %5511
    %5515 = vrot.lane.b32.xlu0 %v2911, 52
    %v5516 = vpop.permute.xlu0 %5515
    %5519 = vrot.lane.b32.xlu0 %v2913, 54
    %v5520 = vpop.permute.xlu0 %5519
    %5523 = vrot.lane.b32.xlu0 %v2915, 56
    %v5524 = vpop.permute.xlu0 %5523
    %5527 = vrot.lane.b32.xlu0 %v2917, 58
    %v5528 = vpop.permute.xlu0 %5527
    %5531 = vrot.lane.b32.xlu0 %v2919, 60
    %v5532 = vpop.permute.xlu0 %5531
    %5535 = vrot.lane.b32.xlu0 %v2921, 62
    %v5536 = vpop.permute.xlu0 %5535
    %5539 = vrot.lane.b32.xlu0 %v3019, 64
    %v5540 = vpop.permute.xlu0 %5539
    %5543 = vrot.lane.b32.xlu0 %v3021, 66
    %v5544 = vpop.permute.xlu0 %5543
    %5547 = vrot.lane.b32.xlu0 %v3023, 68
    %v5548 = vpop.permute.xlu0 %5547
    %5551 = vrot.lane.b32.xlu0 %v3025, 70
    %v5552 = vpop.permute.xlu0 %5551
    %5555 = vrot.lane.b32.xlu0 %v3027, 72
    %v5556 = vpop.permute.xlu0 %5555
    %5559 = vrot.lane.b32.xlu0 %v3029, 74
    %v5560 = vpop.permute.xlu0 %5559
    %5563 = vrot.lane.b32.xlu0 %v3031, 76
    %v5564 = vpop.permute.xlu0 %5563
    %5567 = vrot.lane.b32.xlu0 %v3033, 78
    %v5568 = vpop.permute.xlu0 %5567
    %5571 = vrot.lane.b32.xlu0 %v3131, 80
    %v5572 = vpop.permute.xlu0 %5571
    %5575 = vrot.lane.b32.xlu0 %v3133, 82
    %v5576 = vpop.permute.xlu0 %5575
    %5579 = vrot.lane.b32.xlu0 %v3135, 84
    %v5580 = vpop.permute.xlu0 %5579
    %5583 = vrot.lane.b32.xlu0 %v3137, 86
    %v5584 = vpop.permute.xlu0 %5583
    %5587 = vrot.lane.b32.xlu0 %v3139, 88
    %v5588 = vpop.permute.xlu0 %5587
    %5591 = vrot.lane.b32.xlu0 %v3141, 90
    %v5592 = vpop.permute.xlu0 %5591
    %5595 = vrot.lane.b32.xlu0 %v3143, 92
    %v5596 = vpop.permute.xlu0 %5595
    %5599 = vrot.lane.b32.xlu0 %v3145, 94
    %v5600 = vpop.permute.xlu0 %5599
    %5603 = vrot.lane.b32.xlu0 %v3243, 96
    %v5604 = vpop.permute.xlu0 %5603
    %5607 = vrot.lane.b32.xlu0 %v3245, 98
    %v5608 = vpop.permute.xlu0 %5607
    %5611 = vrot.lane.b32.xlu0 %v3247, 100
    %v5612 = vpop.permute.xlu0 %5611
    %5615 = vrot.lane.b32.xlu0 %v3249, 102
    %v5616 = vpop.permute.xlu0 %5615
    %5619 = vrot.lane.b32.xlu0 %v3251, 104
    %v5620 = vpop.permute.xlu0 %5619
    %5623 = vrot.lane.b32.xlu0 %v3253, 106
    %v5624 = vpop.permute.xlu0 %5623
    %5627 = vrot.lane.b32.xlu0 %v3255, 108
    %v5628 = vpop.permute.xlu0 %5627
    %5631 = vrot.lane.b32.xlu0 %v3257, 110
    %v5632 = vpop.permute.xlu0 %5631
    %5635 = vrot.lane.b32.xlu0 %v3355, 112
    %v5636 = vpop.permute.xlu0 %5635
    %5639 = vrot.lane.b32.xlu0 %v3357, 114
    %v5640 = vpop.permute.xlu0 %5639
    %5643 = vrot.lane.b32.xlu0 %v3359, 116
    %v5644 = vpop.permute.xlu0 %5643
    %5647 = vrot.lane.b32.xlu0 %v3361, 118
    %v5648 = vpop.permute.xlu0 %5647
    %5651 = vrot.lane.b32.xlu0 %v3363, 120
    %v5652 = vpop.permute.xlu0 %5651
    %5655 = vrot.lane.b32.xlu0 %v3365, 122
    %v5656 = vpop.permute.xlu0 %5655
    %5659 = vrot.lane.b32.xlu0 %v3367, 124
    %v5660 = vpop.permute.xlu0 %5659
    %5663 = vrot.lane.b32.xlu0 %v3369, 126
    %v5664 = vpop.permute.xlu0 %5663
    %5667 = vrot.lane.b32.xlu0 %v3469, 2
    %v5668 = vpop.permute.xlu0 %5667
    %5671 = vrot.lane.b32.xlu0 %v3471, 4
    %v5672 = vpop.permute.xlu0 %5671
    %5675 = vrot.lane.b32.xlu0 %v3473, 6
    %v5676 = vpop.permute.xlu0 %5675
    %5679 = vrot.lane.b32.xlu0 %v3475, 8
    %v5680 = vpop.permute.xlu0 %5679
    %5683 = vrot.lane.b32.xlu0 %v3477, 10
    %v5684 = vpop.permute.xlu0 %5683
    %5687 = vrot.lane.b32.xlu0 %v3479, 12
    %v5688 = vpop.permute.xlu0 %5687
    %5691 = vrot.lane.b32.xlu0 %v3481, 14
    %v5692 = vpop.permute.xlu0 %5691
    %5695 = vrot.lane.b32.xlu0 %v3579, 16
    %v5696 = vpop.permute.xlu0 %5695
    %5699 = vrot.lane.b32.xlu0 %v3581, 18
    %v5700 = vpop.permute.xlu0 %5699
    %5703 = vrot.lane.b32.xlu0 %v3583, 20
    %v5704 = vpop.permute.xlu0 %5703
    %5707 = vrot.lane.b32.xlu0 %v3585, 22
    %v5708 = vpop.permute.xlu0 %5707
    %5711 = vrot.lane.b32.xlu0 %v3587, 24
    %v5712 = vpop.permute.xlu0 %5711
    %5715 = vrot.lane.b32.xlu0 %v3589, 26
    %v5716 = vpop.permute.xlu0 %5715
    %5719 = vrot.lane.b32.xlu0 %v3591, 28
    %v5720 = vpop.permute.xlu0 %5719
    %5723 = vrot.lane.b32.xlu0 %v3593, 30
    %v5724 = vpop.permute.xlu0 %5723
    %5727 = vrot.lane.b32.xlu0 %v3691, 32
    %v5728 = vpop.permute.xlu0 %5727
    %5731 = vrot.lane.b32.xlu0 %v3693, 34
    %v5732 = vpop.permute.xlu0 %5731
    %5735 = vrot.lane.b32.xlu0 %v3695, 36
    %v5736 = vpop.permute.xlu0 %5735
    %5739 = vrot.lane.b32.xlu0 %v3697, 38
    %v5740 = vpop.permute.xlu0 %5739
    %5743 = vrot.lane.b32.xlu0 %v3699, 40
    %v5744 = vpop.permute.xlu0 %5743
    %5747 = vrot.lane.b32.xlu0 %v3701, 42
    %v5748 = vpop.permute.xlu0 %5747
    %5751 = vrot.lane.b32.xlu0 %v3703, 44
    %v5752 = vpop.permute.xlu0 %5751
    %5755 = vrot.lane.b32.xlu0 %v3705, 46
    %v5756 = vpop.permute.xlu0 %5755
    %5759 = vrot.lane.b32.xlu0 %v3803, 48
    %v5760 = vpop.permute.xlu0 %5759
    %5763 = vrot.lane.b32.xlu0 %v3805, 50
    %v5764 = vpop.permute.xlu0 %5763
    %5767 = vrot.lane.b32.xlu0 %v3807, 52
    %v5768 = vpop.permute.xlu0 %5767
    %5771 = vrot.lane.b32.xlu0 %v3809, 54
    %v5772 = vpop.permute.xlu0 %5771
    %5775 = vrot.lane.b32.xlu0 %v3811, 56
    %v5776 = vpop.permute.xlu0 %5775
    %5779 = vrot.lane.b32.xlu0 %v3813, 58
    %v5780 = vpop.permute.xlu0 %5779
    %5783 = vrot.lane.b32.xlu0 %v3815, 60
    %v5784 = vpop.permute.xlu0 %5783
    %5787 = vrot.lane.b32.xlu0 %v3817, 62
    %v5788 = vpop.permute.xlu0 %5787
    %5791 = vrot.lane.b32.xlu0 %v3915, 64
    %v5792 = vpop.permute.xlu0 %5791
    %5795 = vrot.lane.b32.xlu0 %v3917, 66
    %v5796 = vpop.permute.xlu0 %5795
    %5799 = vrot.lane.b32.xlu0 %v3919, 68
    %v5800 = vpop.permute.xlu0 %5799
    %5803 = vrot.lane.b32.xlu0 %v3921, 70
    %v5804 = vpop.permute.xlu0 %5803
    %5807 = vrot.lane.b32.xlu0 %v3923, 72
    %v5808 = vpop.permute.xlu0 %5807
    %5811 = vrot.lane.b32.xlu0 %v3925, 74
    %v5812 = vpop.permute.xlu0 %5811
    %5815 = vrot.lane.b32.xlu0 %v3927, 76
    %v5816 = vpop.permute.xlu0 %5815
    %5819 = vrot.lane.b32.xlu0 %v3929, 78
    %v5820 = vpop.permute.xlu0 %5819
    %5823 = vrot.lane.b32.xlu0 %v4027, 80
    %v5824 = vpop.permute.xlu0 %5823
    %5827 = vrot.lane.b32.xlu0 %v4029, 82
    %v5828 = vpop.permute.xlu0 %5827
    %5831 = vrot.lane.b32.xlu0 %v4031, 84
    %v5832 = vpop.permute.xlu0 %5831
    %5835 = vrot.lane.b32.xlu0 %v4033, 86
    %v5836 = vpop.permute.xlu0 %5835
    %5839 = vrot.lane.b32.xlu0 %v4035, 88
    %v5840 = vpop.permute.xlu0 %5839
    %5843 = vrot.lane.b32.xlu0 %v4037, 90
    %v5844 = vpop.permute.xlu0 %5843
    %5847 = vrot.lane.b32.xlu0 %v4039, 92
    %v5848 = vpop.permute.xlu0 %5847
    %5851 = vrot.lane.b32.xlu0 %v4041, 94
    %v5852 = vpop.permute.xlu0 %5851
    %5855 = vrot.lane.b32.xlu0 %v4139, 96
    %v5856 = vpop.permute.xlu0 %5855
    %5859 = vrot.lane.b32.xlu0 %v4141, 98
    %v5860 = vpop.permute.xlu0 %5859
    %5863 = vrot.lane.b32.xlu0 %v4143, 100
    %v5864 = vpop.permute.xlu0 %5863
    %5867 = vrot.lane.b32.xlu0 %v4145, 102
    %v5868 = vpop.permute.xlu0 %5867
    %5871 = vrot.lane.b32.xlu0 %v4147, 104
    %v5872 = vpop.permute.xlu0 %5871
    %5875 = vrot.lane.b32.xlu0 %v4149, 106
    %v5876 = vpop.permute.xlu0 %5875
    %5879 = vrot.lane.b32.xlu0 %v4151, 108
    %v5880 = vpop.permute.xlu0 %5879
    %5883 = vrot.lane.b32.xlu0 %v4153, 110
    %v5884 = vpop.permute.xlu0 %5883
    %5887 = vrot.lane.b32.xlu0 %v4251, 112
    %v5888 = vpop.permute.xlu0 %5887
    %5891 = vrot.lane.b32.xlu0 %v4253, 114
    %v5892 = vpop.permute.xlu0 %5891
    %5895 = vrot.lane.b32.xlu0 %v4255, 116
    %v5896 = vpop.permute.xlu0 %5895
    %5899 = vrot.lane.b32.xlu0 %v4257, 118
    %v5900 = vpop.permute.xlu0 %5899
    %5903 = vrot.lane.b32.xlu0 %v4259, 120
    %v5904 = vpop.permute.xlu0 %5903
    %5907 = vrot.lane.b32.xlu0 %v4261, 122
    %v5908 = vpop.permute.xlu0 %5907
    %5911 = vrot.lane.b32.xlu0 %v4263, 124
    %v5912 = vpop.permute.xlu0 %5911
    %5915 = vrot.lane.b32.xlu0 %v4265, 126
    %v5916 = vpop.permute.xlu0 %5915
    %5919 = vrot.lane.b32.xlu0 %v4365, 2
    %v5920 = vpop.permute.xlu0 %5919
    %5923 = vrot.lane.b32.xlu0 %v4367, 4
    %v5924 = vpop.permute.xlu0 %5923
    %5927 = vrot.lane.b32.xlu0 %v4369, 6
    %v5928 = vpop.permute.xlu0 %5927
    %5931 = vrot.lane.b32.xlu0 %v4371, 8
    %v5932 = vpop.permute.xlu0 %5931
    %5935 = vrot.lane.b32.xlu0 %v4373, 10
    %v5936 = vpop.permute.xlu0 %5935
    %5939 = vrot.lane.b32.xlu0 %v4375, 12
    %v5940 = vpop.permute.xlu0 %5939
    %5943 = vrot.lane.b32.xlu0 %v4377, 14
    %v5944 = vpop.permute.xlu0 %5943
    %5947 = vrot.lane.b32.xlu0 %v4475, 16
    %v5948 = vpop.permute.xlu0 %5947
    %5951 = vrot.lane.b32.xlu0 %v4477, 18
    %v5952 = vpop.permute.xlu0 %5951
    %5955 = vrot.lane.b32.xlu0 %v4479, 20
    %v5956 = vpop.permute.xlu0 %5955
    %5959 = vrot.lane.b32.xlu0 %v4481, 22
    %v5960 = vpop.permute.xlu0 %5959
    %5963 = vrot.lane.b32.xlu0 %v4483, 24
    %v5964 = vpop.permute.xlu0 %5963
    %5967 = vrot.lane.b32.xlu0 %v4485, 26
    %v5968 = vpop.permute.xlu0 %5967
    %5971 = vrot.lane.b32.xlu0 %v4487, 28
    %v5972 = vpop.permute.xlu0 %5971
    %5975 = vrot.lane.b32.xlu0 %v4489, 30
    %v5976 = vpop.permute.xlu0 %5975
    %5979 = vrot.lane.b32.xlu0 %v4587, 32
    %v5980 = vpop.permute.xlu0 %5979
    %5983 = vrot.lane.b32.xlu0 %v4589, 34
    %v5984 = vpop.permute.xlu0 %5983
    %5987 = vrot.lane.b32.xlu0 %v4591, 36
    %v5988 = vpop.permute.xlu0 %5987
    %5991 = vrot.lane.b32.xlu0 %v4593, 38
    %v5992 = vpop.permute.xlu0 %5991
    %5995 = vrot.lane.b32.xlu0 %v4595, 40
    %v5996 = vpop.permute.xlu0 %5995
    %5999 = vrot.lane.b32.xlu0 %v4597, 42
    %v6000 = vpop.permute.xlu0 %5999
    %6003 = vrot.lane.b32.xlu0 %v4599, 44
    %v6004 = vpop.permute.xlu0 %6003
    %6007 = vrot.lane.b32.xlu0 %v4601, 46
    %v6008 = vpop.permute.xlu0 %6007
    %6011 = vrot.lane.b32.xlu0 %v4699, 48
    %v6012 = vpop.permute.xlu0 %6011
    %6015 = vrot.lane.b32.xlu0 %v4701, 50
    %v6016 = vpop.permute.xlu0 %6015
    %6019 = vrot.lane.b32.xlu0 %v4703, 52
    %v6020 = vpop.permute.xlu0 %6019
    %6023 = vrot.lane.b32.xlu0 %v4705, 54
    %v6024 = vpop.permute.xlu0 %6023
    %6027 = vrot.lane.b32.xlu0 %v4707, 56
    %v6028 = vpop.permute.xlu0 %6027
    %6031 = vrot.lane.b32.xlu0 %v4709, 58
    %v6032 = vpop.permute.xlu0 %6031
    %6035 = vrot.lane.b32.xlu0 %v4711, 60
    %v6036 = vpop.permute.xlu0 %6035
    %6039 = vrot.lane.b32.xlu0 %v4713, 62
    %v6040 = vpop.permute.xlu0 %6039
    %6043 = vrot.lane.b32.xlu0 %v4811, 64
    %v6044 = vpop.permute.xlu0 %6043
    %6047 = vrot.lane.b32.xlu0 %v4813, 66
    %v6048 = vpop.permute.xlu0 %6047
    %6051 = vrot.lane.b32.xlu0 %v4815, 68
    %v6052 = vpop.permute.xlu0 %6051
    %6055 = vrot.lane.b32.xlu0 %v4817, 70
    %v6056 = vpop.permute.xlu0 %6055
    %6059 = vrot.lane.b32.xlu0 %v4819, 72
    %v6060 = vpop.permute.xlu0 %6059
    %6063 = vrot.lane.b32.xlu0 %v4821, 74
    %v6064 = vpop.permute.xlu0 %6063
    %6067 = vrot.lane.b32.xlu0 %v4823, 76
    %v6068 = vpop.permute.xlu0 %6067
    %6071 = vrot.lane.b32.xlu0 %v4825, 78
    %v6072 = vpop.permute.xlu0 %6071
    %6075 = vrot.lane.b32.xlu0 %v4923, 80
    %v6076 = vpop.permute.xlu0 %6075
    %6079 = vrot.lane.b32.xlu0 %v4925, 82
    %v6080 = vpop.permute.xlu0 %6079
    %6083 = vrot.lane.b32.xlu0 %v4927, 84
    %v6084 = vpop.permute.xlu0 %6083
    %6087 = vrot.lane.b32.xlu0 %v4929, 86
    %v6088 = vpop.permute.xlu0 %6087
    %6091 = vrot.lane.b32.xlu0 %v4931, 88
    %v6092 = vpop.permute.xlu0 %6091
    %6095 = vrot.lane.b32.xlu0 %v4933, 90
    %v6096 = vpop.permute.xlu0 %6095
    %6099 = vrot.lane.b32.xlu0 %v4935, 92
    %v6100 = vpop.permute.xlu0 %6099
    %6103 = vrot.lane.b32.xlu0 %v4937, 94
    %v6104 = vpop.permute.xlu0 %6103
    %6107 = vrot.lane.b32.xlu0 %v5035, 96
    %v6108 = vpop.permute.xlu0 %6107
    %6111 = vrot.lane.b32.xlu0 %v5037, 98
    %v6112 = vpop.permute.xlu0 %6111
    %6115 = vrot.lane.b32.xlu0 %v5039, 100
    %v6116 = vpop.permute.xlu0 %6115
    %6119 = vrot.lane.b32.xlu0 %v5041, 102
    %v6120 = vpop.permute.xlu0 %6119
    %6123 = vrot.lane.b32.xlu0 %v5043, 104
    %v6124 = vpop.permute.xlu0 %6123
    %6127 = vrot.lane.b32.xlu0 %v5045, 106
    %v6128 = vpop.permute.xlu0 %6127
    %6131 = vrot.lane.b32.xlu0 %v5047, 108
    %v6132 = vpop.permute.xlu0 %6131
    %6135 = vrot.lane.b32.xlu0 %v5049, 110
    %v6136 = vpop.permute.xlu0 %6135
    %6139 = vrot.lane.b32.xlu0 %v5147, 112
    %v6140 = vpop.permute.xlu0 %6139
    %6143 = vrot.lane.b32.xlu0 %v5149, 114
    %v6144 = vpop.permute.xlu0 %6143
    %6147 = vrot.lane.b32.xlu0 %v5151, 116
    %v6148 = vpop.permute.xlu0 %6147
    %6151 = vrot.lane.b32.xlu0 %v5153, 118
    %v6152 = vpop.permute.xlu0 %6151
    %6155 = vrot.lane.b32.xlu0 %v5155, 120
    %v6156 = vpop.permute.xlu0 %6155
    %6159 = vrot.lane.b32.xlu0 %v5157, 122
    %v6160 = vpop.permute.xlu0 %6159
    %6163 = vrot.lane.b32.xlu0 %v5159, 124
    %v6164 = vpop.permute.xlu0 %6163
    %6167 = vrot.lane.b32.xlu0 %v5161, 126
    %v6168 = vpop.permute.xlu0 %6167
    %vm6170 = vcmask 15360
    %v6171 = vsel %vm6170, %v1675, %v5164
    %vm6172 = vcmask 31744
    %v6173 = vsel %vm6172, %v6171, %v5168
    %vm6174 = vcmask 48128
    %v6175 = vsel %vm6174, %v6173, %v5172
    %vm6176 = vcmask 64512
    %v6177 = vsel %vm6176, %v6175, %v5176
    %vm6178 = vcmask 80896
    %v6179 = vsel %vm6178, %v6177, %v5180
    %vm6180 = vcmask 97280
    %v6181 = vsel %vm6180, %v6179, %v5184
    %vm6182 = vcmask 113664
    %v6183 = vsel %vm6182, %v6181, %v5188
    %vm6184 = vcmask 130048
    %v6185 = vsel %vm6184, %v6183, %v5192
    %vm6186 = vcmask 146432
    %v6187 = vsel %vm6186, %v6185, %v5196
    %vm6188 = vcmask 162816
    %v6189 = vsel %vm6188, %v6187, %v5200
    %vm6190 = vcmask 179200
    %v6191 = vsel %vm6190, %v6189, %v5204
    %vm6192 = vcmask 195584
    %v6193 = vsel %vm6192, %v6191, %v5208
    %vm6194 = vcmask 211968
    %v6195 = vsel %vm6194, %v6193, %v5212
    %vm6196 = vcmask 228352
    %v6197 = vsel %vm6196, %v6195, %v5216
    %vm6198 = vcmask 244736
    %v6199 = vsel %vm6198, %v6197, %v5220
    %vm6200 = vcmask 261120
    %v6201 = vsel %vm6200, %v6199, %v5224
    %vm6202 = vcmask 277504
    %v6203 = vsel %vm6202, %v6201, %v5228
    %vm6204 = vcmask 293888
    %v6205 = vsel %vm6204, %v6203, %v5232
    %vm6206 = vcmask 310272
    %v6207 = vsel %vm6206, %v6205, %v5236
    %vm6208 = vcmask 326656
    %v6209 = vsel %vm6208, %v6207, %v5240
    %vm6210 = vcmask 343040
    %v6211 = vsel %vm6210, %v6209, %v5244
    %vm6212 = vcmask 359424
    %v6213 = vsel %vm6212, %v6211, %v5248
    %vm6214 = vcmask 375808
    %v6215 = vsel %vm6214, %v6213, %v5252
    %vm6216 = vcmask 392192
    %v6217 = vsel %vm6216, %v6215, %v5256
    %vm6218 = vcmask 408576
    %v6219 = vsel %vm6218, %v6217, %v5260
    %vm6220 = vcmask 424960
    %v6221 = vsel %vm6220, %v6219, %v5264
    %vm6222 = vcmask 441344
    %v6223 = vsel %vm6222, %v6221, %v5268
    %vm6224 = vcmask 457728
    %v6225 = vsel %vm6224, %v6223, %v5272
    %vm6226 = vcmask 474112
    %v6227 = vsel %vm6226, %v6225, %v5276
    %vm6228 = vcmask 490496
    %v6229 = vsel %vm6228, %v6227, %v5280
    %vm6230 = vcmask 506880
    %v6231 = vsel %vm6230, %v6229, %v5284
    %vm6232 = vcmask 523264
    %v6233 = vsel %vm6232, %v6231, %v5288
    %vm6234 = vcmask 539648
    %v6235 = vsel %vm6234, %v6233, %v5292
    %vm6236 = vcmask 556032
    %v6237 = vsel %vm6236, %v6235, %v5296
    %vm6238 = vcmask 572416
    %v6239 = vsel %vm6238, %v6237, %v5300
    %vm6240 = vcmask 588800
    %v6241 = vsel %vm6240, %v6239, %v5304
    %vm6242 = vcmask 605184
    %v6243 = vsel %vm6242, %v6241, %v5308
    %vm6244 = vcmask 621568
    %v6245 = vsel %vm6244, %v6243, %v5312
    %vm6246 = vcmask 637952
    %v6247 = vsel %vm6246, %v6245, %v5316
    %vm6248 = vcmask 654336
    %v6249 = vsel %vm6248, %v6247, %v5320
    %vm6250 = vcmask 670720
    %v6251 = vsel %vm6250, %v6249, %v5324
    %vm6252 = vcmask 687104
    %v6253 = vsel %vm6252, %v6251, %v5328
    %vm6254 = vcmask 703488
    %v6255 = vsel %vm6254, %v6253, %v5332
    %vm6256 = vcmask 719872
    %v6257 = vsel %vm6256, %v6255, %v5336
    %vm6258 = vcmask 736256
    %v6259 = vsel %vm6258, %v6257, %v5340
    %vm6260 = vcmask 752640
    %v6261 = vsel %vm6260, %v6259, %v5344
    %vm6262 = vcmask 769024
    %v6263 = vsel %vm6262, %v6261, %v5348
    %vm6264 = vcmask 785408
    %v6265 = vsel %vm6264, %v6263, %v5352
    %vm6266 = vcmask 801792
    %v6267 = vsel %vm6266, %v6265, %v5356
    %vm6268 = vcmask 818176
    %v6269 = vsel %vm6268, %v6267, %v5360
    %vm6270 = vcmask 834560
    %v6271 = vsel %vm6270, %v6269, %v5364
    %vm6272 = vcmask 850944
    %v6273 = vsel %vm6272, %v6271, %v5368
    %vm6274 = vcmask 867328
    %v6275 = vsel %vm6274, %v6273, %v5372
    %vm6276 = vcmask 883712
    %v6277 = vsel %vm6276, %v6275, %v5376
    %vm6278 = vcmask 900096
    %v6279 = vsel %vm6278, %v6277, %v5380
    %vm6280 = vcmask 916480
    %v6281 = vsel %vm6280, %v6279, %v5384
    %vm6282 = vcmask 932864
    %v6283 = vsel %vm6282, %v6281, %v5388
    %vm6284 = vcmask 949248
    %v6285 = vsel %vm6284, %v6283, %v5392
    %vm6286 = vcmask 965632
    %v6287 = vsel %vm6286, %v6285, %v5396
    %vm6288 = vcmask 982016
    %v6289 = vsel %vm6288, %v6287, %v5400
    %vm6290 = vcmask 998400
    %v6291 = vsel %vm6290, %v6289, %v5404
    %vm6292 = vcmask 1014784
    %v6293 = vsel %vm6292, %v6291, %v5408
    %vm6294 = vcmask 1031168
    %v6295 = vsel %vm6294, %v6293, %v5412
    %v6296 = vsel %vm6170, %v2571, %v5416
    %v6297 = vsel %vm6172, %v6296, %v5420
    %v6298 = vsel %vm6174, %v6297, %v5424
    %v6299 = vsel %vm6176, %v6298, %v5428
    %v6300 = vsel %vm6178, %v6299, %v5432
    %v6301 = vsel %vm6180, %v6300, %v5436
    %v6302 = vsel %vm6182, %v6301, %v5440
    %v6303 = vsel %vm6184, %v6302, %v5444
    %v6304 = vsel %vm6186, %v6303, %v5448
    %v6305 = vsel %vm6188, %v6304, %v5452
    %v6306 = vsel %vm6190, %v6305, %v5456
    %v6307 = vsel %vm6192, %v6306, %v5460
    %v6308 = vsel %vm6194, %v6307, %v5464
    %v6309 = vsel %vm6196, %v6308, %v5468
    %v6310 = vsel %vm6198, %v6309, %v5472
    %v6311 = vsel %vm6200, %v6310, %v5476
    %v6312 = vsel %vm6202, %v6311, %v5480
    %v6313 = vsel %vm6204, %v6312, %v5484
    %v6314 = vsel %vm6206, %v6313, %v5488
    %v6315 = vsel %vm6208, %v6314, %v5492
    %v6316 = vsel %vm6210, %v6315, %v5496
    %v6317 = vsel %vm6212, %v6316, %v5500
    %v6318 = vsel %vm6214, %v6317, %v5504
    %v6319 = vsel %vm6216, %v6318, %v5508
    %v6320 = vsel %vm6218, %v6319, %v5512
    %v6321 = vsel %vm6220, %v6320, %v5516
    %v6322 = vsel %vm6222, %v6321, %v5520
    %v6323 = vsel %vm6224, %v6322, %v5524
    %v6324 = vsel %vm6226, %v6323, %v5528
    %v6325 = vsel %vm6228, %v6324, %v5532
    %v6326 = vsel %vm6230, %v6325, %v5536
    %v6327 = vsel %vm6232, %v6326, %v5540
    %v6328 = vsel %vm6234, %v6327, %v5544
    %v6329 = vsel %vm6236, %v6328, %v5548
    %v6330 = vsel %vm6238, %v6329, %v5552
    %v6331 = vsel %vm6240, %v6330, %v5556
    %v6332 = vsel %vm6242, %v6331, %v5560
    %v6333 = vsel %vm6244, %v6332, %v5564
    %v6334 = vsel %vm6246, %v6333, %v5568
    %v6335 = vsel %vm6248, %v6334, %v5572
    %v6336 = vsel %vm6250, %v6335, %v5576
    %v6337 = vsel %vm6252, %v6336, %v5580
    %v6338 = vsel %vm6254, %v6337, %v5584
    %v6339 = vsel %vm6256, %v6338, %v5588
    %v6340 = vsel %vm6258, %v6339, %v5592
    %v6341 = vsel %vm6260, %v6340, %v5596
    %v6342 = vsel %vm6262, %v6341, %v5600
    %v6343 = vsel %vm6264, %v6342, %v5604
    %v6344 = vsel %vm6266, %v6343, %v5608
    %v6345 = vsel %vm6268, %v6344, %v5612
    %v6346 = vsel %vm6270, %v6345, %v5616
    %v6347 = vsel %vm6272, %v6346, %v5620
    %v6348 = vsel %vm6274, %v6347, %v5624
    %v6349 = vsel %vm6276, %v6348, %v5628
    %v6350 = vsel %vm6278, %v6349, %v5632
    %v6351 = vsel %vm6280, %v6350, %v5636
    %v6352 = vsel %vm6282, %v6351, %v5640
    %v6353 = vsel %vm6284, %v6352, %v5644
    %v6354 = vsel %vm6286, %v6353, %v5648
    %v6355 = vsel %vm6288, %v6354, %v5652
    %v6356 = vsel %vm6290, %v6355, %v5656
    %v6357 = vsel %vm6292, %v6356, %v5660
    %v6358 = vsel %vm6294, %v6357, %v5664
    %v6359 = vsel %vm6170, %v3467, %v5668
    %v6360 = vsel %vm6172, %v6359, %v5672
    %v6361 = vsel %vm6174, %v6360, %v5676
    %v6362 = vsel %vm6176, %v6361, %v5680
    %v6363 = vsel %vm6178, %v6362, %v5684
    %v6364 = vsel %vm6180, %v6363, %v5688
    %v6365 = vsel %vm6182, %v6364, %v5692
    %v6366 = vsel %vm6184, %v6365, %v5696
    %v6367 = vsel %vm6186, %v6366, %v5700
    %v6368 = vsel %vm6188, %v6367, %v5704
    %v6369 = vsel %vm6190, %v6368, %v5708
    %v6370 = vsel %vm6192, %v6369, %v5712
    %v6371 = vsel %vm6194, %v6370, %v5716
    %v6372 = vsel %vm6196, %v6371, %v5720
    %v6373 = vsel %vm6198, %v6372, %v5724
    %v6374 = vsel %vm6200, %v6373, %v5728
    %v6375 = vsel %vm6202, %v6374, %v5732
    %v6376 = vsel %vm6204, %v6375, %v5736
    %v6377 = vsel %vm6206, %v6376, %v5740
    %v6378 = vsel %vm6208, %v6377, %v5744
    %v6379 = vsel %vm6210, %v6378, %v5748
    %v6380 = vsel %vm6212, %v6379, %v5752
    %v6381 = vsel %vm6214, %v6380, %v5756
    %v6382 = vsel %vm6216, %v6381, %v5760
    %v6383 = vsel %vm6218, %v6382, %v5764
    %v6384 = vsel %vm6220, %v6383, %v5768
    %v6385 = vsel %vm6222, %v6384, %v5772
    %v6386 = vsel %vm6224, %v6385, %v5776
    %v6387 = vsel %vm6226, %v6386, %v5780
    %v6388 = vsel %vm6228, %v6387, %v5784
    %v6389 = vsel %vm6230, %v6388, %v5788
    %v6390 = vsel %vm6232, %v6389, %v5792
    %v6391 = vsel %vm6234, %v6390, %v5796
    %v6392 = vsel %vm6236, %v6391, %v5800
    %v6393 = vsel %vm6238, %v6392, %v5804
    %v6394 = vsel %vm6240, %v6393, %v5808
    %v6395 = vsel %vm6242, %v6394, %v5812
    %v6396 = vsel %vm6244, %v6395, %v5816
    %v6397 = vsel %vm6246, %v6396, %v5820
    %v6398 = vsel %vm6248, %v6397, %v5824
    %v6399 = vsel %vm6250, %v6398, %v5828
    %v6400 = vsel %vm6252, %v6399, %v5832
    %v6401 = vsel %vm6254, %v6400, %v5836
    %v6402 = vsel %vm6256, %v6401, %v5840
    %v6403 = vsel %vm6258, %v6402, %v5844
    %v6404 = vsel %vm6260, %v6403, %v5848
    %v6405 = vsel %vm6262, %v6404, %v5852
    %v6406 = vsel %vm6264, %v6405, %v5856
    %v6407 = vsel %vm6266, %v6406, %v5860
    %v6408 = vsel %vm6268, %v6407, %v5864
    %v6409 = vsel %vm6270, %v6408, %v5868
    %v6410 = vsel %vm6272, %v6409, %v5872
    %v6411 = vsel %vm6274, %v6410, %v5876
    %v6412 = vsel %vm6276, %v6411, %v5880
    %v6413 = vsel %vm6278, %v6412, %v5884
    %v6414 = vsel %vm6280, %v6413, %v5888
    %v6415 = vsel %vm6282, %v6414, %v5892
    %v6416 = vsel %vm6284, %v6415, %v5896
    %v6417 = vsel %vm6286, %v6416, %v5900
    %v6418 = vsel %vm6288, %v6417, %v5904
    %v6419 = vsel %vm6290, %v6418, %v5908
    %v6420 = vsel %vm6292, %v6419, %v5912
    %v6421 = vsel %vm6294, %v6420, %v5916
    %v6422 = vsel %vm6170, %v4363, %v5920
    %v6423 = vsel %vm6172, %v6422, %v5924
    %v6424 = vsel %vm6174, %v6423, %v5928
    %v6425 = vsel %vm6176, %v6424, %v5932
    %v6426 = vsel %vm6178, %v6425, %v5936
    %v6427 = vsel %vm6180, %v6426, %v5940
    %v6428 = vsel %vm6182, %v6427, %v5944
    %v6429 = vsel %vm6184, %v6428, %v5948
    %v6430 = vsel %vm6186, %v6429, %v5952
    %v6431 = vsel %vm6188, %v6430, %v5956
    %v6432 = vsel %vm6190, %v6431, %v5960
    %v6433 = vsel %vm6192, %v6432, %v5964
    %v6434 = vsel %vm6194, %v6433, %v5968
    %v6435 = vsel %vm6196, %v6434, %v5972
    %v6436 = vsel %vm6198, %v6435, %v5976
    %v6437 = vsel %vm6200, %v6436, %v5980
    %v6438 = vsel %vm6202, %v6437, %v5984
    %v6439 = vsel %vm6204, %v6438, %v5988
    %v6440 = vsel %vm6206, %v6439, %v5992
    %v6441 = vsel %vm6208, %v6440, %v5996
    %v6442 = vsel %vm6210, %v6441, %v6000
    %v6443 = vsel %vm6212, %v6442, %v6004
    %v6444 = vsel %vm6214, %v6443, %v6008
    %v6445 = vsel %vm6216, %v6444, %v6012
    %v6446 = vsel %vm6218, %v6445, %v6016
    %v6447 = vsel %vm6220, %v6446, %v6020
    %v6448 = vsel %vm6222, %v6447, %v6024
    %v6449 = vsel %vm6224, %v6448, %v6028
    %v6450 = vsel %vm6226, %v6449, %v6032
    %v6451 = vsel %vm6228, %v6450, %v6036
    %v6452 = vsel %vm6230, %v6451, %v6040
    %v6453 = vsel %vm6232, %v6452, %v6044
    %v6454 = vsel %vm6234, %v6453, %v6048
    %v6455 = vsel %vm6236, %v6454, %v6052
    %v6456 = vsel %vm6238, %v6455, %v6056
    %v6457 = vsel %vm6240, %v6456, %v6060
    %v6458 = vsel %vm6242, %v6457, %v6064
    %v6459 = vsel %vm6244, %v6458, %v6068
    %v6460 = vsel %vm6246, %v6459, %v6072
    %v6461 = vsel %vm6248, %v6460, %v6076
    %v6462 = vsel %vm6250, %v6461, %v6080
    %v6463 = vsel %vm6252, %v6462, %v6084
    %v6464 = vsel %vm6254, %v6463, %v6088
    %v6465 = vsel %vm6256, %v6464, %v6092
    %v6466 = vsel %vm6258, %v6465, %v6096
    %v6467 = vsel %vm6260, %v6466, %v6100
    %v6468 = vsel %vm6262, %v6467, %v6104
    %v6469 = vsel %vm6264, %v6468, %v6108
    %v6470 = vsel %vm6266, %v6469, %v6112
    %v6471 = vsel %vm6268, %v6470, %v6116
    %v6472 = vsel %vm6270, %v6471, %v6120
    %v6473 = vsel %vm6272, %v6472, %v6124
    %v6474 = vsel %vm6274, %v6473, %v6128
    %v6475 = vsel %vm6276, %v6474, %v6132
    %v6476 = vsel %vm6278, %v6475, %v6136
    %v6477 = vsel %vm6280, %v6476, %v6140
    %v6478 = vsel %vm6282, %v6477, %v6144
    %v6479 = vsel %vm6284, %v6478, %v6148
    %v6480 = vsel %vm6286, %v6479, %v6152
    %v6481 = vsel %vm6288, %v6480, %v6156
    %v6482 = vsel %vm6290, %v6481, %v6160
    %v6483 = vsel %vm6292, %v6482, %v6164
    %v6484 = vsel %vm6294, %v6483, %v6168
    %6485 = vst [vmem:[#allocation5] sm:$0xff] %v6295
    %6486 = vst [vmem:[#allocation5 + $0x8] sm:$0xff] %v6358
    %6487 = vst [vmem:[#allocation5 + $0x10] sm:$0xff] %v6421
    %6488 = vst [vmem:[#allocation5 + $0x18] sm:$0xff] %v6484
    // Predicated region
    $region10: #{tpu_custom_call.1} parent=1 // pred_check
      _
    $region11: #{tpu_custom_call.1} parent=1 // pred_check_branch
      %6490 = sbr.rel (0) target = $region13
    $region12: #{tpu_custom_call.1} parent=1 // pred_region
      %6492 = vsyncadd [#allocation4], 0
      %s6494 = sshll.u32 [#allocation5], 4
      %s6495 = int_to_ptr.vmem [resolvable:$true] %s6494
      %s6496 = sshll.u32 %s1, 4
      %s6497 = int_to_ptr.hbm [resolvable:$true] %s6496
      %6499 = dma.vmem_to_hbm [thread:$0]  %s6495, 512, %s6497, [#allocation4]
    $region13: #{tpu_custom_call.1} parent=1 // pred_fallthru
      _
    // Predicated region
    $region14: #{tpu_custom_call.1} parent=1 // pred_check
      _
    $region15: #{tpu_custom_call.1} parent=1 // pred_check_branch
      %6501 = sbr.rel (0) target = $region17
    $region16: #{tpu_custom_call.1} parent=1 // pred_region
      %6503 = dma.done [#allocation4], 512
    $region17: #{tpu_custom_call.1} parent=1 // pred_fallthru
      _
    %6504 = vsyncpa [#allocation3], 1
    %6505 = vsyncpa [#allocation4], 1

</llo_original>
